<compile_context>
chip_gen: v5e
topology: v5e:2x2
jax: 0.10.0
libtpu: 0.0.40
codegen_flags: <defaults>
</compile_context>

<pallas_src>
import functools

import jax
import jax.numpy as jnp
from jax.experimental import pallas as pl
from jax.experimental.pallas import tpu as pltpu


def _round_up(n, m):
    return ((n + m - 1) // m) * m


def _softplus(x):
    # Matches F.softplus (beta=1, threshold=20): x if x > 20 else log1p(exp(x))
    safe = jnp.minimum(x, 20.0)
    return jnp.where(x > 20.0, x, jnp.log1p(jnp.exp(safe)))


def beta_network_kernel(x_ref, w1_ref, b1_ref, w2_ref, b2_ref,
                        wab_ref, bab_ref, out_ref):
    # All activations stay in the packed rows-in-lanes layout; the block-diagonal
    # weights keep each logical row's features in its own lane group.
    x = x_ref[...]                                                    # (tpr, R*S) bf16

    # linear1 + ReLU : (tpr, R*S) @ (R*S, R*128) -> (tpr, R*128)
    h1 = jnp.dot(x, w1_ref[...], preferred_element_type=jnp.float32) + b1_ref[...]
    h1 = jnp.maximum(h1, 0.0).astype(w2_ref.dtype)                    # bf16 operand for MXU

    # linear2 + ReLU : (tpr, R*128) @ (R*128, R*32) -> (tpr, R*32)
    h2 = jnp.dot(h1, w2_ref[...], preferred_element_type=jnp.float32) + b2_ref[...]
    h2 = jnp.maximum(h2, 0.0).astype(wab_ref.dtype)

    # fused alpha|beta head : (tpr, R*32) @ (R*32, R*2A) -> lane-dense softplus + store
    z = jnp.dot(h2, wab_ref[...], preferred_element_type=jnp.float32) + bab_ref[...]
    out_ref[...] = _softplus(z) + 0.001


def init_params(key, state_size, action_size):
    """Deterministic init mimicking nn.Linear default (U[-1/sqrt(fan_in), 1/sqrt(fan_in)]).

    Weights are stored transposed: (in_features, out_features)."""
    def linear(k, fan_in, fan_out):
        kw, kb = jax.random.split(k)
        bound = 1.0 / jnp.sqrt(fan_in)
        w = jax.random.uniform(kw, (fan_in, fan_out), jnp.float32, -bound, bound)
        b = jax.random.uniform(kb, (1, fan_out), jnp.float32, -bound, bound)
        return w, b

    k1, k2, k3, k4 = jax.random.split(key, 4)
    w1, b1 = linear(k1, state_size, 128)
    w2, b2 = linear(k2, 128, 32)
    wa, ba = linear(k3, 32, action_size)
    wb, bb = linear(k4, 32, action_size)
    return dict(w1=w1, b1=b1, w2=w2, b2=b2, wa=wa, ba=ba, wb=wb, bb=bb)


def pack_params(params):
    """One-time, out-of-hot-path packing for the kernel: fuse the alpha/beta heads,
    build R-way block-diagonal weights (rows-packed-into-lanes layout) and cast the
    matmul operands to bf16 (biases stay f32)."""
    A = params["wa"].shape[1]
    two_a = 2 * A
    r = 128 // two_a if 128 % two_a == 0 else 1   # rows packed per lane group
    r = max(1, min(r, 16))                        # cap so block-diag W2 stays a few MiB

    wab = jnp.concatenate([params["wa"], params["wb"]], axis=1)   # (32, 2A)
    bab = jnp.concatenate([params["ba"], params["bb"]], axis=1)   # (1, 2A)

    def bd(w):      # (k, n) -> (r*k, r*n) block-diagonal, bf16
        return jnp.kron(jnp.eye(r, dtype=w.dtype), w).astype(jnp.bfloat16)

    def tiled(b):   # (1, n) -> (1, r*n), f32
        return jnp.tile(b, (1, r)).astype(jnp.float32)

    return dict(w1=bd(params["w1"]), b1=tiled(params["b1"]),
                w2=bd(params["w2"]), b2=tiled(params["b2"]),
                wab=bd(wab), bab=tiled(bab))


@functools.partial(jax.jit, static_argnames=("tile_b",))
def beta_network_forward(x, packed, tile_b=1024):
    """x: (B, state_size) float32.  packed: output of pack_params().  Returns (alpha, beta)."""
    B, S = x.shape
    r = packed["b1"].shape[1] // 128          # rows packed per lane group (static)
    two_a = packed["bab"].shape[1] // r
    A = two_a // 2

    # Pad B to a multiple of r so the lane-packing reshapes are free contiguous views.
    Bp = _round_up(B, r)
    if Bp != B:
        x = jnp.pad(x, ((0, Bp - B), (0, 0)))
    n_pr = Bp // r
    x_p = x.reshape(n_pr, r * S).astype(jnp.bfloat16)   # lane-dense packed input

    # Tile size (in packed rows): honor tile_b, but cap so the grid has >=4 steps
    # when there is enough work (v7x megacore needs >=2 steps on the parallel axis).
    if n_pr <= 8:
        tpr = n_pr
    else:
        tpr_req = max(8, _round_up(tile_b, r) // r)
        tpr_split = max(8, pl.cdiv(n_pr, 4))
        tpr = max(8, (min(tpr_req, tpr_split) // 8) * 8)
    grid = (pl.cdiv(n_pr, tpr),)

    cost = pl.CostEstimate(
        flops=2 * Bp * (S * 128 + 128 * 32 + 32 * two_a),
        transcendentals=2 * Bp * two_a,
        bytes_accessed=(2 * Bp * S + 4 * Bp * two_a
                        + 2 * (r * S * r * 128 + r * 128 * r * 32 + r * 32 * r * two_a)
                        + 4 * r * (128 + 32 + two_a)),
    )

    in_specs = [
        pl.BlockSpec((tpr, r * S), lambda i: (i, 0)),          # packed x: tiled over batch
        pl.BlockSpec((r * S, r * 128), lambda i: (0, 0)),      # block-diag W1 (VMEM-resident)
        pl.BlockSpec((1, r * 128), lambda i: (0, 0)),          # tiled b1
        pl.BlockSpec((r * 128, r * 32), lambda i: (0, 0)),     # block-diag W2
        pl.BlockSpec((1, r * 32), lambda i: (0, 0)),           # tiled b2
        pl.BlockSpec((r * 32, r * two_a), lambda i: (0, 0)),   # block-diag fused alpha|beta head
        pl.BlockSpec((1, r * two_a), lambda i: (0, 0)),        # tiled fused head bias
    ]
    out_specs = pl.BlockSpec((tpr, r * two_a), lambda i: (i, 0))

    out_p = pl.pallas_call(
        beta_network_kernel,
        out_shape=jax.ShapeDtypeStruct((n_pr, r * two_a), jnp.float32),
        grid=grid,
        in_specs=in_specs,
        out_specs=out_specs,
        compiler_params=pltpu.CompilerParams(
            dimension_semantics=("parallel",)),
        cost_estimate=cost,
    )(x_p, packed["w1"], packed["b1"], packed["w2"], packed["b2"],
      packed["wab"], packed["bab"])

    out = out_p.reshape(Bp, two_a)[:B]      # free views back to (B, 2A)
    return out[:, :A], out[:, A:]


def reference_forward(x, p, operand_dtype=jnp.float32):
    """Pure-JAX reference. operand_dtype=bf16 mirrors the kernel's mixed precision."""
    c = lambda a: a.astype(operand_dtype)
    h1 = jnp.maximum(jnp.dot(c(x), c(p["w1"]), preferred_element_type=jnp.float32) + p["b1"], 0.0)
    h2 = jnp.maximum(jnp.dot(c(h1), c(p["w2"]), preferred_element_type=jnp.float32) + p["b2"], 0.0)
    za = jnp.dot(c(h2), c(p["wa"]), preferred_element_type=jnp.float32) + p["ba"]
    zb = jnp.dot(c(h2), c(p["wb"]), preferred_element_type=jnp.float32) + p["bb"]
    return jax.nn.softplus(za) + 0.001, jax.nn.softplus(zb) + 0.001


if __name__ == "__main__":
    state_size = 16
    action_size = 4

    key = jax.random.PRNGKey(0)
    kx, kx2, kp = jax.random.split(key, 3)
    params = init_params(kp, state_size, action_size)
    packed = pack_params(params)   # one-time packing; not in the per-call hot path

    # Small batch: single-block grid (B < R rows, padded internally).
    x = jax.random.normal(kx, (8, state_size), jnp.float32)
    alpha, beta = beta_network_forward(x, packed)
    jax.block_until_ready((alpha, beta))
    a_bf, b_bf = reference_forward(x, params, jnp.bfloat16)   # same mixed precision as kernel
    a_f32, b_f32 = reference_forward(x, params)               # original f32 semantics
    assert jnp.allclose(alpha, a_bf, atol=5e-3, rtol=5e-3), "alpha mismatch vs bf16 reference"
    assert jnp.allclose(beta, b_bf, atol=5e-3, rtol=5e-3), "beta mismatch vs bf16 reference"
    assert jnp.allclose(alpha, a_f32, atol=5e-2, rtol=5e-2), "alpha drifted from f32 semantics"
    assert jnp.allclose(beta, b_f32, atol=5e-2, rtol=5e-2), "beta drifted from f32 semantics"
    assert bool(jnp.all(alpha > 0)) and bool(jnp.all(beta > 0))

    # Ragged larger batch: exercises multi-step grid + edge-masked final block.
    x2 = jax.random.normal(kx2, (300, state_size), jnp.float32)
    alpha2, beta2 = beta_network_forward(x2, packed, tile_b=128)
    jax.block_until_ready((alpha2, beta2))
    a2_bf, b2_bf = reference_forward(x2, params, jnp.bfloat16)
    a2_f32, b2_f32 = reference_forward(x2, params)
    assert jnp.allclose(alpha2, a2_bf, atol=5e-3, rtol=5e-3), "alpha mismatch (tiled, bf16 ref)"
    assert jnp.allclose(beta2, b2_bf, atol=5e-3, rtol=5e-3), "beta mismatch (tiled, bf16 ref)"
    assert jnp.allclose(alpha2, a2_f32, atol=5e-2, rtol=5e-2), "alpha drifted (tiled, f32 ref)"
    assert jnp.allclose(beta2, b2_f32, atol=5e-2, rtol=5e-2), "beta drifted (tiled, f32 ref)"

    print("KERNEL_OK")
</pallas_src>

<mosaic_0001>
module attributes {stable_mosaic.version = 11 : i64} {
  func.func @beta_network_kernel(%arg0: i32, %arg1: memref<1x256xbf16, #tpu.memory_space<vmem>>, %arg2: memref<256x2048xbf16, #tpu.memory_space<vmem>>, %arg3: memref<1x2048xf32, #tpu.memory_space<vmem>>, %arg4: memref<2048x512xbf16, #tpu.memory_space<vmem>>, %arg5: memref<1x512xf32, #tpu.memory_space<vmem>>, %arg6: memref<512x128xbf16, #tpu.memory_space<vmem>>, %arg7: memref<1x128xf32, #tpu.memory_space<vmem>>, %arg8: memref<1x128xf32, #tpu.memory_space<vmem>>) attributes {dimension_semantics = [#tpu.dimension_semantics<parallel>], iteration_bounds = array<i64: 1>, scalar_prefetch = 0 : i64, scratch_operands = 0 : i64, tpu.core_type = #tpu.core_type<tc>, window_params = [{transform_indices = @transform_0, window_bounds = array<i64: 1, 256>}, {pipeline_mode = #tpu.pipeline_mode<synchronous>, transform_indices = @transform_1, window_bounds = array<i64: 256, 2048>}, {pipeline_mode = #tpu.pipeline_mode<synchronous>, transform_indices = @transform_2, window_bounds = array<i64: 1, 2048>}, {pipeline_mode = #tpu.pipeline_mode<synchronous>, transform_indices = @transform_3, window_bounds = array<i64: 2048, 512>}, {pipeline_mode = #tpu.pipeline_mode<synchronous>, transform_indices = @transform_4, window_bounds = array<i64: 1, 512>}, {pipeline_mode = #tpu.pipeline_mode<synchronous>, transform_indices = @transform_5, window_bounds = array<i64: 512, 128>}, {pipeline_mode = #tpu.pipeline_mode<synchronous>, transform_indices = @transform_6, window_bounds = array<i64: 1, 128>}, {transform_indices = @transform_7, window_bounds = array<i64: 1, 128>}]} {
    %c0 = arith.constant 0 : index
    %c0_0 = arith.constant 0 : index
    %0 = vector.load %arg1[%c0, %c0_0] : memref<1x256xbf16, #tpu.memory_space<vmem>>, vector<1x256xbf16>
    %c0_1 = arith.constant 0 : index
    %c0_2 = arith.constant 0 : index
    %1 = vector.load %arg2[%c0_1, %c0_2] : memref<256x2048xbf16, #tpu.memory_space<vmem>>, vector<256x2048xbf16>
    %cst = arith.constant dense<0.000000e+00> : vector<1x2048xf32>
    %2 = tpu.matmul %0, %1, %cst {dimension_numbers = #tpu.dot_dimension_numbers<[1], [0], [0], [1], [0, 0, 1, 1], [], []>} : vector<1x256xbf16>, vector<256x2048xbf16>, vector<1x2048xf32> -> vector<1x2048xf32>
    %c0_3 = arith.constant 0 : index
    %c0_4 = arith.constant 0 : index
    %3 = vector.load %arg3[%c0_3, %c0_4] : memref<1x2048xf32, #tpu.memory_space<vmem>>, vector<1x2048xf32>
    %4 = arith.addf %2, %3 : vector<1x2048xf32>
    %cst_5 = arith.constant 0.000000e+00 : f32
    %5 = vector.broadcast %cst_5 : f32 to vector<1x2048xf32>
    %6 = arith.maximumf %4, %5 : vector<1x2048xf32>
    %7 = arith.truncf %6 : vector<1x2048xf32> to vector<1x2048xbf16>
    %c0_6 = arith.constant 0 : index
    %c0_7 = arith.constant 0 : index
    %8 = vector.load %arg4[%c0_6, %c0_7] : memref<2048x512xbf16, #tpu.memory_space<vmem>>, vector<2048x512xbf16>
    %cst_8 = arith.constant dense<0.000000e+00> : vector<1x512xf32>
    %9 = tpu.matmul %7, %8, %cst_8 {dimension_numbers = #tpu.dot_dimension_numbers<[1], [0], [0], [1], [0, 0, 1, 1], [], []>} : vector<1x2048xbf16>, vector<2048x512xbf16>, vector<1x512xf32> -> vector<1x512xf32>
    %c0_9 = arith.constant 0 : index
    %c0_10 = arith.constant 0 : index
    %10 = vector.load %arg5[%c0_9, %c0_10] : memref<1x512xf32, #tpu.memory_space<vmem>>, vector<1x512xf32>
    %11 = arith.addf %9, %10 : vector<1x512xf32>
    %cst_11 = arith.constant 0.000000e+00 : f32
    %12 = vector.broadcast %cst_11 : f32 to vector<1x512xf32>
    %13 = arith.maximumf %11, %12 : vector<1x512xf32>
    %14 = arith.truncf %13 : vector<1x512xf32> to vector<1x512xbf16>
    %c0_12 = arith.constant 0 : index
    %c0_13 = arith.constant 0 : index
    %15 = vector.load %arg6[%c0_12, %c0_13] : memref<512x128xbf16, #tpu.memory_space<vmem>>, vector<512x128xbf16>
    %cst_14 = arith.constant dense<0.000000e+00> : vector<1x128xf32>
    %16 = tpu.matmul %14, %15, %cst_14 {dimension_numbers = #tpu.dot_dimension_numbers<[1], [0], [0], [1], [0, 0, 1, 1], [], []>} : vector<1x512xbf16>, vector<512x128xbf16>, vector<1x128xf32> -> vector<1x128xf32>
    %c0_15 = arith.constant 0 : index
    %c0_16 = arith.constant 0 : index
    %17 = vector.load %arg7[%c0_15, %c0_16] : memref<1x128xf32, #tpu.memory_space<vmem>>, vector<1x128xf32>
    %18 = arith.addf %16, %17 : vector<1x128xf32>
    %cst_17 = arith.constant 2.000000e+01 : f32
    %19 = vector.broadcast %cst_17 : f32 to vector<1x128xf32>
    %20 = arith.minimumf %18, %19 : vector<1x128xf32>
    %cst_18 = arith.constant 2.000000e+01 : f32
    %21 = vector.broadcast %cst_18 : f32 to vector<1x128xf32>
    %22 = arith.cmpf ogt, %18, %21 : vector<1x128xf32>
    %23 = math.exp %20 : vector<1x128xf32>
    %24 = math.log1p %23 : vector<1x128xf32>
    %25 = arith.select %22, %18, %24 : vector<1x128xi1>, vector<1x128xf32>
    %cst_19 = arith.constant 1.000000e-03 : f32
    %26 = vector.broadcast %cst_19 : f32 to vector<1x128xf32>
    %27 = arith.addf %25, %26 : vector<1x128xf32>
    %c0_20 = arith.constant 0 : index
    %c0_21 = arith.constant 0 : index
    %28 = vector.load %arg8[%c0_20, %c0_21] : memref<1x128xf32, #tpu.memory_space<vmem>>, vector<1x128xf32>
    tpu.vector_store %arg8[%c0_20, %c0_21], %27 {strides = array<i32>} : memref<1x128xf32, #tpu.memory_space<vmem>>, vector<1x128xf32>,
    return
  }
  func.func @transform_0(%arg0: i32) -> (i32, i32) {
    %c0_i32 = arith.constant 0 : i32
    %c0_i32_0 = arith.constant 0 : i32
    return %arg0, %c0_i32 : i32, i32
  }
  func.func @transform_1(%arg0: i32) -> (i32, i32) {
    %c0_i32 = arith.constant 0 : i32
    %c0_i32_0 = arith.constant 0 : i32
    %c0_i32_1 = arith.constant 0 : i32
    return %c0_i32, %c0_i32_0 : i32, i32
  }
  func.func @transform_2(%arg0: i32) -> (i32, i32) {
    %c0_i32 = arith.constant 0 : i32
    %c0_i32_0 = arith.constant 0 : i32
    %c0_i32_1 = arith.constant 0 : i32
    return %c0_i32, %c0_i32_0 : i32, i32
  }
  func.func @transform_3(%arg0: i32) -> (i32, i32) {
    %c0_i32 = arith.constant 0 : i32
    %c0_i32_0 = arith.constant 0 : i32
    %c0_i32_1 = arith.constant 0 : i32
    return %c0_i32, %c0_i32_0 : i32, i32
  }
  func.func @transform_4(%arg0: i32) -> (i32, i32) {
    %c0_i32 = arith.constant 0 : i32
    %c0_i32_0 = arith.constant 0 : i32
    %c0_i32_1 = arith.constant 0 : i32
    return %c0_i32, %c0_i32_0 : i32, i32
  }
  func.func @transform_5(%arg0: i32) -> (i32, i32) {
    %c0_i32 = arith.constant 0 : i32
    %c0_i32_0 = arith.constant 0 : i32
    %c0_i32_1 = arith.constant 0 : i32
    return %c0_i32, %c0_i32_0 : i32, i32
  }
  func.func @transform_6(%arg0: i32) -> (i32, i32) {
    %c0_i32 = arith.constant 0 : i32
    %c0_i32_0 = arith.constant 0 : i32
    %c0_i32_1 = arith.constant 0 : i32
    return %c0_i32, %c0_i32_0 : i32, i32
  }
  func.func @transform_7(%arg0: i32) -> (i32, i32) {
    %c0_i32 = arith.constant 0 : i32
    %c0_i32_0 = arith.constant 0 : i32
    return %arg0, %c0_i32 : i32, i32
  }
}

</mosaic_0001>

<llo_original>
// kernel: beta_network_forward.1
$region0: #{beta_network_forward.1}
  #allocation0 [shape = 'u32[]', space=smem, size = 0x4, offset = 0x4, fixed_abs, tag = 'smem constant byte address 0x4 - core index']
  #allocation1 [shape = 'u32[72,128]{1,0:T(1,128)}', space=vmem, size = 0x9000, scoped, tag = 'internal scratch']
  %s0 = inlined_call_operand.vmem [shape: bf16[1,256], index: 0, kind: input, shape index: {}]
  %s1 = inlined_call_operand.hbm [shape: bf16[256,2048], index: 1, kind: input, shape index: {}]
  %s2 = inlined_call_operand.hbm [shape: f32[1,2048], index: 2, kind: input, shape index: {}]
  %s3 = inlined_call_operand.hbm [shape: bf16[2048,512], index: 3, kind: input, shape index: {}]
  %s4 = inlined_call_operand.hbm [shape: f32[1,512], index: 4, kind: input, shape index: {}]
  %s5 = inlined_call_operand.hbm [shape: bf16[512,128], index: 5, kind: input, shape index: {}]
  %s6 = inlined_call_operand.hbm [shape: f32[1,128], index: 6, kind: input, shape index: {}]
  %s7 = inlined_call_operand.vmem [shape: f32[1,128], index: 7, kind: output, shape index: {}]
  %s8 = sld [smem:[#allocation0]]
  $region62: #{beta_network_forward.1} parent=0
    _
  %s10 = ssub.s32 1, %s8
  %s11 = scalar_select 0, %s10, %s8
  $region1: #{beta_network_forward.1} parent=0
    #allocation2 [shape = 'u8[1048576]{0}', space=vmem, size = 0x100000, scoped, tag = 'input window, operand 1, single buffered']
    #allocation3 [shape = 's32[1]{0}', space=sflag, size = 0x4, scoped, tag = 'scoped memory for beta_network_forward.1']
    #allocation4 [shape = 'u8[8192]{0}', space=vmem, size = 0x2000, scoped, tag = 'input window, operand 2, single buffered']
    #allocation5 [shape = 's32[1]{0}', space=sflag, size = 0x4, scoped, tag = 'scoped memory for beta_network_forward.1']
    #allocation6 [shape = 'u8[2097152]{0}', space=vmem, size = 0x200000, scoped, tag = 'input window, operand 3, single buffered']
    #allocation7 [shape = 'u8[2048]{0}', space=vmem, size = 0x800, scoped, tag = 'input window, operand 4, single buffered']
    #allocation8 [shape = 's32[1]{0}', space=sflag, size = 0x4, scoped, tag = 'scoped memory for beta_network_forward.1']
    #allocation9 [shape = 'u8[131072]{0}', space=vmem, size = 0x20000, scoped, tag = 'input window, operand 5, single buffered']
    #allocation10 [shape = 'u8[512]{0}', space=vmem, size = 0x400, scoped, tag = 'input window, operand 6, single buffered']
    #allocation11 [shape = 's32[1]{0}', space=sflag, size = 0x4, scoped, tag = 'scoped memory for beta_network_forward.1']
    %12 = vsyncpa [#allocation3], 0
    %13 = vsyncpa [#allocation5], 0
    %14 = vsyncpa [#allocation8], 0
    %15 = vsyncpa [#allocation11], 0
    // Predicated region
    $region2: #{beta_network_forward.1} parent=1 // pred_check
      _
    $region3: #{beta_network_forward.1} parent=1 // pred_check_branch
      %17 = sbr.rel (0) target = $region5
    $region4: #{beta_network_forward.1} parent=1 // pred_region
      _
    $region5: #{beta_network_forward.1} parent=1 // pred_fallthru
      _
    // Predicated region
    $region6: #{beta_network_forward.1} parent=1 // pred_check
      _
    $region7: #{beta_network_forward.1} parent=1 // pred_check_branch
      %19 = sbr.rel (0) target = $region9
    $region8: #{beta_network_forward.1} parent=1 // pred_region
      %21 = vsyncadd [#allocation3], 0
      %s22 = sshll.u32 %s1, 4
      %s23 = int_to_ptr.hbm [resolvable:$true] %s22
      %s24 = sshll.u32 [#allocation2], 4
      %s25 = int_to_ptr.vmem [resolvable:$true] %s24
      %30 = dma.hbm_to_vmem [thread:$0]  %s23, 32768, %s25, [#allocation3], 1024, 1024, 64
    $region9: #{beta_network_forward.1} parent=1 // pred_fallthru
      _
    // Predicated region
    $region10: #{beta_network_forward.1} parent=1 // pred_check
      _
    $region11: #{beta_network_forward.1} parent=1 // pred_check_branch
      %32 = sbr.rel (0) target = $region13
    $region12: #{beta_network_forward.1} parent=1 // pred_region
      %34 = vsyncadd [#allocation5], 0
      %s36 = sshll.u32 %s2, 4
      %s37 = int_to_ptr.hbm [resolvable:$true] %s36
      %s38 = sshll.u32 [#allocation4], 4
      %s39 = int_to_ptr.vmem [resolvable:$true] %s38
      %41 = dma.hbm_to_vmem [thread:$0]  %s37, 256, %s39, [#allocation5]
    $region13: #{beta_network_forward.1} parent=1 // pred_fallthru
      _
    // Predicated region
    $region14: #{beta_network_forward.1} parent=1 // pred_check
      _
    $region15: #{beta_network_forward.1} parent=1 // pred_check_branch
      %43 = sbr.rel (0) target = $region17
    $region16: #{beta_network_forward.1} parent=1 // pred_region
      %45 = vsyncadd [#allocation5], 0
      %s46 = sshll.u32 %s3, 4
      %s47 = int_to_ptr.hbm [resolvable:$true] %s46
      %s48 = sshll.u32 [#allocation6], 4
      %s49 = int_to_ptr.vmem [resolvable:$true] %s48
      %54 = dma.hbm_to_vmem [thread:$0]  %s47, 65536, %s49, [#allocation5], 256, 256, 16
    $region17: #{beta_network_forward.1} parent=1 // pred_fallthru
      _
    // Predicated region
    $region18: #{beta_network_forward.1} parent=1 // pred_check
      _
    $region19: #{beta_network_forward.1} parent=1 // pred_check_branch
      %56 = sbr.rel (0) target = $region21
    $region20: #{beta_network_forward.1} parent=1 // pred_region
      %58 = vsyncadd [#allocation8], 0
      %s60 = sshll.u32 %s4, 4
      %s61 = int_to_ptr.hbm [resolvable:$true] %s60
      %s62 = sshll.u32 [#allocation7], 4
      %s63 = int_to_ptr.vmem [resolvable:$true] %s62
      %65 = dma.hbm_to_vmem [thread:$0]  %s61, 64, %s63, [#allocation8]
    $region21: #{beta_network_forward.1} parent=1 // pred_fallthru
      _
    // Predicated region
    $region22: #{beta_network_forward.1} parent=1 // pred_check
      _
    $region23: #{beta_network_forward.1} parent=1 // pred_check_branch
      %67 = sbr.rel (0) target = $region25
    $region24: #{beta_network_forward.1} parent=1 // pred_region
      %69 = vsyncadd [#allocation8], 0
      %s70 = sshll.u32 %s5, 4
      %s71 = int_to_ptr.hbm [resolvable:$true] %s70
      %s72 = sshll.u32 [#allocation9], 4
      %s73 = int_to_ptr.vmem [resolvable:$true] %s72
      %78 = dma.hbm_to_vmem [thread:$0]  %s71, 4096, %s73, [#allocation8], 64, 64, 4
    $region25: #{beta_network_forward.1} parent=1 // pred_fallthru
      _
    // Predicated region
    $region26: #{beta_network_forward.1} parent=1 // pred_check
      _
    $region27: #{beta_network_forward.1} parent=1 // pred_check_branch
      %80 = sbr.rel (0) target = $region29
    $region28: #{beta_network_forward.1} parent=1 // pred_region
      %82 = vsyncadd [#allocation11], 0
      %s84 = sshll.u32 %s6, 4
      %s85 = int_to_ptr.hbm [resolvable:$true] %s84
      %s86 = sshll.u32 [#allocation10], 4
      %s87 = int_to_ptr.vmem [resolvable:$true] %s86
      %89 = dma.hbm_to_vmem [thread:$0]  %s85, 16, %s87, [#allocation11]
    $region29: #{beta_network_forward.1} parent=1 // pred_fallthru
      _
    // Predicated region
    $region30: #{beta_network_forward.1} parent=1 // pred_check
      _
    $region31: #{beta_network_forward.1} parent=1 // pred_check_branch
      %91 = sbr.rel (0) target = $region33
    $region32: #{beta_network_forward.1} parent=1 // pred_region
      %93 = dma.done [#allocation3], 32768
    $region33: #{beta_network_forward.1} parent=1 // pred_fallthru
      _
    // Predicated region
    $region34: #{beta_network_forward.1} parent=1 // pred_check
      _
    $region35: #{beta_network_forward.1} parent=1 // pred_check_branch
      %95 = sbr.rel (0) target = $region37
    $region36: #{beta_network_forward.1} parent=1 // pred_region
      %97 = dma.done [#allocation5], 256
    $region37: #{beta_network_forward.1} parent=1 // pred_fallthru
      _
    // Predicated region
    $region38: #{beta_network_forward.1} parent=1 // pred_check
      _
    $region39: #{beta_network_forward.1} parent=1 // pred_check_branch
      %99 = sbr.rel (0) target = $region41
    $region40: #{beta_network_forward.1} parent=1 // pred_region
      %101 = dma.done [#allocation5], 65536
    $region41: #{beta_network_forward.1} parent=1 // pred_fallthru
      _
    // Predicated region
    $region42: #{beta_network_forward.1} parent=1 // pred_check
      _
    $region43: #{beta_network_forward.1} parent=1 // pred_check_branch
      %103 = sbr.rel (0) target = $region45
    $region44: #{beta_network_forward.1} parent=1 // pred_region
      %105 = dma.done [#allocation8], 64
    $region45: #{beta_network_forward.1} parent=1 // pred_fallthru
      _
    // Predicated region
    $region46: #{beta_network_forward.1} parent=1 // pred_check
      _
    $region47: #{beta_network_forward.1} parent=1 // pred_check_branch
      %107 = sbr.rel (0) target = $region49
    $region48: #{beta_network_forward.1} parent=1 // pred_region
      %109 = dma.done [#allocation8], 4096
    $region49: #{beta_network_forward.1} parent=1 // pred_fallthru
      _
    // Predicated region
    $region50: #{beta_network_forward.1} parent=1 // pred_check
      _
    $region51: #{beta_network_forward.1} parent=1 // pred_check_branch
      %111 = sbr.rel (0) target = $region53
    $region52: #{beta_network_forward.1} parent=1 // pred_region
      %113 = dma.done [#allocation11], 16
    $region53: #{beta_network_forward.1} parent=1 // pred_fallthru
      _
    %v114 = vld [vmem:[%s0] sm:$0x3]
    %v115 = vld [vmem:[#allocation2] sm:$0xff]
    %v116 = vld [vmem:[#allocation2 + $0x8] sm:$0xff]
    %v117 = vld [vmem:[#allocation2 + $0x10] sm:$0xff]
    %v118 = vld [vmem:[#allocation2 + $0x18] sm:$0xff]
    %v119 = vld [vmem:[#allocation2 + $0x20] sm:$0xff]
    %v120 = vld [vmem:[#allocation2 + $0x28] sm:$0xff]
    %v121 = vld [vmem:[#allocation2 + $0x30] sm:$0xff]
    %v122 = vld [vmem:[#allocation2 + $0x38] sm:$0xff]
    %v123 = vld [vmem:[#allocation2 + $0x40] sm:$0xff]
    %v124 = vld [vmem:[#allocation2 + $0x48] sm:$0xff]
    %v125 = vld [vmem:[#allocation2 + $0x50] sm:$0xff]
    %v126 = vld [vmem:[#allocation2 + $0x58] sm:$0xff]
    %v127 = vld [vmem:[#allocation2 + $0x60] sm:$0xff]
    %v128 = vld [vmem:[#allocation2 + $0x68] sm:$0xff]
    %v129 = vld [vmem:[#allocation2 + $0x70] sm:$0xff]
    %v130 = vld [vmem:[#allocation2 + $0x78] sm:$0xff]
    %v131 = vld [vmem:[#allocation2 + $0x80] sm:$0xff]
    %v132 = vld [vmem:[#allocation2 + $0x88] sm:$0xff]
    %v133 = vld [vmem:[#allocation2 + $0x90] sm:$0xff]
    %v134 = vld [vmem:[#allocation2 + $0x98] sm:$0xff]
    %v135 = vld [vmem:[#allocation2 + $0xa0] sm:$0xff]
    %v136 = vld [vmem:[#allocation2 + $0xa8] sm:$0xff]
    %v137 = vld [vmem:[#allocation2 + $0xb0] sm:$0xff]
    %v138 = vld [vmem:[#allocation2 + $0xb8] sm:$0xff]
    %v139 = vld [vmem:[#allocation2 + $0xc0] sm:$0xff]
    %v140 = vld [vmem:[#allocation2 + $0xc8] sm:$0xff]
    %v141 = vld [vmem:[#allocation2 + $0xd0] sm:$0xff]
    %v142 = vld [vmem:[#allocation2 + $0xd8] sm:$0xff]
    %v143 = vld [vmem:[#allocation2 + $0xe0] sm:$0xff]
    %v144 = vld [vmem:[#allocation2 + $0xe8] sm:$0xff]
    %v145 = vld [vmem:[#allocation2 + $0xf0] sm:$0xff]
    %v146 = vld [vmem:[#allocation2 + $0xf8] sm:$0xff]
    %v147 = vld [vmem:[#allocation2 + $0x100] sm:$0xff]
    %v148 = vld [vmem:[#allocation2 + $0x108] sm:$0xff]
    %v149 = vld [vmem:[#allocation2 + $0x110] sm:$0xff]
    %v150 = vld [vmem:[#allocation2 + $0x118] sm:$0xff]
    %v151 = vld [vmem:[#allocation2 + $0x120] sm:$0xff]
    %v152 = vld [vmem:[#allocation2 + $0x128] sm:$0xff]
    %v153 = vld [vmem:[#allocation2 + $0x130] sm:$0xff]
    %v154 = vld [vmem:[#allocation2 + $0x138] sm:$0xff]
    %v155 = vld [vmem:[#allocation2 + $0x140] sm:$0xff]
    %v156 = vld [vmem:[#allocation2 + $0x148] sm:$0xff]
    %v157 = vld [vmem:[#allocation2 + $0x150] sm:$0xff]
    %v158 = vld [vmem:[#allocation2 + $0x158] sm:$0xff]
    %v159 = vld [vmem:[#allocation2 + $0x160] sm:$0xff]
    %v160 = vld [vmem:[#allocation2 + $0x168] sm:$0xff]
    %v161 = vld [vmem:[#allocation2 + $0x170] sm:$0xff]
    %v162 = vld [vmem:[#allocation2 + $0x178] sm:$0xff]
    %v163 = vld [vmem:[#allocation2 + $0x180] sm:$0xff]
    %v164 = vld [vmem:[#allocation2 + $0x188] sm:$0xff]
    %v165 = vld [vmem:[#allocation2 + $0x190] sm:$0xff]
    %v166 = vld [vmem:[#allocation2 + $0x198] sm:$0xff]
    %v167 = vld [vmem:[#allocation2 + $0x1a0] sm:$0xff]
    %v168 = vld [vmem:[#allocation2 + $0x1a8] sm:$0xff]
    %v169 = vld [vmem:[#allocation2 + $0x1b0] sm:$0xff]
    %v170 = vld [vmem:[#allocation2 + $0x1b8] sm:$0xff]
    %v171 = vld [vmem:[#allocation2 + $0x1c0] sm:$0xff]
    %v172 = vld [vmem:[#allocation2 + $0x1c8] sm:$0xff]
    %v173 = vld [vmem:[#allocation2 + $0x1d0] sm:$0xff]
    %v174 = vld [vmem:[#allocation2 + $0x1d8] sm:$0xff]
    %v175 = vld [vmem:[#allocation2 + $0x1e0] sm:$0xff]
    %v176 = vld [vmem:[#allocation2 + $0x1e8] sm:$0xff]
    %v177 = vld [vmem:[#allocation2 + $0x1f0] sm:$0xff]
    %v178 = vld [vmem:[#allocation2 + $0x1f8] sm:$0xff]
    %v179 = vld [vmem:[#allocation2 + $0x200] sm:$0xff]
    %v180 = vld [vmem:[#allocation2 + $0x208] sm:$0xff]
    %v181 = vld [vmem:[#allocation2 + $0x210] sm:$0xff]
    %v182 = vld [vmem:[#allocation2 + $0x218] sm:$0xff]
    %v183 = vld [vmem:[#allocation2 + $0x220] sm:$0xff]
    %v184 = vld [vmem:[#allocation2 + $0x228] sm:$0xff]
    %v185 = vld [vmem:[#allocation2 + $0x230] sm:$0xff]
    %v186 = vld [vmem:[#allocation2 + $0x238] sm:$0xff]
    %v187 = vld [vmem:[#allocation2 + $0x240] sm:$0xff]
    %v188 = vld [vmem:[#allocation2 + $0x248] sm:$0xff]
    %v189 = vld [vmem:[#allocation2 + $0x250] sm:$0xff]
    %v190 = vld [vmem:[#allocation2 + $0x258] sm:$0xff]
    %v191 = vld [vmem:[#allocation2 + $0x260] sm:$0xff]
    %v192 = vld [vmem:[#allocation2 + $0x268] sm:$0xff]
    %v193 = vld [vmem:[#allocation2 + $0x270] sm:$0xff]
    %v194 = vld [vmem:[#allocation2 + $0x278] sm:$0xff]
    %v195 = vld [vmem:[#allocation2 + $0x280] sm:$0xff]
    %v196 = vld [vmem:[#allocation2 + $0x288] sm:$0xff]
    %v197 = vld [vmem:[#allocation2 + $0x290] sm:$0xff]
    %v198 = vld [vmem:[#allocation2 + $0x298] sm:$0xff]
    %v199 = vld [vmem:[#allocation2 + $0x2a0] sm:$0xff]
    %v200 = vld [vmem:[#allocation2 + $0x2a8] sm:$0xff]
    %v201 = vld [vmem:[#allocation2 + $0x2b0] sm:$0xff]
    %v202 = vld [vmem:[#allocation2 + $0x2b8] sm:$0xff]
    %v203 = vld [vmem:[#allocation2 + $0x2c0] sm:$0xff]
    %v204 = vld [vmem:[#allocation2 + $0x2c8] sm:$0xff]
    %v205 = vld [vmem:[#allocation2 + $0x2d0] sm:$0xff]
    %v206 = vld [vmem:[#allocation2 + $0x2d8] sm:$0xff]
    %v207 = vld [vmem:[#allocation2 + $0x2e0] sm:$0xff]
    %v208 = vld [vmem:[#allocation2 + $0x2e8] sm:$0xff]
    %v209 = vld [vmem:[#allocation2 + $0x2f0] sm:$0xff]
    %v210 = vld [vmem:[#allocation2 + $0x2f8] sm:$0xff]
    %v211 = vld [vmem:[#allocation2 + $0x300] sm:$0xff]
    %v212 = vld [vmem:[#allocation2 + $0x308] sm:$0xff]
    %v213 = vld [vmem:[#allocation2 + $0x310] sm:$0xff]
    %v214 = vld [vmem:[#allocation2 + $0x318] sm:$0xff]
    %v215 = vld [vmem:[#allocation2 + $0x320] sm:$0xff]
    %v216 = vld [vmem:[#allocation2 + $0x328] sm:$0xff]
    %v217 = vld [vmem:[#allocation2 + $0x330] sm:$0xff]
    %v218 = vld [vmem:[#allocation2 + $0x338] sm:$0xff]
    %v219 = vld [vmem:[#allocation2 + $0x340] sm:$0xff]
    %v220 = vld [vmem:[#allocation2 + $0x348] sm:$0xff]
    %v221 = vld [vmem:[#allocation2 + $0x350] sm:$0xff]
    %v222 = vld [vmem:[#allocation2 + $0x358] sm:$0xff]
    %v223 = vld [vmem:[#allocation2 + $0x360] sm:$0xff]
    %v224 = vld [vmem:[#allocation2 + $0x368] sm:$0xff]
    %v225 = vld [vmem:[#allocation2 + $0x370] sm:$0xff]
    %v226 = vld [vmem:[#allocation2 + $0x378] sm:$0xff]
    %v227 = vld [vmem:[#allocation2 + $0x380] sm:$0xff]
    %v228 = vld [vmem:[#allocation2 + $0x388] sm:$0xff]
    %v229 = vld [vmem:[#allocation2 + $0x390] sm:$0xff]
    %v230 = vld [vmem:[#allocation2 + $0x398] sm:$0xff]
    %v231 = vld [vmem:[#allocation2 + $0x3a0] sm:$0xff]
    %v232 = vld [vmem:[#allocation2 + $0x3a8] sm:$0xff]
    %v233 = vld [vmem:[#allocation2 + $0x3b0] sm:$0xff]
    %v234 = vld [vmem:[#allocation2 + $0x3b8] sm:$0xff]
    %v235 = vld [vmem:[#allocation2 + $0x3c0] sm:$0xff]
    %v236 = vld [vmem:[#allocation2 + $0x3c8] sm:$0xff]
    %v237 = vld [vmem:[#allocation2 + $0x3d0] sm:$0xff]
    %v238 = vld [vmem:[#allocation2 + $0x3d8] sm:$0xff]
    %v239 = vld [vmem:[#allocation2 + $0x3e0] sm:$0xff]
    %v240 = vld [vmem:[#allocation2 + $0x3e8] sm:$0xff]
    %v241 = vld [vmem:[#allocation2 + $0x3f0] sm:$0xff]
    %v242 = vld [vmem:[#allocation2 + $0x3f8] sm:$0xff]
    %v243 = vld [vmem:[#allocation2 + $0x400] sm:$0xff]
    %v244 = vld [vmem:[#allocation2 + $0x408] sm:$0xff]
    %v245 = vld [vmem:[#allocation2 + $0x410] sm:$0xff]
    %v246 = vld [vmem:[#allocation2 + $0x418] sm:$0xff]
    %v247 = vld [vmem:[#allocation2 + $0x420] sm:$0xff]
    %v248 = vld [vmem:[#allocation2 + $0x428] sm:$0xff]
    %v249 = vld [vmem:[#allocation2 + $0x430] sm:$0xff]
    %v250 = vld [vmem:[#allocation2 + $0x438] sm:$0xff]
    %v251 = vld [vmem:[#allocation2 + $0x440] sm:$0xff]
    %v252 = vld [vmem:[#allocation2 + $0x448] sm:$0xff]
    %v253 = vld [vmem:[#allocation2 + $0x450] sm:$0xff]
    %v254 = vld [vmem:[#allocation2 + $0x458] sm:$0xff]
    %v255 = vld [vmem:[#allocation2 + $0x460] sm:$0xff]
    %v256 = vld [vmem:[#allocation2 + $0x468] sm:$0xff]
    %v257 = vld [vmem:[#allocation2 + $0x470] sm:$0xff]
    %v258 = vld [vmem:[#allocation2 + $0x478] sm:$0xff]
    %v259 = vld [vmem:[#allocation2 + $0x480] sm:$0xff]
    %v260 = vld [vmem:[#allocation2 + $0x488] sm:$0xff]
    %v261 = vld [vmem:[#allocation2 + $0x490] sm:$0xff]
    %v262 = vld [vmem:[#allocation2 + $0x498] sm:$0xff]
    %v263 = vld [vmem:[#allocation2 + $0x4a0] sm:$0xff]
    %v264 = vld [vmem:[#allocation2 + $0x4a8] sm:$0xff]
    %v265 = vld [vmem:[#allocation2 + $0x4b0] sm:$0xff]
    %v266 = vld [vmem:[#allocation2 + $0x4b8] sm:$0xff]
    %v267 = vld [vmem:[#allocation2 + $0x4c0] sm:$0xff]
    %v268 = vld [vmem:[#allocation2 + $0x4c8] sm:$0xff]
    %v269 = vld [vmem:[#allocation2 + $0x4d0] sm:$0xff]
    %v270 = vld [vmem:[#allocation2 + $0x4d8] sm:$0xff]
    %v271 = vld [vmem:[#allocation2 + $0x4e0] sm:$0xff]
    %v272 = vld [vmem:[#allocation2 + $0x4e8] sm:$0xff]
    %v273 = vld [vmem:[#allocation2 + $0x4f0] sm:$0xff]
    %v274 = vld [vmem:[#allocation2 + $0x4f8] sm:$0xff]
    %v275 = vld [vmem:[#allocation2 + $0x500] sm:$0xff]
    %v276 = vld [vmem:[#allocation2 + $0x508] sm:$0xff]
    %v277 = vld [vmem:[#allocation2 + $0x510] sm:$0xff]
    %v278 = vld [vmem:[#allocation2 + $0x518] sm:$0xff]
    %v279 = vld [vmem:[#allocation2 + $0x520] sm:$0xff]
    %v280 = vld [vmem:[#allocation2 + $0x528] sm:$0xff]
    %v281 = vld [vmem:[#allocation2 + $0x530] sm:$0xff]
    %v282 = vld [vmem:[#allocation2 + $0x538] sm:$0xff]
    %v283 = vld [vmem:[#allocation2 + $0x540] sm:$0xff]
    %v284 = vld [vmem:[#allocation2 + $0x548] sm:$0xff]
    %v285 = vld [vmem:[#allocation2 + $0x550] sm:$0xff]
    %v286 = vld [vmem:[#allocation2 + $0x558] sm:$0xff]
    %v287 = vld [vmem:[#allocation2 + $0x560] sm:$0xff]
    %v288 = vld [vmem:[#allocation2 + $0x568] sm:$0xff]
    %v289 = vld [vmem:[#allocation2 + $0x570] sm:$0xff]
    %v290 = vld [vmem:[#allocation2 + $0x578] sm:$0xff]
    %v291 = vld [vmem:[#allocation2 + $0x580] sm:$0xff]
    %v292 = vld [vmem:[#allocation2 + $0x588] sm:$0xff]
    %v293 = vld [vmem:[#allocation2 + $0x590] sm:$0xff]
    %v294 = vld [vmem:[#allocation2 + $0x598] sm:$0xff]
    %v295 = vld [vmem:[#allocation2 + $0x5a0] sm:$0xff]
    %v296 = vld [vmem:[#allocation2 + $0x5a8] sm:$0xff]
    %v297 = vld [vmem:[#allocation2 + $0x5b0] sm:$0xff]
    %v298 = vld [vmem:[#allocation2 + $0x5b8] sm:$0xff]
    %v299 = vld [vmem:[#allocation2 + $0x5c0] sm:$0xff]
    %v300 = vld [vmem:[#allocation2 + $0x5c8] sm:$0xff]
    %v301 = vld [vmem:[#allocation2 + $0x5d0] sm:$0xff]
    %v302 = vld [vmem:[#allocation2 + $0x5d8] sm:$0xff]
    %v303 = vld [vmem:[#allocation2 + $0x5e0] sm:$0xff]
    %v304 = vld [vmem:[#allocation2 + $0x5e8] sm:$0xff]
    %v305 = vld [vmem:[#allocation2 + $0x5f0] sm:$0xff]
    %v306 = vld [vmem:[#allocation2 + $0x5f8] sm:$0xff]
    %v307 = vld [vmem:[#allocation2 + $0x600] sm:$0xff]
    %v308 = vld [vmem:[#allocation2 + $0x608] sm:$0xff]
    %v309 = vld [vmem:[#allocation2 + $0x610] sm:$0xff]
    %v310 = vld [vmem:[#allocation2 + $0x618] sm:$0xff]
    %v311 = vld [vmem:[#allocation2 + $0x620] sm:$0xff]
    %v312 = vld [vmem:[#allocation2 + $0x628] sm:$0xff]
    %v313 = vld [vmem:[#allocation2 + $0x630] sm:$0xff]
    %v314 = vld [vmem:[#allocation2 + $0x638] sm:$0xff]
    %v315 = vld [vmem:[#allocation2 + $0x640] sm:$0xff]
    %v316 = vld [vmem:[#allocation2 + $0x648] sm:$0xff]
    %v317 = vld [vmem:[#allocation2 + $0x650] sm:$0xff]
    %v318 = vld [vmem:[#allocation2 + $0x658] sm:$0xff]
    %v319 = vld [vmem:[#allocation2 + $0x660] sm:$0xff]
    %v320 = vld [vmem:[#allocation2 + $0x668] sm:$0xff]
    %v321 = vld [vmem:[#allocation2 + $0x670] sm:$0xff]
    %v322 = vld [vmem:[#allocation2 + $0x678] sm:$0xff]
    %v323 = vld [vmem:[#allocation2 + $0x680] sm:$0xff]
    %v324 = vld [vmem:[#allocation2 + $0x688] sm:$0xff]
    %v325 = vld [vmem:[#allocation2 + $0x690] sm:$0xff]
    %v326 = vld [vmem:[#allocation2 + $0x698] sm:$0xff]
    %v327 = vld [vmem:[#allocation2 + $0x6a0] sm:$0xff]
    %v328 = vld [vmem:[#allocation2 + $0x6a8] sm:$0xff]
    %v329 = vld [vmem:[#allocation2 + $0x6b0] sm:$0xff]
    %v330 = vld [vmem:[#allocation2 + $0x6b8] sm:$0xff]
    %v331 = vld [vmem:[#allocation2 + $0x6c0] sm:$0xff]
    %v332 = vld [vmem:[#allocation2 + $0x6c8] sm:$0xff]
    %v333 = vld [vmem:[#allocation2 + $0x6d0] sm:$0xff]
    %v334 = vld [vmem:[#allocation2 + $0x6d8] sm:$0xff]
    %v335 = vld [vmem:[#allocation2 + $0x6e0] sm:$0xff]
    %v336 = vld [vmem:[#allocation2 + $0x6e8] sm:$0xff]
    %v337 = vld [vmem:[#allocation2 + $0x6f0] sm:$0xff]
    %v338 = vld [vmem:[#allocation2 + $0x6f8] sm:$0xff]
    %v339 = vld [vmem:[#allocation2 + $0x700] sm:$0xff]
    %v340 = vld [vmem:[#allocation2 + $0x708] sm:$0xff]
    %v341 = vld [vmem:[#allocation2 + $0x710] sm:$0xff]
    %v342 = vld [vmem:[#allocation2 + $0x718] sm:$0xff]
    %v343 = vld [vmem:[#allocation2 + $0x720] sm:$0xff]
    %v344 = vld [vmem:[#allocation2 + $0x728] sm:$0xff]
    %v345 = vld [vmem:[#allocation2 + $0x730] sm:$0xff]
    %v346 = vld [vmem:[#allocation2 + $0x738] sm:$0xff]
    %v347 = vld [vmem:[#allocation2 + $0x740] sm:$0xff]
    %v348 = vld [vmem:[#allocation2 + $0x748] sm:$0xff]
    %v349 = vld [vmem:[#allocation2 + $0x750] sm:$0xff]
    %v350 = vld [vmem:[#allocation2 + $0x758] sm:$0xff]
    %v351 = vld [vmem:[#allocation2 + $0x760] sm:$0xff]
    %v352 = vld [vmem:[#allocation2 + $0x768] sm:$0xff]
    %v353 = vld [vmem:[#allocation2 + $0x770] sm:$0xff]
    %v354 = vld [vmem:[#allocation2 + $0x778] sm:$0xff]
    %v355 = vld [vmem:[#allocation2 + $0x780] sm:$0xff]
    %v356 = vld [vmem:[#allocation2 + $0x788] sm:$0xff]
    %v357 = vld [vmem:[#allocation2 + $0x790] sm:$0xff]
    %v358 = vld [vmem:[#allocation2 + $0x798] sm:$0xff]
    %v359 = vld [vmem:[#allocation2 + $0x7a0] sm:$0xff]
    %v360 = vld [vmem:[#allocation2 + $0x7a8] sm:$0xff]
    %v361 = vld [vmem:[#allocation2 + $0x7b0] sm:$0xff]
    %v362 = vld [vmem:[#allocation2 + $0x7b8] sm:$0xff]
    %v363 = vld [vmem:[#allocation2 + $0x7c0] sm:$0xff]
    %v364 = vld [vmem:[#allocation2 + $0x7c8] sm:$0xff]
    %v365 = vld [vmem:[#allocation2 + $0x7d0] sm:$0xff]
    %v366 = vld [vmem:[#allocation2 + $0x7d8] sm:$0xff]
    %v367 = vld [vmem:[#allocation2 + $0x7e0] sm:$0xff]
    %v368 = vld [vmem:[#allocation2 + $0x7e8] sm:$0xff]
    %v369 = vld [vmem:[#allocation2 + $0x7f0] sm:$0xff]
    %v370 = vld [vmem:[#allocation2 + $0x7f8] sm:$0xff]
    %v371 = vld [vmem:[#allocation4] sm:$0xff]
    %v372 = vld [vmem:[#allocation4 + $0x8] sm:$0xff]
    %374 = vst [vmem:[#allocation1] ss:$9 sm:$0xff] %v114
    %v375 = vld [vmem:[#allocation1] sm:$0xff]
    %v376 = vld [vmem:[#allocation1 + $0x9] sm:$0xff]
    %v635 = vunpack.c.l.b16 %v115
    %v636 = vunpack.c.h.b16 %v115
    %v637 = vunpack.c.l.b16 %v116
    %v638 = vunpack.c.h.b16 %v116
    %v639 = vunpack.c.l.b16 %v117
    %v640 = vunpack.c.h.b16 %v117
    %v641 = vunpack.c.l.b16 %v118
    %v642 = vunpack.c.h.b16 %v118
    %v643 = vunpack.c.l.b16 %v119
    %v644 = vunpack.c.h.b16 %v119
    %v645 = vunpack.c.l.b16 %v120
    %v646 = vunpack.c.h.b16 %v120
    %v647 = vunpack.c.l.b16 %v121
    %v648 = vunpack.c.h.b16 %v121
    %v649 = vunpack.c.l.b16 %v122
    %v650 = vunpack.c.h.b16 %v122
    %v651 = vunpack.c.l.b16 %v123
    %v652 = vunpack.c.h.b16 %v123
    %v653 = vunpack.c.l.b16 %v124
    %v654 = vunpack.c.h.b16 %v124
    %v655 = vunpack.c.l.b16 %v125
    %v656 = vunpack.c.h.b16 %v125
    %v657 = vunpack.c.l.b16 %v126
    %v658 = vunpack.c.h.b16 %v126
    %v659 = vunpack.c.l.b16 %v127
    %v660 = vunpack.c.h.b16 %v127
    %v661 = vunpack.c.l.b16 %v128
    %v662 = vunpack.c.h.b16 %v128
    %v663 = vunpack.c.l.b16 %v129
    %v664 = vunpack.c.h.b16 %v129
    %v665 = vunpack.c.l.b16 %v130
    %v666 = vunpack.c.h.b16 %v130
    %v667 = vunpack.c.l.b16 %v131
    %v668 = vunpack.c.h.b16 %v131
    %v669 = vunpack.c.l.b16 %v132
    %v670 = vunpack.c.h.b16 %v132
    %v671 = vunpack.c.l.b16 %v133
    %v672 = vunpack.c.h.b16 %v133
    %v673 = vunpack.c.l.b16 %v134
    %v674 = vunpack.c.h.b16 %v134
    %v675 = vunpack.c.l.b16 %v135
    %v676 = vunpack.c.h.b16 %v135
    %v677 = vunpack.c.l.b16 %v136
    %v678 = vunpack.c.h.b16 %v136
    %v679 = vunpack.c.l.b16 %v137
    %v680 = vunpack.c.h.b16 %v137
    %v681 = vunpack.c.l.b16 %v138
    %v682 = vunpack.c.h.b16 %v138
    %v683 = vunpack.c.l.b16 %v139
    %v684 = vunpack.c.h.b16 %v139
    %v685 = vunpack.c.l.b16 %v140
    %v686 = vunpack.c.h.b16 %v140
    %v687 = vunpack.c.l.b16 %v141
    %v688 = vunpack.c.h.b16 %v141
    %v689 = vunpack.c.l.b16 %v142
    %v690 = vunpack.c.h.b16 %v142
    %v691 = vunpack.c.l.b16 %v143
    %v692 = vunpack.c.h.b16 %v143
    %v693 = vunpack.c.l.b16 %v144
    %v694 = vunpack.c.h.b16 %v144
    %v695 = vunpack.c.l.b16 %v145
    %v696 = vunpack.c.h.b16 %v145
    %v697 = vunpack.c.l.b16 %v146
    %v698 = vunpack.c.h.b16 %v146
    %v699 = vunpack.c.l.b16 %v147
    %v700 = vunpack.c.h.b16 %v147
    %v701 = vunpack.c.l.b16 %v148
    %v702 = vunpack.c.h.b16 %v148
    %v703 = vunpack.c.l.b16 %v149
    %v704 = vunpack.c.h.b16 %v149
    %v705 = vunpack.c.l.b16 %v150
    %v706 = vunpack.c.h.b16 %v150
    %v707 = vunpack.c.l.b16 %v151
    %v708 = vunpack.c.h.b16 %v151
    %v709 = vunpack.c.l.b16 %v152
    %v710 = vunpack.c.h.b16 %v152
    %v711 = vunpack.c.l.b16 %v153
    %v712 = vunpack.c.h.b16 %v153
    %v713 = vunpack.c.l.b16 %v154
    %v714 = vunpack.c.h.b16 %v154
    %v715 = vunpack.c.l.b16 %v155
    %v716 = vunpack.c.h.b16 %v155
    %v717 = vunpack.c.l.b16 %v156
    %v718 = vunpack.c.h.b16 %v156
    %v719 = vunpack.c.l.b16 %v157
    %v720 = vunpack.c.h.b16 %v157
    %v721 = vunpack.c.l.b16 %v158
    %v722 = vunpack.c.h.b16 %v158
    %v723 = vunpack.c.l.b16 %v159
    %v724 = vunpack.c.h.b16 %v159
    %v725 = vunpack.c.l.b16 %v160
    %v726 = vunpack.c.h.b16 %v160
    %v727 = vunpack.c.l.b16 %v161
    %v728 = vunpack.c.h.b16 %v161
    %v729 = vunpack.c.l.b16 %v162
    %v730 = vunpack.c.h.b16 %v162
    %v731 = vunpack.c.l.b16 %v163
    %v732 = vunpack.c.h.b16 %v163
    %v733 = vunpack.c.l.b16 %v164
    %v734 = vunpack.c.h.b16 %v164
    %v735 = vunpack.c.l.b16 %v165
    %v736 = vunpack.c.h.b16 %v165
    %v737 = vunpack.c.l.b16 %v166
    %v738 = vunpack.c.h.b16 %v166
    %v739 = vunpack.c.l.b16 %v167
    %v740 = vunpack.c.h.b16 %v167
    %v741 = vunpack.c.l.b16 %v168
    %v742 = vunpack.c.h.b16 %v168
    %v743 = vunpack.c.l.b16 %v169
    %v744 = vunpack.c.h.b16 %v169
    %v745 = vunpack.c.l.b16 %v170
    %v746 = vunpack.c.h.b16 %v170
    %v747 = vunpack.c.l.b16 %v171
    %v748 = vunpack.c.h.b16 %v171
    %v749 = vunpack.c.l.b16 %v172
    %v750 = vunpack.c.h.b16 %v172
    %v751 = vunpack.c.l.b16 %v173
    %v752 = vunpack.c.h.b16 %v173
    %v753 = vunpack.c.l.b16 %v174
    %v754 = vunpack.c.h.b16 %v174
    %v755 = vunpack.c.l.b16 %v175
    %v756 = vunpack.c.h.b16 %v175
    %v757 = vunpack.c.l.b16 %v176
    %v758 = vunpack.c.h.b16 %v176
    %v759 = vunpack.c.l.b16 %v177
    %v760 = vunpack.c.h.b16 %v177
    %v761 = vunpack.c.l.b16 %v178
    %v762 = vunpack.c.h.b16 %v178
    %v763 = vunpack.c.l.b16 %v179
    %v764 = vunpack.c.h.b16 %v179
    %v765 = vunpack.c.l.b16 %v180
    %v766 = vunpack.c.h.b16 %v180
    %v767 = vunpack.c.l.b16 %v181
    %v768 = vunpack.c.h.b16 %v181
    %v769 = vunpack.c.l.b16 %v182
    %v770 = vunpack.c.h.b16 %v182
    %v771 = vunpack.c.l.b16 %v183
    %v772 = vunpack.c.h.b16 %v183
    %v773 = vunpack.c.l.b16 %v184
    %v774 = vunpack.c.h.b16 %v184
    %v775 = vunpack.c.l.b16 %v185
    %v776 = vunpack.c.h.b16 %v185
    %v777 = vunpack.c.l.b16 %v186
    %v778 = vunpack.c.h.b16 %v186
    %v779 = vunpack.c.l.b16 %v187
    %v780 = vunpack.c.h.b16 %v187
    %v781 = vunpack.c.l.b16 %v188
    %v782 = vunpack.c.h.b16 %v188
    %v783 = vunpack.c.l.b16 %v189
    %v784 = vunpack.c.h.b16 %v189
    %v785 = vunpack.c.l.b16 %v190
    %v786 = vunpack.c.h.b16 %v190
    %v787 = vunpack.c.l.b16 %v191
    %v788 = vunpack.c.h.b16 %v191
    %v789 = vunpack.c.l.b16 %v192
    %v790 = vunpack.c.h.b16 %v192
    %v791 = vunpack.c.l.b16 %v193
    %v792 = vunpack.c.h.b16 %v193
    %v793 = vunpack.c.l.b16 %v194
    %v794 = vunpack.c.h.b16 %v194
    %v795 = vunpack.c.l.b16 %v195
    %v796 = vunpack.c.h.b16 %v195
    %v797 = vunpack.c.l.b16 %v196
    %v798 = vunpack.c.h.b16 %v196
    %v799 = vunpack.c.l.b16 %v197
    %v800 = vunpack.c.h.b16 %v197
    %v801 = vunpack.c.l.b16 %v198
    %v802 = vunpack.c.h.b16 %v198
    %v803 = vunpack.c.l.b16 %v199
    %v804 = vunpack.c.h.b16 %v199
    %v805 = vunpack.c.l.b16 %v200
    %v806 = vunpack.c.h.b16 %v200
    %v807 = vunpack.c.l.b16 %v201
    %v808 = vunpack.c.h.b16 %v201
    %v809 = vunpack.c.l.b16 %v202
    %v810 = vunpack.c.h.b16 %v202
    %v811 = vunpack.c.l.b16 %v203
    %v812 = vunpack.c.h.b16 %v203
    %v813 = vunpack.c.l.b16 %v204
    %v814 = vunpack.c.h.b16 %v204
    %v815 = vunpack.c.l.b16 %v205
    %v816 = vunpack.c.h.b16 %v205
    %v817 = vunpack.c.l.b16 %v206
    %v818 = vunpack.c.h.b16 %v206
    %v819 = vunpack.c.l.b16 %v207
    %v820 = vunpack.c.h.b16 %v207
    %v821 = vunpack.c.l.b16 %v208
    %v822 = vunpack.c.h.b16 %v208
    %v823 = vunpack.c.l.b16 %v209
    %v824 = vunpack.c.h.b16 %v209
    %v825 = vunpack.c.l.b16 %v210
    %v826 = vunpack.c.h.b16 %v210
    %v827 = vunpack.c.l.b16 %v211
    %v828 = vunpack.c.h.b16 %v211
    %v829 = vunpack.c.l.b16 %v212
    %v830 = vunpack.c.h.b16 %v212
    %v831 = vunpack.c.l.b16 %v213
    %v832 = vunpack.c.h.b16 %v213
    %v833 = vunpack.c.l.b16 %v214
    %v834 = vunpack.c.h.b16 %v214
    %v835 = vunpack.c.l.b16 %v215
    %v836 = vunpack.c.h.b16 %v215
    %v837 = vunpack.c.l.b16 %v216
    %v838 = vunpack.c.h.b16 %v216
    %v839 = vunpack.c.l.b16 %v217
    %v840 = vunpack.c.h.b16 %v217
    %v841 = vunpack.c.l.b16 %v218
    %v842 = vunpack.c.h.b16 %v218
    %v843 = vunpack.c.l.b16 %v219
    %v844 = vunpack.c.h.b16 %v219
    %v845 = vunpack.c.l.b16 %v220
    %v846 = vunpack.c.h.b16 %v220
    %v847 = vunpack.c.l.b16 %v221
    %v848 = vunpack.c.h.b16 %v221
    %v849 = vunpack.c.l.b16 %v222
    %v850 = vunpack.c.h.b16 %v222
    %v851 = vunpack.c.l.b16 %v223
    %v852 = vunpack.c.h.b16 %v223
    %v853 = vunpack.c.l.b16 %v224
    %v854 = vunpack.c.h.b16 %v224
    %v855 = vunpack.c.l.b16 %v225
    %v856 = vunpack.c.h.b16 %v225
    %v857 = vunpack.c.l.b16 %v226
    %v858 = vunpack.c.h.b16 %v226
    %v859 = vunpack.c.l.b16 %v227
    %v860 = vunpack.c.h.b16 %v227
    %v861 = vunpack.c.l.b16 %v228
    %v862 = vunpack.c.h.b16 %v228
    %v863 = vunpack.c.l.b16 %v229
    %v864 = vunpack.c.h.b16 %v229
    %v865 = vunpack.c.l.b16 %v230
    %v866 = vunpack.c.h.b16 %v230
    %v867 = vunpack.c.l.b16 %v231
    %v868 = vunpack.c.h.b16 %v231
    %v869 = vunpack.c.l.b16 %v232
    %v870 = vunpack.c.h.b16 %v232
    %v871 = vunpack.c.l.b16 %v233
    %v872 = vunpack.c.h.b16 %v233
    %v873 = vunpack.c.l.b16 %v234
    %v874 = vunpack.c.h.b16 %v234
    %v875 = vunpack.c.l.b16 %v235
    %v876 = vunpack.c.h.b16 %v235
    %v877 = vunpack.c.l.b16 %v236
    %v878 = vunpack.c.h.b16 %v236
    %v879 = vunpack.c.l.b16 %v237
    %v880 = vunpack.c.h.b16 %v237
    %v881 = vunpack.c.l.b16 %v238
    %v882 = vunpack.c.h.b16 %v238
    %v883 = vunpack.c.l.b16 %v239
    %v884 = vunpack.c.h.b16 %v239
    %v885 = vunpack.c.l.b16 %v240
    %v886 = vunpack.c.h.b16 %v240
    %v887 = vunpack.c.l.b16 %v241
    %v888 = vunpack.c.h.b16 %v241
    %v889 = vunpack.c.l.b16 %v242
    %v890 = vunpack.c.h.b16 %v242
    %v891 = vunpack.c.l.b16 %v243
    %v892 = vunpack.c.h.b16 %v243
    %v893 = vunpack.c.l.b16 %v244
    %v894 = vunpack.c.h.b16 %v244
    %v895 = vunpack.c.l.b16 %v245
    %v896 = vunpack.c.h.b16 %v245
    %v897 = vunpack.c.l.b16 %v246
    %v898 = vunpack.c.h.b16 %v246
    %v899 = vunpack.c.l.b16 %v247
    %v900 = vunpack.c.h.b16 %v247
    %v901 = vunpack.c.l.b16 %v248
    %v902 = vunpack.c.h.b16 %v248
    %v903 = vunpack.c.l.b16 %v249
    %v904 = vunpack.c.h.b16 %v249
    %v905 = vunpack.c.l.b16 %v250
    %v906 = vunpack.c.h.b16 %v250
    %v907 = vunpack.c.l.b16 %v251
    %v908 = vunpack.c.h.b16 %v251
    %v909 = vunpack.c.l.b16 %v252
    %v910 = vunpack.c.h.b16 %v252
    %v911 = vunpack.c.l.b16 %v253
    %v912 = vunpack.c.h.b16 %v253
    %v913 = vunpack.c.l.b16 %v254
    %v914 = vunpack.c.h.b16 %v254
    %v915 = vunpack.c.l.b16 %v255
    %v916 = vunpack.c.h.b16 %v255
    %v917 = vunpack.c.l.b16 %v256
    %v918 = vunpack.c.h.b16 %v256
    %v919 = vunpack.c.l.b16 %v257
    %v920 = vunpack.c.h.b16 %v257
    %v921 = vunpack.c.l.b16 %v258
    %v922 = vunpack.c.h.b16 %v258
    %v923 = vunpack.c.l.b16 %v259
    %v924 = vunpack.c.h.b16 %v259
    %v925 = vunpack.c.l.b16 %v260
    %v926 = vunpack.c.h.b16 %v260
    %v927 = vunpack.c.l.b16 %v261
    %v928 = vunpack.c.h.b16 %v261
    %v929 = vunpack.c.l.b16 %v262
    %v930 = vunpack.c.h.b16 %v262
    %v931 = vunpack.c.l.b16 %v263
    %v932 = vunpack.c.h.b16 %v263
    %v933 = vunpack.c.l.b16 %v264
    %v934 = vunpack.c.h.b16 %v264
    %v935 = vunpack.c.l.b16 %v265
    %v936 = vunpack.c.h.b16 %v265
    %v937 = vunpack.c.l.b16 %v266
    %v938 = vunpack.c.h.b16 %v266
    %v939 = vunpack.c.l.b16 %v267
    %v940 = vunpack.c.h.b16 %v267
    %v941 = vunpack.c.l.b16 %v268
    %v942 = vunpack.c.h.b16 %v268
    %v943 = vunpack.c.l.b16 %v269
    %v944 = vunpack.c.h.b16 %v269
    %v945 = vunpack.c.l.b16 %v270
    %v946 = vunpack.c.h.b16 %v270
    %v947 = vunpack.c.l.b16 %v271
    %v948 = vunpack.c.h.b16 %v271
    %v949 = vunpack.c.l.b16 %v272
    %v950 = vunpack.c.h.b16 %v272
    %v951 = vunpack.c.l.b16 %v273
    %v952 = vunpack.c.h.b16 %v273
    %v953 = vunpack.c.l.b16 %v274
    %v954 = vunpack.c.h.b16 %v274
    %v955 = vunpack.c.l.b16 %v275
    %v956 = vunpack.c.h.b16 %v275
    %v957 = vunpack.c.l.b16 %v276
    %v958 = vunpack.c.h.b16 %v276
    %v959 = vunpack.c.l.b16 %v277
    %v960 = vunpack.c.h.b16 %v277
    %v961 = vunpack.c.l.b16 %v278
    %v962 = vunpack.c.h.b16 %v278
    %v963 = vunpack.c.l.b16 %v279
    %v964 = vunpack.c.h.b16 %v279
    %v965 = vunpack.c.l.b16 %v280
    %v966 = vunpack.c.h.b16 %v280
    %v967 = vunpack.c.l.b16 %v281
    %v968 = vunpack.c.h.b16 %v281
    %v969 = vunpack.c.l.b16 %v282
    %v970 = vunpack.c.h.b16 %v282
    %v971 = vunpack.c.l.b16 %v283
    %v972 = vunpack.c.h.b16 %v283
    %v973 = vunpack.c.l.b16 %v284
    %v974 = vunpack.c.h.b16 %v284
    %v975 = vunpack.c.l.b16 %v285
    %v976 = vunpack.c.h.b16 %v285
    %v977 = vunpack.c.l.b16 %v286
    %v978 = vunpack.c.h.b16 %v286
    %v979 = vunpack.c.l.b16 %v287
    %v980 = vunpack.c.h.b16 %v287
    %v981 = vunpack.c.l.b16 %v288
    %v982 = vunpack.c.h.b16 %v288
    %v983 = vunpack.c.l.b16 %v289
    %v984 = vunpack.c.h.b16 %v289
    %v985 = vunpack.c.l.b16 %v290
    %v986 = vunpack.c.h.b16 %v290
    %v987 = vunpack.c.l.b16 %v291
    %v988 = vunpack.c.h.b16 %v291
    %v989 = vunpack.c.l.b16 %v292
    %v990 = vunpack.c.h.b16 %v292
    %v991 = vunpack.c.l.b16 %v293
    %v992 = vunpack.c.h.b16 %v293
    %v993 = vunpack.c.l.b16 %v294
    %v994 = vunpack.c.h.b16 %v294
    %v995 = vunpack.c.l.b16 %v295
    %v996 = vunpack.c.h.b16 %v295
    %v997 = vunpack.c.l.b16 %v296
    %v998 = vunpack.c.h.b16 %v296
    %v999 = vunpack.c.l.b16 %v297
    %v1000 = vunpack.c.h.b16 %v297
    %v1001 = vunpack.c.l.b16 %v298
    %v1002 = vunpack.c.h.b16 %v298
    %v1003 = vunpack.c.l.b16 %v299
    %v1004 = vunpack.c.h.b16 %v299
    %v1005 = vunpack.c.l.b16 %v300
    %v1006 = vunpack.c.h.b16 %v300
    %v1007 = vunpack.c.l.b16 %v301
    %v1008 = vunpack.c.h.b16 %v301
    %v1009 = vunpack.c.l.b16 %v302
    %v1010 = vunpack.c.h.b16 %v302
    %v1011 = vunpack.c.l.b16 %v303
    %v1012 = vunpack.c.h.b16 %v303
    %v1013 = vunpack.c.l.b16 %v304
    %v1014 = vunpack.c.h.b16 %v304
    %v1015 = vunpack.c.l.b16 %v305
    %v1016 = vunpack.c.h.b16 %v305
    %v1017 = vunpack.c.l.b16 %v306
    %v1018 = vunpack.c.h.b16 %v306
    %v1019 = vunpack.c.l.b16 %v307
    %v1020 = vunpack.c.h.b16 %v307
    %v1021 = vunpack.c.l.b16 %v308
    %v1022 = vunpack.c.h.b16 %v308
    %v1023 = vunpack.c.l.b16 %v309
    %v1024 = vunpack.c.h.b16 %v309
    %v1025 = vunpack.c.l.b16 %v310
    %v1026 = vunpack.c.h.b16 %v310
    %v1027 = vunpack.c.l.b16 %v311
    %v1028 = vunpack.c.h.b16 %v311
    %v1029 = vunpack.c.l.b16 %v312
    %v1030 = vunpack.c.h.b16 %v312
    %v1031 = vunpack.c.l.b16 %v313
    %v1032 = vunpack.c.h.b16 %v313
    %v1033 = vunpack.c.l.b16 %v314
    %v1034 = vunpack.c.h.b16 %v314
    %v1035 = vunpack.c.l.b16 %v315
    %v1036 = vunpack.c.h.b16 %v315
    %v1037 = vunpack.c.l.b16 %v316
    %v1038 = vunpack.c.h.b16 %v316
    %v1039 = vunpack.c.l.b16 %v317
    %v1040 = vunpack.c.h.b16 %v317
    %v1041 = vunpack.c.l.b16 %v318
    %v1042 = vunpack.c.h.b16 %v318
    %v1043 = vunpack.c.l.b16 %v319
    %v1044 = vunpack.c.h.b16 %v319
    %v1045 = vunpack.c.l.b16 %v320
    %v1046 = vunpack.c.h.b16 %v320
    %v1047 = vunpack.c.l.b16 %v321
    %v1048 = vunpack.c.h.b16 %v321
    %v1049 = vunpack.c.l.b16 %v322
    %v1050 = vunpack.c.h.b16 %v322
    %v1051 = vunpack.c.l.b16 %v323
    %v1052 = vunpack.c.h.b16 %v323
    %v1053 = vunpack.c.l.b16 %v324
    %v1054 = vunpack.c.h.b16 %v324
    %v1055 = vunpack.c.l.b16 %v325
    %v1056 = vunpack.c.h.b16 %v325
    %v1057 = vunpack.c.l.b16 %v326
    %v1058 = vunpack.c.h.b16 %v326
    %v1059 = vunpack.c.l.b16 %v327
    %v1060 = vunpack.c.h.b16 %v327
    %v1061 = vunpack.c.l.b16 %v328
    %v1062 = vunpack.c.h.b16 %v328
    %v1063 = vunpack.c.l.b16 %v329
    %v1064 = vunpack.c.h.b16 %v329
    %v1065 = vunpack.c.l.b16 %v330
    %v1066 = vunpack.c.h.b16 %v330
    %v1067 = vunpack.c.l.b16 %v331
    %v1068 = vunpack.c.h.b16 %v331
    %v1069 = vunpack.c.l.b16 %v332
    %v1070 = vunpack.c.h.b16 %v332
    %v1071 = vunpack.c.l.b16 %v333
    %v1072 = vunpack.c.h.b16 %v333
    %v1073 = vunpack.c.l.b16 %v334
    %v1074 = vunpack.c.h.b16 %v334
    %v1075 = vunpack.c.l.b16 %v335
    %v1076 = vunpack.c.h.b16 %v335
    %v1077 = vunpack.c.l.b16 %v336
    %v1078 = vunpack.c.h.b16 %v336
    %v1079 = vunpack.c.l.b16 %v337
    %v1080 = vunpack.c.h.b16 %v337
    %v1081 = vunpack.c.l.b16 %v338
    %v1082 = vunpack.c.h.b16 %v338
    %v1083 = vunpack.c.l.b16 %v339
    %v1084 = vunpack.c.h.b16 %v339
    %v1085 = vunpack.c.l.b16 %v340
    %v1086 = vunpack.c.h.b16 %v340
    %v1087 = vunpack.c.l.b16 %v341
    %v1088 = vunpack.c.h.b16 %v341
    %v1089 = vunpack.c.l.b16 %v342
    %v1090 = vunpack.c.h.b16 %v342
    %v1091 = vunpack.c.l.b16 %v343
    %v1092 = vunpack.c.h.b16 %v343
    %v1093 = vunpack.c.l.b16 %v344
    %v1094 = vunpack.c.h.b16 %v344
    %v1095 = vunpack.c.l.b16 %v345
    %v1096 = vunpack.c.h.b16 %v345
    %v1097 = vunpack.c.l.b16 %v346
    %v1098 = vunpack.c.h.b16 %v346
    %v1099 = vunpack.c.l.b16 %v347
    %v1100 = vunpack.c.h.b16 %v347
    %v1101 = vunpack.c.l.b16 %v348
    %v1102 = vunpack.c.h.b16 %v348
    %v1103 = vunpack.c.l.b16 %v349
    %v1104 = vunpack.c.h.b16 %v349
    %v1105 = vunpack.c.l.b16 %v350
    %v1106 = vunpack.c.h.b16 %v350
    %v1107 = vunpack.c.l.b16 %v351
    %v1108 = vunpack.c.h.b16 %v351
    %v1109 = vunpack.c.l.b16 %v352
    %v1110 = vunpack.c.h.b16 %v352
    %v1111 = vunpack.c.l.b16 %v353
    %v1112 = vunpack.c.h.b16 %v353
    %v1113 = vunpack.c.l.b16 %v354
    %v1114 = vunpack.c.h.b16 %v354
    %v1115 = vunpack.c.l.b16 %v355
    %v1116 = vunpack.c.h.b16 %v355
    %v1117 = vunpack.c.l.b16 %v356
    %v1118 = vunpack.c.h.b16 %v356
    %v1119 = vunpack.c.l.b16 %v357
    %v1120 = vunpack.c.h.b16 %v357
    %v1121 = vunpack.c.l.b16 %v358
    %v1122 = vunpack.c.h.b16 %v358
    %v1123 = vunpack.c.l.b16 %v359
    %v1124 = vunpack.c.h.b16 %v359
    %v1125 = vunpack.c.l.b16 %v360
    %v1126 = vunpack.c.h.b16 %v360
    %v1127 = vunpack.c.l.b16 %v361
    %v1128 = vunpack.c.h.b16 %v361
    %v1129 = vunpack.c.l.b16 %v362
    %v1130 = vunpack.c.h.b16 %v362
    %v1131 = vunpack.c.l.b16 %v363
    %v1132 = vunpack.c.h.b16 %v363
    %v1133 = vunpack.c.l.b16 %v364
    %v1134 = vunpack.c.h.b16 %v364
    %v1135 = vunpack.c.l.b16 %v365
    %v1136 = vunpack.c.h.b16 %v365
    %v1137 = vunpack.c.l.b16 %v366
    %v1138 = vunpack.c.h.b16 %v366
    %v1139 = vunpack.c.l.b16 %v367
    %v1140 = vunpack.c.h.b16 %v367
    %v1141 = vunpack.c.l.b16 %v368
    %v1142 = vunpack.c.h.b16 %v368
    %v1143 = vunpack.c.l.b16 %v369
    %v1144 = vunpack.c.h.b16 %v369
    %v1145 = vunpack.c.l.b16 %v370
    %v1146 = vunpack.c.h.b16 %v370
    %v1147 = vpack.c.b16 %v651, %v635
    %v1148 = vpack.c.b16 %v652, %v636
    %v1149 = vpack.c.b16 %v653, %v637
    %v1150 = vpack.c.b16 %v654, %v638
    %v1151 = vpack.c.b16 %v655, %v639
    %v1152 = vpack.c.b16 %v656, %v640
    %v1153 = vpack.c.b16 %v657, %v641
    %v1154 = vpack.c.b16 %v658, %v642
    %v1155 = vpack.c.b16 %v659, %v643
    %v1156 = vpack.c.b16 %v660, %v644
    %v1157 = vpack.c.b16 %v661, %v645
    %v1158 = vpack.c.b16 %v662, %v646
    %v1159 = vpack.c.b16 %v663, %v647
    %v1160 = vpack.c.b16 %v664, %v648
    %v1161 = vpack.c.b16 %v665, %v649
    %v1162 = vpack.c.b16 %v666, %v650
    %v1163 = vpack.c.b16 %v683, %v667
    %v1164 = vpack.c.b16 %v684, %v668
    %v1165 = vpack.c.b16 %v685, %v669
    %v1166 = vpack.c.b16 %v686, %v670
    %v1167 = vpack.c.b16 %v687, %v671
    %v1168 = vpack.c.b16 %v688, %v672
    %v1169 = vpack.c.b16 %v689, %v673
    %v1170 = vpack.c.b16 %v690, %v674
    %v1171 = vpack.c.b16 %v691, %v675
    %v1172 = vpack.c.b16 %v692, %v676
    %v1173 = vpack.c.b16 %v693, %v677
    %v1174 = vpack.c.b16 %v694, %v678
    %v1175 = vpack.c.b16 %v695, %v679
    %v1176 = vpack.c.b16 %v696, %v680
    %v1177 = vpack.c.b16 %v697, %v681
    %v1178 = vpack.c.b16 %v698, %v682
    %v1179 = vpack.c.b16 %v715, %v699
    %v1180 = vpack.c.b16 %v716, %v700
    %v1181 = vpack.c.b16 %v717, %v701
    %v1182 = vpack.c.b16 %v718, %v702
    %v1183 = vpack.c.b16 %v719, %v703
    %v1184 = vpack.c.b16 %v720, %v704
    %v1185 = vpack.c.b16 %v721, %v705
    %v1186 = vpack.c.b16 %v722, %v706
    %v1187 = vpack.c.b16 %v723, %v707
    %v1188 = vpack.c.b16 %v724, %v708
    %v1189 = vpack.c.b16 %v725, %v709
    %v1190 = vpack.c.b16 %v726, %v710
    %v1191 = vpack.c.b16 %v727, %v711
    %v1192 = vpack.c.b16 %v728, %v712
    %v1193 = vpack.c.b16 %v729, %v713
    %v1194 = vpack.c.b16 %v730, %v714
    %v1195 = vpack.c.b16 %v747, %v731
    %v1196 = vpack.c.b16 %v748, %v732
    %v1197 = vpack.c.b16 %v749, %v733
    %v1198 = vpack.c.b16 %v750, %v734
    %v1199 = vpack.c.b16 %v751, %v735
    %v1200 = vpack.c.b16 %v752, %v736
    %v1201 = vpack.c.b16 %v753, %v737
    %v1202 = vpack.c.b16 %v754, %v738
    %v1203 = vpack.c.b16 %v755, %v739
    %v1204 = vpack.c.b16 %v756, %v740
    %v1205 = vpack.c.b16 %v757, %v741
    %v1206 = vpack.c.b16 %v758, %v742
    %v1207 = vpack.c.b16 %v759, %v743
    %v1208 = vpack.c.b16 %v760, %v744
    %v1209 = vpack.c.b16 %v761, %v745
    %v1210 = vpack.c.b16 %v762, %v746
    %v1211 = vpack.c.b16 %v779, %v763
    %v1212 = vpack.c.b16 %v780, %v764
    %v1213 = vpack.c.b16 %v781, %v765
    %v1214 = vpack.c.b16 %v782, %v766
    %v1215 = vpack.c.b16 %v783, %v767
    %v1216 = vpack.c.b16 %v784, %v768
    %v1217 = vpack.c.b16 %v785, %v769
    %v1218 = vpack.c.b16 %v786, %v770
    %v1219 = vpack.c.b16 %v787, %v771
    %v1220 = vpack.c.b16 %v788, %v772
    %v1221 = vpack.c.b16 %v789, %v773
    %v1222 = vpack.c.b16 %v790, %v774
    %v1223 = vpack.c.b16 %v791, %v775
    %v1224 = vpack.c.b16 %v792, %v776
    %v1225 = vpack.c.b16 %v793, %v777
    %v1226 = vpack.c.b16 %v794, %v778
    %v1227 = vpack.c.b16 %v811, %v795
    %v1228 = vpack.c.b16 %v812, %v796
    %v1229 = vpack.c.b16 %v813, %v797
    %v1230 = vpack.c.b16 %v814, %v798
    %v1231 = vpack.c.b16 %v815, %v799
    %v1232 = vpack.c.b16 %v816, %v800
    %v1233 = vpack.c.b16 %v817, %v801
    %v1234 = vpack.c.b16 %v818, %v802
    %v1235 = vpack.c.b16 %v819, %v803
    %v1236 = vpack.c.b16 %v820, %v804
    %v1237 = vpack.c.b16 %v821, %v805
    %v1238 = vpack.c.b16 %v822, %v806
    %v1239 = vpack.c.b16 %v823, %v807
    %v1240 = vpack.c.b16 %v824, %v808
    %v1241 = vpack.c.b16 %v825, %v809
    %v1242 = vpack.c.b16 %v826, %v810
    %v1243 = vpack.c.b16 %v843, %v827
    %v1244 = vpack.c.b16 %v844, %v828
    %v1245 = vpack.c.b16 %v845, %v829
    %v1246 = vpack.c.b16 %v846, %v830
    %v1247 = vpack.c.b16 %v847, %v831
    %v1248 = vpack.c.b16 %v848, %v832
    %v1249 = vpack.c.b16 %v849, %v833
    %v1250 = vpack.c.b16 %v850, %v834
    %v1251 = vpack.c.b16 %v851, %v835
    %v1252 = vpack.c.b16 %v852, %v836
    %v1253 = vpack.c.b16 %v853, %v837
    %v1254 = vpack.c.b16 %v854, %v838
    %v1255 = vpack.c.b16 %v855, %v839
    %v1256 = vpack.c.b16 %v856, %v840
    %v1257 = vpack.c.b16 %v857, %v841
    %v1258 = vpack.c.b16 %v858, %v842
    %v1259 = vpack.c.b16 %v875, %v859
    %v1260 = vpack.c.b16 %v876, %v860
    %v1261 = vpack.c.b16 %v877, %v861
    %v1262 = vpack.c.b16 %v878, %v862
    %v1263 = vpack.c.b16 %v879, %v863
    %v1264 = vpack.c.b16 %v880, %v864
    %v1265 = vpack.c.b16 %v881, %v865
    %v1266 = vpack.c.b16 %v882, %v866
    %v1267 = vpack.c.b16 %v883, %v867
    %v1268 = vpack.c.b16 %v884, %v868
    %v1269 = vpack.c.b16 %v885, %v869
    %v1270 = vpack.c.b16 %v886, %v870
    %v1271 = vpack.c.b16 %v887, %v871
    %v1272 = vpack.c.b16 %v888, %v872
    %v1273 = vpack.c.b16 %v889, %v873
    %v1274 = vpack.c.b16 %v890, %v874
    %v1275 = vpack.c.b16 %v907, %v891
    %v1276 = vpack.c.b16 %v908, %v892
    %v1277 = vpack.c.b16 %v909, %v893
    %v1278 = vpack.c.b16 %v910, %v894
    %v1279 = vpack.c.b16 %v911, %v895
    %v1280 = vpack.c.b16 %v912, %v896
    %v1281 = vpack.c.b16 %v913, %v897
    %v1282 = vpack.c.b16 %v914, %v898
    %v1283 = vpack.c.b16 %v915, %v899
    %v1284 = vpack.c.b16 %v916, %v900
    %v1285 = vpack.c.b16 %v917, %v901
    %v1286 = vpack.c.b16 %v918, %v902
    %v1287 = vpack.c.b16 %v919, %v903
    %v1288 = vpack.c.b16 %v920, %v904
    %v1289 = vpack.c.b16 %v921, %v905
    %v1290 = vpack.c.b16 %v922, %v906
    %v1291 = vpack.c.b16 %v939, %v923
    %v1292 = vpack.c.b16 %v940, %v924
    %v1293 = vpack.c.b16 %v941, %v925
    %v1294 = vpack.c.b16 %v942, %v926
    %v1295 = vpack.c.b16 %v943, %v927
    %v1296 = vpack.c.b16 %v944, %v928
    %v1297 = vpack.c.b16 %v945, %v929
    %v1298 = vpack.c.b16 %v946, %v930
    %v1299 = vpack.c.b16 %v947, %v931
    %v1300 = vpack.c.b16 %v948, %v932
    %v1301 = vpack.c.b16 %v949, %v933
    %v1302 = vpack.c.b16 %v950, %v934
    %v1303 = vpack.c.b16 %v951, %v935
    %v1304 = vpack.c.b16 %v952, %v936
    %v1305 = vpack.c.b16 %v953, %v937
    %v1306 = vpack.c.b16 %v954, %v938
    %v1307 = vpack.c.b16 %v971, %v955
    %v1308 = vpack.c.b16 %v972, %v956
    %v1309 = vpack.c.b16 %v973, %v957
    %v1310 = vpack.c.b16 %v974, %v958
    %v1311 = vpack.c.b16 %v975, %v959
    %v1312 = vpack.c.b16 %v976, %v960
    %v1313 = vpack.c.b16 %v977, %v961
    %v1314 = vpack.c.b16 %v978, %v962
    %v1315 = vpack.c.b16 %v979, %v963
    %v1316 = vpack.c.b16 %v980, %v964
    %v1317 = vpack.c.b16 %v981, %v965
    %v1318 = vpack.c.b16 %v982, %v966
    %v1319 = vpack.c.b16 %v983, %v967
    %v1320 = vpack.c.b16 %v984, %v968
    %v1321 = vpack.c.b16 %v985, %v969
    %v1322 = vpack.c.b16 %v986, %v970
    %v1323 = vpack.c.b16 %v1003, %v987
    %v1324 = vpack.c.b16 %v1004, %v988
    %v1325 = vpack.c.b16 %v1005, %v989
    %v1326 = vpack.c.b16 %v1006, %v990
    %v1327 = vpack.c.b16 %v1007, %v991
    %v1328 = vpack.c.b16 %v1008, %v992
    %v1329 = vpack.c.b16 %v1009, %v993
    %v1330 = vpack.c.b16 %v1010, %v994
    %v1331 = vpack.c.b16 %v1011, %v995
    %v1332 = vpack.c.b16 %v1012, %v996
    %v1333 = vpack.c.b16 %v1013, %v997
    %v1334 = vpack.c.b16 %v1014, %v998
    %v1335 = vpack.c.b16 %v1015, %v999
    %v1336 = vpack.c.b16 %v1016, %v1000
    %v1337 = vpack.c.b16 %v1017, %v1001
    %v1338 = vpack.c.b16 %v1018, %v1002
    %v1339 = vpack.c.b16 %v1035, %v1019
    %v1340 = vpack.c.b16 %v1036, %v1020
    %v1341 = vpack.c.b16 %v1037, %v1021
    %v1342 = vpack.c.b16 %v1038, %v1022
    %v1343 = vpack.c.b16 %v1039, %v1023
    %v1344 = vpack.c.b16 %v1040, %v1024
    %v1345 = vpack.c.b16 %v1041, %v1025
    %v1346 = vpack.c.b16 %v1042, %v1026
    %v1347 = vpack.c.b16 %v1043, %v1027
    %v1348 = vpack.c.b16 %v1044, %v1028
    %v1349 = vpack.c.b16 %v1045, %v1029
    %v1350 = vpack.c.b16 %v1046, %v1030
    %v1351 = vpack.c.b16 %v1047, %v1031
    %v1352 = vpack.c.b16 %v1048, %v1032
    %v1353 = vpack.c.b16 %v1049, %v1033
    %v1354 = vpack.c.b16 %v1050, %v1034
    %v1355 = vpack.c.b16 %v1067, %v1051
    %v1356 = vpack.c.b16 %v1068, %v1052
    %v1357 = vpack.c.b16 %v1069, %v1053
    %v1358 = vpack.c.b16 %v1070, %v1054
    %v1359 = vpack.c.b16 %v1071, %v1055
    %v1360 = vpack.c.b16 %v1072, %v1056
    %v1361 = vpack.c.b16 %v1073, %v1057
    %v1362 = vpack.c.b16 %v1074, %v1058
    %v1363 = vpack.c.b16 %v1075, %v1059
    %v1364 = vpack.c.b16 %v1076, %v1060
    %v1365 = vpack.c.b16 %v1077, %v1061
    %v1366 = vpack.c.b16 %v1078, %v1062
    %v1367 = vpack.c.b16 %v1079, %v1063
    %v1368 = vpack.c.b16 %v1080, %v1064
    %v1369 = vpack.c.b16 %v1081, %v1065
    %v1370 = vpack.c.b16 %v1082, %v1066
    %v1371 = vpack.c.b16 %v1099, %v1083
    %v1372 = vpack.c.b16 %v1100, %v1084
    %v1373 = vpack.c.b16 %v1101, %v1085
    %v1374 = vpack.c.b16 %v1102, %v1086
    %v1375 = vpack.c.b16 %v1103, %v1087
    %v1376 = vpack.c.b16 %v1104, %v1088
    %v1377 = vpack.c.b16 %v1105, %v1089
    %v1378 = vpack.c.b16 %v1106, %v1090
    %v1379 = vpack.c.b16 %v1107, %v1091
    %v1380 = vpack.c.b16 %v1108, %v1092
    %v1381 = vpack.c.b16 %v1109, %v1093
    %v1382 = vpack.c.b16 %v1110, %v1094
    %v1383 = vpack.c.b16 %v1111, %v1095
    %v1384 = vpack.c.b16 %v1112, %v1096
    %v1385 = vpack.c.b16 %v1113, %v1097
    %v1386 = vpack.c.b16 %v1114, %v1098
    %v1387 = vpack.c.b16 %v1131, %v1115
    %v1388 = vpack.c.b16 %v1132, %v1116
    %v1389 = vpack.c.b16 %v1133, %v1117
    %v1390 = vpack.c.b16 %v1134, %v1118
    %v1391 = vpack.c.b16 %v1135, %v1119
    %v1392 = vpack.c.b16 %v1136, %v1120
    %v1393 = vpack.c.b16 %v1137, %v1121
    %v1394 = vpack.c.b16 %v1138, %v1122
    %v1395 = vpack.c.b16 %v1139, %v1123
    %v1396 = vpack.c.b16 %v1140, %v1124
    %v1397 = vpack.c.b16 %v1141, %v1125
    %v1398 = vpack.c.b16 %v1142, %v1126
    %v1399 = vpack.c.b16 %v1143, %v1127
    %v1400 = vpack.c.b16 %v1144, %v1128
    %v1401 = vpack.c.b16 %v1145, %v1129
    %v1402 = vpack.c.b16 %v1146, %v1130
    %v1661 = vperm.slane %v371, 0
    %v1662 = vperm.slane %v371, 1
    %v1663 = vperm.slane %v371, 2
    %v1664 = vperm.slane %v371, 3
    %v1665 = vperm.slane %v371, 4
    %v1666 = vperm.slane %v371, 5
    %v1667 = vperm.slane %v371, 6
    %v1668 = vperm.slane %v371, 7
    %v1669 = vperm.slane %v372, 0
    %v1670 = vperm.slane %v372, 1
    %v1671 = vperm.slane %v372, 2
    %v1672 = vperm.slane %v372, 3
    %v1673 = vperm.slane %v372, 4
    %v1674 = vperm.slane %v372, 5
    %v1675 = vperm.slane %v372, 6
    %v1676 = vperm.slane %v372, 7
    %1693 = vmatpush.bf16.msra.mxu0 %v1259
    %1694 = vmatpush.bf16.msra.mxu0 %v1243
    %1695 = vmatpush.bf16.msra.mxu0 %v1227
    %1696 = vmatpush.bf16.msra.mxu0 %v1211
    %1697 = vmatpush.bf16.msra.mxu0 %v1195
    %1698 = vmatpush.bf16.msra.mxu0 %v1179
    %1699 = vmatpush.bf16.msra.mxu0 %v1163
    %1700 = vmatpush.bf16.msra.mxu0 %v1147
    %1701 = vmatmul.bf16.gmra.mxu0 %v375
    %v1702 = vpop.f32.mrf.mxu0
    %v1703 = vadd.f32 %v1661, %v1702
    %v1704 = vpop.f32.mrf.mxu0
    %1705 = vdwg.mxu0
    %1706 = vmatpush.bf16.msra.mxu0 %v1387
    %1707 = vmatpush.bf16.msra.mxu0 %v1371
    %1708 = vmatpush.bf16.msra.mxu0 %v1355
    %1709 = vmatpush.bf16.msra.mxu0 %v1339
    %1710 = vmatpush.bf16.msra.mxu0 %v1323
    %1711 = vmatpush.bf16.msra.mxu0 %v1307
    %1712 = vmatpush.bf16.msra.mxu0 %v1291
    %1713 = vmatpush.bf16.msra.mxu0 %v1275
    %1714 = vmatmul.bf16.gmra.mxu0 %v376
    %v1715 = vpop.f32.mrf.mxu0
    %v1716 = vadd.f32 %v1703, %v1715
    %v1717 = vpop.f32.mrf.mxu0
    %1718 = vdwg.mxu0
    %1719 = vmatpush.bf16.msra.mxu0 %v1260
    %1720 = vmatpush.bf16.msra.mxu0 %v1244
    %1721 = vmatpush.bf16.msra.mxu0 %v1228
    %1722 = vmatpush.bf16.msra.mxu0 %v1212
    %1723 = vmatpush.bf16.msra.mxu0 %v1196
    %1724 = vmatpush.bf16.msra.mxu0 %v1180
    %1725 = vmatpush.bf16.msra.mxu0 %v1164
    %1726 = vmatpush.bf16.msra.mxu0 %v1148
    %1727 = vmatmul.bf16.gmra.mxu0 %v375
    %v1728 = vpop.f32.mrf.mxu0
    %v1729 = vadd.f32 %v1662, %v1728
    %v1730 = vpop.f32.mrf.mxu0
    %1731 = vdwg.mxu0
    %1732 = vmatpush.bf16.msra.mxu0 %v1388
    %1733 = vmatpush.bf16.msra.mxu0 %v1372
    %1734 = vmatpush.bf16.msra.mxu0 %v1356
    %1735 = vmatpush.bf16.msra.mxu0 %v1340
    %1736 = vmatpush.bf16.msra.mxu0 %v1324
    %1737 = vmatpush.bf16.msra.mxu0 %v1308
    %1738 = vmatpush.bf16.msra.mxu0 %v1292
    %1739 = vmatpush.bf16.msra.mxu0 %v1276
    %1740 = vmatmul.bf16.gmra.mxu0 %v376
    %v1741 = vpop.f32.mrf.mxu0
    %v1742 = vadd.f32 %v1729, %v1741
    %v1743 = vpop.f32.mrf.mxu0
    %1744 = vdwg.mxu0
    %1745 = vmatpush.bf16.msra.mxu0 %v1261
    %1746 = vmatpush.bf16.msra.mxu0 %v1245
    %1747 = vmatpush.bf16.msra.mxu0 %v1229
    %1748 = vmatpush.bf16.msra.mxu0 %v1213
    %1749 = vmatpush.bf16.msra.mxu0 %v1197
    %1750 = vmatpush.bf16.msra.mxu0 %v1181
    %1751 = vmatpush.bf16.msra.mxu0 %v1165
    %1752 = vmatpush.bf16.msra.mxu0 %v1149
    %1753 = vmatmul.bf16.gmra.mxu0 %v375
    %v1754 = vpop.f32.mrf.mxu0
    %v1755 = vadd.f32 %v1663, %v1754
    %v1756 = vpop.f32.mrf.mxu0
    %1757 = vdwg.mxu0
    %1758 = vmatpush.bf16.msra.mxu0 %v1389
    %1759 = vmatpush.bf16.msra.mxu0 %v1373
    %1760 = vmatpush.bf16.msra.mxu0 %v1357
    %1761 = vmatpush.bf16.msra.mxu0 %v1341
    %1762 = vmatpush.bf16.msra.mxu0 %v1325
    %1763 = vmatpush.bf16.msra.mxu0 %v1309
    %1764 = vmatpush.bf16.msra.mxu0 %v1293
    %1765 = vmatpush.bf16.msra.mxu0 %v1277
    %1766 = vmatmul.bf16.gmra.mxu0 %v376
    %v1767 = vpop.f32.mrf.mxu0
    %v1768 = vadd.f32 %v1755, %v1767
    %v1769 = vpop.f32.mrf.mxu0
    %1770 = vdwg.mxu0
    %1771 = vmatpush.bf16.msra.mxu0 %v1262
    %1772 = vmatpush.bf16.msra.mxu0 %v1246
    %1773 = vmatpush.bf16.msra.mxu0 %v1230
    %1774 = vmatpush.bf16.msra.mxu0 %v1214
    %1775 = vmatpush.bf16.msra.mxu0 %v1198
    %1776 = vmatpush.bf16.msra.mxu0 %v1182
    %1777 = vmatpush.bf16.msra.mxu0 %v1166
    %1778 = vmatpush.bf16.msra.mxu0 %v1150
    %1779 = vmatmul.bf16.gmra.mxu0 %v375
    %v1780 = vpop.f32.mrf.mxu0
    %v1781 = vadd.f32 %v1664, %v1780
    %v1782 = vpop.f32.mrf.mxu0
    %1783 = vdwg.mxu0
    %1784 = vmatpush.bf16.msra.mxu0 %v1390
    %1785 = vmatpush.bf16.msra.mxu0 %v1374
    %1786 = vmatpush.bf16.msra.mxu0 %v1358
    %1787 = vmatpush.bf16.msra.mxu0 %v1342
    %1788 = vmatpush.bf16.msra.mxu0 %v1326
    %1789 = vmatpush.bf16.msra.mxu0 %v1310
    %1790 = vmatpush.bf16.msra.mxu0 %v1294
    %1791 = vmatpush.bf16.msra.mxu0 %v1278
    %1792 = vmatmul.bf16.gmra.mxu0 %v376
    %v1793 = vpop.f32.mrf.mxu0
    %v1794 = vadd.f32 %v1781, %v1793
    %v1795 = vpop.f32.mrf.mxu0
    %1796 = vdwg.mxu0
    %1797 = vmatpush.bf16.msra.mxu0 %v1263
    %1798 = vmatpush.bf16.msra.mxu0 %v1247
    %1799 = vmatpush.bf16.msra.mxu0 %v1231
    %1800 = vmatpush.bf16.msra.mxu0 %v1215
    %1801 = vmatpush.bf16.msra.mxu0 %v1199
    %1802 = vmatpush.bf16.msra.mxu0 %v1183
    %1803 = vmatpush.bf16.msra.mxu0 %v1167
    %1804 = vmatpush.bf16.msra.mxu0 %v1151
    %1805 = vmatmul.bf16.gmra.mxu0 %v375
    %v1806 = vpop.f32.mrf.mxu0
    %v1807 = vadd.f32 %v1665, %v1806
    %v1808 = vpop.f32.mrf.mxu0
    %1809 = vdwg.mxu0
    %1810 = vmatpush.bf16.msra.mxu0 %v1391
    %1811 = vmatpush.bf16.msra.mxu0 %v1375
    %1812 = vmatpush.bf16.msra.mxu0 %v1359
    %1813 = vmatpush.bf16.msra.mxu0 %v1343
    %1814 = vmatpush.bf16.msra.mxu0 %v1327
    %1815 = vmatpush.bf16.msra.mxu0 %v1311
    %1816 = vmatpush.bf16.msra.mxu0 %v1295
    %1817 = vmatpush.bf16.msra.mxu0 %v1279
    %1818 = vmatmul.bf16.gmra.mxu0 %v376
    %v1819 = vpop.f32.mrf.mxu0
    %v1820 = vadd.f32 %v1807, %v1819
    %v1821 = vpop.f32.mrf.mxu0
    %1822 = vdwg.mxu0
    %1823 = vmatpush.bf16.msra.mxu0 %v1264
    %1824 = vmatpush.bf16.msra.mxu0 %v1248
    %1825 = vmatpush.bf16.msra.mxu0 %v1232
    %1826 = vmatpush.bf16.msra.mxu0 %v1216
    %1827 = vmatpush.bf16.msra.mxu0 %v1200
    %1828 = vmatpush.bf16.msra.mxu0 %v1184
    %1829 = vmatpush.bf16.msra.mxu0 %v1168
    %1830 = vmatpush.bf16.msra.mxu0 %v1152
    %1831 = vmatmul.bf16.gmra.mxu0 %v375
    %v1832 = vpop.f32.mrf.mxu0
    %v1833 = vadd.f32 %v1666, %v1832
    %v1834 = vpop.f32.mrf.mxu0
    %1835 = vdwg.mxu0
    %1836 = vmatpush.bf16.msra.mxu0 %v1392
    %1837 = vmatpush.bf16.msra.mxu0 %v1376
    %1838 = vmatpush.bf16.msra.mxu0 %v1360
    %1839 = vmatpush.bf16.msra.mxu0 %v1344
    %1840 = vmatpush.bf16.msra.mxu0 %v1328
    %1841 = vmatpush.bf16.msra.mxu0 %v1312
    %1842 = vmatpush.bf16.msra.mxu0 %v1296
    %1843 = vmatpush.bf16.msra.mxu0 %v1280
    %1844 = vmatmul.bf16.gmra.mxu0 %v376
    %v1845 = vpop.f32.mrf.mxu0
    %v1846 = vadd.f32 %v1833, %v1845
    %v1847 = vpop.f32.mrf.mxu0
    %1848 = vdwg.mxu0
    %1849 = vmatpush.bf16.msra.mxu0 %v1265
    %1850 = vmatpush.bf16.msra.mxu0 %v1249
    %1851 = vmatpush.bf16.msra.mxu0 %v1233
    %1852 = vmatpush.bf16.msra.mxu0 %v1217
    %1853 = vmatpush.bf16.msra.mxu0 %v1201
    %1854 = vmatpush.bf16.msra.mxu0 %v1185
    %1855 = vmatpush.bf16.msra.mxu0 %v1169
    %1856 = vmatpush.bf16.msra.mxu0 %v1153
    %1857 = vmatmul.bf16.gmra.mxu0 %v375
    %v1858 = vpop.f32.mrf.mxu0
    %v1859 = vadd.f32 %v1667, %v1858
    %v1860 = vpop.f32.mrf.mxu0
    %1861 = vdwg.mxu0
    %1862 = vmatpush.bf16.msra.mxu0 %v1393
    %1863 = vmatpush.bf16.msra.mxu0 %v1377
    %1864 = vmatpush.bf16.msra.mxu0 %v1361
    %1865 = vmatpush.bf16.msra.mxu0 %v1345
    %1866 = vmatpush.bf16.msra.mxu0 %v1329
    %1867 = vmatpush.bf16.msra.mxu0 %v1313
    %1868 = vmatpush.bf16.msra.mxu0 %v1297
    %1869 = vmatpush.bf16.msra.mxu0 %v1281
    %1870 = vmatmul.bf16.gmra.mxu0 %v376
    %v1871 = vpop.f32.mrf.mxu0
    %v1872 = vadd.f32 %v1859, %v1871
    %v1873 = vpop.f32.mrf.mxu0
    %1874 = vdwg.mxu0
    %1875 = vmatpush.bf16.msra.mxu0 %v1266
    %1876 = vmatpush.bf16.msra.mxu0 %v1250
    %1877 = vmatpush.bf16.msra.mxu0 %v1234
    %1878 = vmatpush.bf16.msra.mxu0 %v1218
    %1879 = vmatpush.bf16.msra.mxu0 %v1202
    %1880 = vmatpush.bf16.msra.mxu0 %v1186
    %1881 = vmatpush.bf16.msra.mxu0 %v1170
    %1882 = vmatpush.bf16.msra.mxu0 %v1154
    %1883 = vmatmul.bf16.gmra.mxu0 %v375
    %v1884 = vpop.f32.mrf.mxu0
    %v1885 = vadd.f32 %v1668, %v1884
    %v1886 = vpop.f32.mrf.mxu0
    %1887 = vdwg.mxu0
    %1888 = vmatpush.bf16.msra.mxu0 %v1394
    %1889 = vmatpush.bf16.msra.mxu0 %v1378
    %1890 = vmatpush.bf16.msra.mxu0 %v1362
    %1891 = vmatpush.bf16.msra.mxu0 %v1346
    %1892 = vmatpush.bf16.msra.mxu0 %v1330
    %1893 = vmatpush.bf16.msra.mxu0 %v1314
    %1894 = vmatpush.bf16.msra.mxu0 %v1298
    %1895 = vmatpush.bf16.msra.mxu0 %v1282
    %1896 = vmatmul.bf16.gmra.mxu0 %v376
    %v1897 = vpop.f32.mrf.mxu0
    %v1898 = vadd.f32 %v1885, %v1897
    %v1899 = vpop.f32.mrf.mxu0
    %1900 = vdwg.mxu0
    %1901 = vmatpush.bf16.msra.mxu0 %v1267
    %1902 = vmatpush.bf16.msra.mxu0 %v1251
    %1903 = vmatpush.bf16.msra.mxu0 %v1235
    %1904 = vmatpush.bf16.msra.mxu0 %v1219
    %1905 = vmatpush.bf16.msra.mxu0 %v1203
    %1906 = vmatpush.bf16.msra.mxu0 %v1187
    %1907 = vmatpush.bf16.msra.mxu0 %v1171
    %1908 = vmatpush.bf16.msra.mxu0 %v1155
    %1909 = vmatmul.bf16.gmra.mxu0 %v375
    %v1910 = vpop.f32.mrf.mxu0
    %v1911 = vadd.f32 %v1669, %v1910
    %v1912 = vpop.f32.mrf.mxu0
    %1913 = vdwg.mxu0
    %1914 = vmatpush.bf16.msra.mxu0 %v1395
    %1915 = vmatpush.bf16.msra.mxu0 %v1379
    %1916 = vmatpush.bf16.msra.mxu0 %v1363
    %1917 = vmatpush.bf16.msra.mxu0 %v1347
    %1918 = vmatpush.bf16.msra.mxu0 %v1331
    %1919 = vmatpush.bf16.msra.mxu0 %v1315
    %1920 = vmatpush.bf16.msra.mxu0 %v1299
    %1921 = vmatpush.bf16.msra.mxu0 %v1283
    %1922 = vmatmul.bf16.gmra.mxu0 %v376
    %v1923 = vpop.f32.mrf.mxu0
    %v1924 = vadd.f32 %v1911, %v1923
    %v1925 = vpop.f32.mrf.mxu0
    %1926 = vdwg.mxu0
    %1927 = vmatpush.bf16.msra.mxu0 %v1268
    %1928 = vmatpush.bf16.msra.mxu0 %v1252
    %1929 = vmatpush.bf16.msra.mxu0 %v1236
    %1930 = vmatpush.bf16.msra.mxu0 %v1220
    %1931 = vmatpush.bf16.msra.mxu0 %v1204
    %1932 = vmatpush.bf16.msra.mxu0 %v1188
    %1933 = vmatpush.bf16.msra.mxu0 %v1172
    %1934 = vmatpush.bf16.msra.mxu0 %v1156
    %1935 = vmatmul.bf16.gmra.mxu0 %v375
    %v1936 = vpop.f32.mrf.mxu0
    %v1937 = vadd.f32 %v1670, %v1936
    %v1938 = vpop.f32.mrf.mxu0
    %1939 = vdwg.mxu0
    %1940 = vmatpush.bf16.msra.mxu0 %v1396
    %1941 = vmatpush.bf16.msra.mxu0 %v1380
    %1942 = vmatpush.bf16.msra.mxu0 %v1364
    %1943 = vmatpush.bf16.msra.mxu0 %v1348
    %1944 = vmatpush.bf16.msra.mxu0 %v1332
    %1945 = vmatpush.bf16.msra.mxu0 %v1316
    %1946 = vmatpush.bf16.msra.mxu0 %v1300
    %1947 = vmatpush.bf16.msra.mxu0 %v1284
    %1948 = vmatmul.bf16.gmra.mxu0 %v376
    %v1949 = vpop.f32.mrf.mxu0
    %v1950 = vadd.f32 %v1937, %v1949
    %v1951 = vpop.f32.mrf.mxu0
    %1952 = vdwg.mxu0
    %1953 = vmatpush.bf16.msra.mxu0 %v1269
    %1954 = vmatpush.bf16.msra.mxu0 %v1253
    %1955 = vmatpush.bf16.msra.mxu0 %v1237
    %1956 = vmatpush.bf16.msra.mxu0 %v1221
    %1957 = vmatpush.bf16.msra.mxu0 %v1205
    %1958 = vmatpush.bf16.msra.mxu0 %v1189
    %1959 = vmatpush.bf16.msra.mxu0 %v1173
    %1960 = vmatpush.bf16.msra.mxu0 %v1157
    %1961 = vmatmul.bf16.gmra.mxu0 %v375
    %v1962 = vpop.f32.mrf.mxu0
    %v1963 = vadd.f32 %v1671, %v1962
    %v1964 = vpop.f32.mrf.mxu0
    %1965 = vdwg.mxu0
    %1966 = vmatpush.bf16.msra.mxu0 %v1397
    %1967 = vmatpush.bf16.msra.mxu0 %v1381
    %1968 = vmatpush.bf16.msra.mxu0 %v1365
    %1969 = vmatpush.bf16.msra.mxu0 %v1349
    %1970 = vmatpush.bf16.msra.mxu0 %v1333
    %1971 = vmatpush.bf16.msra.mxu0 %v1317
    %1972 = vmatpush.bf16.msra.mxu0 %v1301
    %1973 = vmatpush.bf16.msra.mxu0 %v1285
    %1974 = vmatmul.bf16.gmra.mxu0 %v376
    %v1975 = vpop.f32.mrf.mxu0
    %v1976 = vadd.f32 %v1963, %v1975
    %v1977 = vpop.f32.mrf.mxu0
    %1978 = vdwg.mxu0
    %1979 = vmatpush.bf16.msra.mxu0 %v1270
    %1980 = vmatpush.bf16.msra.mxu0 %v1254
    %1981 = vmatpush.bf16.msra.mxu0 %v1238
    %1982 = vmatpush.bf16.msra.mxu0 %v1222
    %1983 = vmatpush.bf16.msra.mxu0 %v1206
    %1984 = vmatpush.bf16.msra.mxu0 %v1190
    %1985 = vmatpush.bf16.msra.mxu0 %v1174
    %1986 = vmatpush.bf16.msra.mxu0 %v1158
    %1987 = vmatmul.bf16.gmra.mxu0 %v375
    %v1988 = vpop.f32.mrf.mxu0
    %v1989 = vadd.f32 %v1672, %v1988
    %v1990 = vpop.f32.mrf.mxu0
    %1991 = vdwg.mxu0
    %1992 = vmatpush.bf16.msra.mxu0 %v1398
    %1993 = vmatpush.bf16.msra.mxu0 %v1382
    %1994 = vmatpush.bf16.msra.mxu0 %v1366
    %1995 = vmatpush.bf16.msra.mxu0 %v1350
    %1996 = vmatpush.bf16.msra.mxu0 %v1334
    %1997 = vmatpush.bf16.msra.mxu0 %v1318
    %1998 = vmatpush.bf16.msra.mxu0 %v1302
    %1999 = vmatpush.bf16.msra.mxu0 %v1286
    %2000 = vmatmul.bf16.gmra.mxu0 %v376
    %v2001 = vpop.f32.mrf.mxu0
    %v2002 = vadd.f32 %v1989, %v2001
    %v2003 = vpop.f32.mrf.mxu0
    %2004 = vdwg.mxu0
    %2005 = vmatpush.bf16.msra.mxu0 %v1271
    %2006 = vmatpush.bf16.msra.mxu0 %v1255
    %2007 = vmatpush.bf16.msra.mxu0 %v1239
    %2008 = vmatpush.bf16.msra.mxu0 %v1223
    %2009 = vmatpush.bf16.msra.mxu0 %v1207
    %2010 = vmatpush.bf16.msra.mxu0 %v1191
    %2011 = vmatpush.bf16.msra.mxu0 %v1175
    %2012 = vmatpush.bf16.msra.mxu0 %v1159
    %2013 = vmatmul.bf16.gmra.mxu0 %v375
    %v2014 = vpop.f32.mrf.mxu0
    %v2015 = vadd.f32 %v1673, %v2014
    %v2016 = vpop.f32.mrf.mxu0
    %2017 = vdwg.mxu0
    %2018 = vmatpush.bf16.msra.mxu0 %v1399
    %2019 = vmatpush.bf16.msra.mxu0 %v1383
    %2020 = vmatpush.bf16.msra.mxu0 %v1367
    %2021 = vmatpush.bf16.msra.mxu0 %v1351
    %2022 = vmatpush.bf16.msra.mxu0 %v1335
    %2023 = vmatpush.bf16.msra.mxu0 %v1319
    %2024 = vmatpush.bf16.msra.mxu0 %v1303
    %2025 = vmatpush.bf16.msra.mxu0 %v1287
    %2026 = vmatmul.bf16.gmra.mxu0 %v376
    %v2027 = vpop.f32.mrf.mxu0
    %v2028 = vadd.f32 %v2015, %v2027
    %v2029 = vpop.f32.mrf.mxu0
    %2030 = vdwg.mxu0
    %2031 = vmatpush.bf16.msra.mxu0 %v1272
    %2032 = vmatpush.bf16.msra.mxu0 %v1256
    %2033 = vmatpush.bf16.msra.mxu0 %v1240
    %2034 = vmatpush.bf16.msra.mxu0 %v1224
    %2035 = vmatpush.bf16.msra.mxu0 %v1208
    %2036 = vmatpush.bf16.msra.mxu0 %v1192
    %2037 = vmatpush.bf16.msra.mxu0 %v1176
    %2038 = vmatpush.bf16.msra.mxu0 %v1160
    %2039 = vmatmul.bf16.gmra.mxu0 %v375
    %v2040 = vpop.f32.mrf.mxu0
    %v2041 = vadd.f32 %v1674, %v2040
    %v2042 = vpop.f32.mrf.mxu0
    %2043 = vdwg.mxu0
    %2044 = vmatpush.bf16.msra.mxu0 %v1400
    %2045 = vmatpush.bf16.msra.mxu0 %v1384
    %2046 = vmatpush.bf16.msra.mxu0 %v1368
    %2047 = vmatpush.bf16.msra.mxu0 %v1352
    %2048 = vmatpush.bf16.msra.mxu0 %v1336
    %2049 = vmatpush.bf16.msra.mxu0 %v1320
    %2050 = vmatpush.bf16.msra.mxu0 %v1304
    %2051 = vmatpush.bf16.msra.mxu0 %v1288
    %2052 = vmatmul.bf16.gmra.mxu0 %v376
    %v2053 = vpop.f32.mrf.mxu0
    %v2054 = vadd.f32 %v2041, %v2053
    %v2055 = vpop.f32.mrf.mxu0
    %2056 = vdwg.mxu0
    %2057 = vmatpush.bf16.msra.mxu0 %v1273
    %2058 = vmatpush.bf16.msra.mxu0 %v1257
    %2059 = vmatpush.bf16.msra.mxu0 %v1241
    %2060 = vmatpush.bf16.msra.mxu0 %v1225
    %2061 = vmatpush.bf16.msra.mxu0 %v1209
    %2062 = vmatpush.bf16.msra.mxu0 %v1193
    %2063 = vmatpush.bf16.msra.mxu0 %v1177
    %2064 = vmatpush.bf16.msra.mxu0 %v1161
    %2065 = vmatmul.bf16.gmra.mxu0 %v375
    %v2066 = vpop.f32.mrf.mxu0
    %v2067 = vadd.f32 %v1675, %v2066
    %v2068 = vpop.f32.mrf.mxu0
    %2069 = vdwg.mxu0
    %2070 = vmatpush.bf16.msra.mxu0 %v1401
    %2071 = vmatpush.bf16.msra.mxu0 %v1385
    %2072 = vmatpush.bf16.msra.mxu0 %v1369
    %2073 = vmatpush.bf16.msra.mxu0 %v1353
    %2074 = vmatpush.bf16.msra.mxu0 %v1337
    %2075 = vmatpush.bf16.msra.mxu0 %v1321
    %2076 = vmatpush.bf16.msra.mxu0 %v1305
    %2077 = vmatpush.bf16.msra.mxu0 %v1289
    %2078 = vmatmul.bf16.gmra.mxu0 %v376
    %v2079 = vpop.f32.mrf.mxu0
    %v2080 = vadd.f32 %v2067, %v2079
    %v2081 = vpop.f32.mrf.mxu0
    %2082 = vdwg.mxu0
    %2083 = vmatpush.bf16.msra.mxu0 %v1274
    %2084 = vmatpush.bf16.msra.mxu0 %v1258
    %2085 = vmatpush.bf16.msra.mxu0 %v1242
    %2086 = vmatpush.bf16.msra.mxu0 %v1226
    %2087 = vmatpush.bf16.msra.mxu0 %v1210
    %2088 = vmatpush.bf16.msra.mxu0 %v1194
    %2089 = vmatpush.bf16.msra.mxu0 %v1178
    %2090 = vmatpush.bf16.msra.mxu0 %v1162
    %2091 = vmatmul.bf16.gmra.mxu0 %v375
    %v2092 = vpop.f32.mrf.mxu0
    %v2093 = vadd.f32 %v1676, %v2092
    %v2094 = vpop.f32.mrf.mxu0
    %2095 = vdwg.mxu0
    %2096 = vmatpush.bf16.msra.mxu0 %v1402
    %2097 = vmatpush.bf16.msra.mxu0 %v1386
    %2098 = vmatpush.bf16.msra.mxu0 %v1370
    %2099 = vmatpush.bf16.msra.mxu0 %v1354
    %2100 = vmatpush.bf16.msra.mxu0 %v1338
    %2101 = vmatpush.bf16.msra.mxu0 %v1322
    %2102 = vmatpush.bf16.msra.mxu0 %v1306
    %2103 = vmatpush.bf16.msra.mxu0 %v1290
    %2104 = vmatmul.bf16.gmra.mxu0 %v376
    %v2105 = vpop.f32.mrf.mxu0
    %v2106 = vadd.f32 %v2093, %v2105
    %v2107 = vpop.f32.mrf.mxu0
    %2108 = vdwg.mxu0
    %v2109 = vmax.f32 %v1716, 0.0
    %v2110 = vmax.f32 %v1742, 0.0
    %v2111 = vmax.f32 %v1768, 0.0
    %v2112 = vmax.f32 %v1794, 0.0
    %v2113 = vmax.f32 %v1820, 0.0
    %v2114 = vmax.f32 %v1846, 0.0
    %v2115 = vmax.f32 %v1872, 0.0
    %v2116 = vmax.f32 %v1898, 0.0
    %v2117 = vmax.f32 %v1924, 0.0
    %v2118 = vmax.f32 %v1950, 0.0
    %v2119 = vmax.f32 %v1976, 0.0
    %v2120 = vmax.f32 %v2002, 0.0
    %v2121 = vmax.f32 %v2028, 0.0
    %v2122 = vmax.f32 %v2054, 0.0
    %v2123 = vmax.f32 %v2080, 0.0
    %v2124 = vmax.f32 %v2106, 0.0
    %v2125 = vpack.c.bf16 %v2109, %v2109
    %v2126 = vpack.c.bf16 %v2110, %v2110
    %v2127 = vpack.c.bf16 %v2111, %v2111
    %v2128 = vpack.c.bf16 %v2112, %v2112
    %v2129 = vpack.c.bf16 %v2113, %v2113
    %v2130 = vpack.c.bf16 %v2114, %v2114
    %v2131 = vpack.c.bf16 %v2115, %v2115
    %v2132 = vpack.c.bf16 %v2116, %v2116
    %v2133 = vpack.c.bf16 %v2117, %v2117
    %v2134 = vpack.c.bf16 %v2118, %v2118
    %v2135 = vpack.c.bf16 %v2119, %v2119
    %v2136 = vpack.c.bf16 %v2120, %v2120
    %v2137 = vpack.c.bf16 %v2121, %v2121
    %v2138 = vpack.c.bf16 %v2122, %v2122
    %v2139 = vpack.c.bf16 %v2123, %v2123
    %v2140 = vpack.c.bf16 %v2124, %v2124
    %v2141 = vld [vmem:[#allocation6] sm:$0xff]
    %v2142 = vld [vmem:[#allocation6 + $0x8] sm:$0xff]
    %v2143 = vld [vmem:[#allocation6 + $0x10] sm:$0xff]
    %v2144 = vld [vmem:[#allocation6 + $0x18] sm:$0xff]
    %v2145 = vld [vmem:[#allocation6 + $0x20] sm:$0xff]
    %v2146 = vld [vmem:[#allocation6 + $0x28] sm:$0xff]
    %v2147 = vld [vmem:[#allocation6 + $0x30] sm:$0xff]
    %v2148 = vld [vmem:[#allocation6 + $0x38] sm:$0xff]
    %v2149 = vld [vmem:[#allocation6 + $0x40] sm:$0xff]
    %v2150 = vld [vmem:[#allocation6 + $0x48] sm:$0xff]
    %v2151 = vld [vmem:[#allocation6 + $0x50] sm:$0xff]
    %v2152 = vld [vmem:[#allocation6 + $0x58] sm:$0xff]
    %v2153 = vld [vmem:[#allocation6 + $0x60] sm:$0xff]
    %v2154 = vld [vmem:[#allocation6 + $0x68] sm:$0xff]
    %v2155 = vld [vmem:[#allocation6 + $0x70] sm:$0xff]
    %v2156 = vld [vmem:[#allocation6 + $0x78] sm:$0xff]
    %v2157 = vld [vmem:[#allocation6 + $0x80] sm:$0xff]
    %v2158 = vld [vmem:[#allocation6 + $0x88] sm:$0xff]
    %v2159 = vld [vmem:[#allocation6 + $0x90] sm:$0xff]
    %v2160 = vld [vmem:[#allocation6 + $0x98] sm:$0xff]
    %v2161 = vld [vmem:[#allocation6 + $0xa0] sm:$0xff]
    %v2162 = vld [vmem:[#allocation6 + $0xa8] sm:$0xff]
    %v2163 = vld [vmem:[#allocation6 + $0xb0] sm:$0xff]
    %v2164 = vld [vmem:[#allocation6 + $0xb8] sm:$0xff]
    %v2165 = vld [vmem:[#allocation6 + $0xc0] sm:$0xff]
    %v2166 = vld [vmem:[#allocation6 + $0xc8] sm:$0xff]
    %v2167 = vld [vmem:[#allocation6 + $0xd0] sm:$0xff]
    %v2168 = vld [vmem:[#allocation6 + $0xd8] sm:$0xff]
    %v2169 = vld [vmem:[#allocation6 + $0xe0] sm:$0xff]
    %v2170 = vld [vmem:[#allocation6 + $0xe8] sm:$0xff]
    %v2171 = vld [vmem:[#allocation6 + $0xf0] sm:$0xff]
    %v2172 = vld [vmem:[#allocation6 + $0xf8] sm:$0xff]
    %v2173 = vld [vmem:[#allocation6 + $0x100] sm:$0xff]
    %v2174 = vld [vmem:[#allocation6 + $0x108] sm:$0xff]
    %v2175 = vld [vmem:[#allocation6 + $0x110] sm:$0xff]
    %v2176 = vld [vmem:[#allocation6 + $0x118] sm:$0xff]
    %v2177 = vld [vmem:[#allocation6 + $0x120] sm:$0xff]
    %v2178 = vld [vmem:[#allocation6 + $0x128] sm:$0xff]
    %v2179 = vld [vmem:[#allocation6 + $0x130] sm:$0xff]
    %v2180 = vld [vmem:[#allocation6 + $0x138] sm:$0xff]
    %v2181 = vld [vmem:[#allocation6 + $0x140] sm:$0xff]
    %v2182 = vld [vmem:[#allocation6 + $0x148] sm:$0xff]
    %v2183 = vld [vmem:[#allocation6 + $0x150] sm:$0xff]
    %v2184 = vld [vmem:[#allocation6 + $0x158] sm:$0xff]
    %v2185 = vld [vmem:[#allocation6 + $0x160] sm:$0xff]
    %v2186 = vld [vmem:[#allocation6 + $0x168] sm:$0xff]
    %v2187 = vld [vmem:[#allocation6 + $0x170] sm:$0xff]
    %v2188 = vld [vmem:[#allocation6 + $0x178] sm:$0xff]
    %v2189 = vld [vmem:[#allocation6 + $0x180] sm:$0xff]
    %v2190 = vld [vmem:[#allocation6 + $0x188] sm:$0xff]
    %v2191 = vld [vmem:[#allocation6 + $0x190] sm:$0xff]
    %v2192 = vld [vmem:[#allocation6 + $0x198] sm:$0xff]
    %v2193 = vld [vmem:[#allocation6 + $0x1a0] sm:$0xff]
    %v2194 = vld [vmem:[#allocation6 + $0x1a8] sm:$0xff]
    %v2195 = vld [vmem:[#allocation6 + $0x1b0] sm:$0xff]
    %v2196 = vld [vmem:[#allocation6 + $0x1b8] sm:$0xff]
    %v2197 = vld [vmem:[#allocation6 + $0x1c0] sm:$0xff]
    %v2198 = vld [vmem:[#allocation6 + $0x1c8] sm:$0xff]
    %v2199 = vld [vmem:[#allocation6 + $0x1d0] sm:$0xff]
    %v2200 = vld [vmem:[#allocation6 + $0x1d8] sm:$0xff]
    %v2201 = vld [vmem:[#allocation6 + $0x1e0] sm:$0xff]
    %v2202 = vld [vmem:[#allocation6 + $0x1e8] sm:$0xff]
    %v2203 = vld [vmem:[#allocation6 + $0x1f0] sm:$0xff]
    %v2204 = vld [vmem:[#allocation6 + $0x1f8] sm:$0xff]
    %v2205 = vld [vmem:[#allocation6 + $0x200] sm:$0xff]
    %v2206 = vld [vmem:[#allocation6 + $0x208] sm:$0xff]
    %v2207 = vld [vmem:[#allocation6 + $0x210] sm:$0xff]
    %v2208 = vld [vmem:[#allocation6 + $0x218] sm:$0xff]
    %v2209 = vld [vmem:[#allocation6 + $0x220] sm:$0xff]
    %v2210 = vld [vmem:[#allocation6 + $0x228] sm:$0xff]
    %v2211 = vld [vmem:[#allocation6 + $0x230] sm:$0xff]
    %v2212 = vld [vmem:[#allocation6 + $0x238] sm:$0xff]
    %v2213 = vld [vmem:[#allocation6 + $0x240] sm:$0xff]
    %v2214 = vld [vmem:[#allocation6 + $0x248] sm:$0xff]
    %v2215 = vld [vmem:[#allocation6 + $0x250] sm:$0xff]
    %v2216 = vld [vmem:[#allocation6 + $0x258] sm:$0xff]
    %v2217 = vld [vmem:[#allocation6 + $0x260] sm:$0xff]
    %v2218 = vld [vmem:[#allocation6 + $0x268] sm:$0xff]
    %v2219 = vld [vmem:[#allocation6 + $0x270] sm:$0xff]
    %v2220 = vld [vmem:[#allocation6 + $0x278] sm:$0xff]
    %v2221 = vld [vmem:[#allocation6 + $0x280] sm:$0xff]
    %v2222 = vld [vmem:[#allocation6 + $0x288] sm:$0xff]
    %v2223 = vld [vmem:[#allocation6 + $0x290] sm:$0xff]
    %v2224 = vld [vmem:[#allocation6 + $0x298] sm:$0xff]
    %v2225 = vld [vmem:[#allocation6 + $0x2a0] sm:$0xff]
    %v2226 = vld [vmem:[#allocation6 + $0x2a8] sm:$0xff]
    %v2227 = vld [vmem:[#allocation6 + $0x2b0] sm:$0xff]
    %v2228 = vld [vmem:[#allocation6 + $0x2b8] sm:$0xff]
    %v2229 = vld [vmem:[#allocation6 + $0x2c0] sm:$0xff]
    %v2230 = vld [vmem:[#allocation6 + $0x2c8] sm:$0xff]
    %v2231 = vld [vmem:[#allocation6 + $0x2d0] sm:$0xff]
    %v2232 = vld [vmem:[#allocation6 + $0x2d8] sm:$0xff]
    %v2233 = vld [vmem:[#allocation6 + $0x2e0] sm:$0xff]
    %v2234 = vld [vmem:[#allocation6 + $0x2e8] sm:$0xff]
    %v2235 = vld [vmem:[#allocation6 + $0x2f0] sm:$0xff]
    %v2236 = vld [vmem:[#allocation6 + $0x2f8] sm:$0xff]
    %v2237 = vld [vmem:[#allocation6 + $0x300] sm:$0xff]
    %v2238 = vld [vmem:[#allocation6 + $0x308] sm:$0xff]
    %v2239 = vld [vmem:[#allocation6 + $0x310] sm:$0xff]
    %v2240 = vld [vmem:[#allocation6 + $0x318] sm:$0xff]
    %v2241 = vld [vmem:[#allocation6 + $0x320] sm:$0xff]
    %v2242 = vld [vmem:[#allocation6 + $0x328] sm:$0xff]
    %v2243 = vld [vmem:[#allocation6 + $0x330] sm:$0xff]
    %v2244 = vld [vmem:[#allocation6 + $0x338] sm:$0xff]
    %v2245 = vld [vmem:[#allocation6 + $0x340] sm:$0xff]
    %v2246 = vld [vmem:[#allocation6 + $0x348] sm:$0xff]
    %v2247 = vld [vmem:[#allocation6 + $0x350] sm:$0xff]
    %v2248 = vld [vmem:[#allocation6 + $0x358] sm:$0xff]
    %v2249 = vld [vmem:[#allocation6 + $0x360] sm:$0xff]
    %v2250 = vld [vmem:[#allocation6 + $0x368] sm:$0xff]
    %v2251 = vld [vmem:[#allocation6 + $0x370] sm:$0xff]
    %v2252 = vld [vmem:[#allocation6 + $0x378] sm:$0xff]
    %v2253 = vld [vmem:[#allocation6 + $0x380] sm:$0xff]
    %v2254 = vld [vmem:[#allocation6 + $0x388] sm:$0xff]
    %v2255 = vld [vmem:[#allocation6 + $0x390] sm:$0xff]
    %v2256 = vld [vmem:[#allocation6 + $0x398] sm:$0xff]
    %v2257 = vld [vmem:[#allocation6 + $0x3a0] sm:$0xff]
    %v2258 = vld [vmem:[#allocation6 + $0x3a8] sm:$0xff]
    %v2259 = vld [vmem:[#allocation6 + $0x3b0] sm:$0xff]
    %v2260 = vld [vmem:[#allocation6 + $0x3b8] sm:$0xff]
    %v2261 = vld [vmem:[#allocation6 + $0x3c0] sm:$0xff]
    %v2262 = vld [vmem:[#allocation6 + $0x3c8] sm:$0xff]
    %v2263 = vld [vmem:[#allocation6 + $0x3d0] sm:$0xff]
    %v2264 = vld [vmem:[#allocation6 + $0x3d8] sm:$0xff]
    %v2265 = vld [vmem:[#allocation6 + $0x3e0] sm:$0xff]
    %v2266 = vld [vmem:[#allocation6 + $0x3e8] sm:$0xff]
    %v2267 = vld [vmem:[#allocation6 + $0x3f0] sm:$0xff]
    %v2268 = vld [vmem:[#allocation6 + $0x3f8] sm:$0xff]
    %v2269 = vld [vmem:[#allocation6 + $0x400] sm:$0xff]
    %v2270 = vld [vmem:[#allocation6 + $0x408] sm:$0xff]
    %v2271 = vld [vmem:[#allocation6 + $0x410] sm:$0xff]
    %v2272 = vld [vmem:[#allocation6 + $0x418] sm:$0xff]
    %v2273 = vld [vmem:[#allocation6 + $0x420] sm:$0xff]
    %v2274 = vld [vmem:[#allocation6 + $0x428] sm:$0xff]
    %v2275 = vld [vmem:[#allocation6 + $0x430] sm:$0xff]
    %v2276 = vld [vmem:[#allocation6 + $0x438] sm:$0xff]
    %v2277 = vld [vmem:[#allocation6 + $0x440] sm:$0xff]
    %v2278 = vld [vmem:[#allocation6 + $0x448] sm:$0xff]
    %v2279 = vld [vmem:[#allocation6 + $0x450] sm:$0xff]
    %v2280 = vld [vmem:[#allocation6 + $0x458] sm:$0xff]
    %v2281 = vld [vmem:[#allocation6 + $0x460] sm:$0xff]
    %v2282 = vld [vmem:[#allocation6 + $0x468] sm:$0xff]
    %v2283 = vld [vmem:[#allocation6 + $0x470] sm:$0xff]
    %v2284 = vld [vmem:[#allocation6 + $0x478] sm:$0xff]
    %v2285 = vld [vmem:[#allocation6 + $0x480] sm:$0xff]
    %v2286 = vld [vmem:[#allocation6 + $0x488] sm:$0xff]
    %v2287 = vld [vmem:[#allocation6 + $0x490] sm:$0xff]
    %v2288 = vld [vmem:[#allocation6 + $0x498] sm:$0xff]
    %v2289 = vld [vmem:[#allocation6 + $0x4a0] sm:$0xff]
    %v2290 = vld [vmem:[#allocation6 + $0x4a8] sm:$0xff]
    %v2291 = vld [vmem:[#allocation6 + $0x4b0] sm:$0xff]
    %v2292 = vld [vmem:[#allocation6 + $0x4b8] sm:$0xff]
    %v2293 = vld [vmem:[#allocation6 + $0x4c0] sm:$0xff]
    %v2294 = vld [vmem:[#allocation6 + $0x4c8] sm:$0xff]
    %v2295 = vld [vmem:[#allocation6 + $0x4d0] sm:$0xff]
    %v2296 = vld [vmem:[#allocation6 + $0x4d8] sm:$0xff]
    %v2297 = vld [vmem:[#allocation6 + $0x4e0] sm:$0xff]
    %v2298 = vld [vmem:[#allocation6 + $0x4e8] sm:$0xff]
    %v2299 = vld [vmem:[#allocation6 + $0x4f0] sm:$0xff]
    %v2300 = vld [vmem:[#allocation6 + $0x4f8] sm:$0xff]
    %v2301 = vld [vmem:[#allocation6 + $0x500] sm:$0xff]
    %v2302 = vld [vmem:[#allocation6 + $0x508] sm:$0xff]
    %v2303 = vld [vmem:[#allocation6 + $0x510] sm:$0xff]
    %v2304 = vld [vmem:[#allocation6 + $0x518] sm:$0xff]
    %v2305 = vld [vmem:[#allocation6 + $0x520] sm:$0xff]
    %v2306 = vld [vmem:[#allocation6 + $0x528] sm:$0xff]
    %v2307 = vld [vmem:[#allocation6 + $0x530] sm:$0xff]
    %v2308 = vld [vmem:[#allocation6 + $0x538] sm:$0xff]
    %v2309 = vld [vmem:[#allocation6 + $0x540] sm:$0xff]
    %v2310 = vld [vmem:[#allocation6 + $0x548] sm:$0xff]
    %v2311 = vld [vmem:[#allocation6 + $0x550] sm:$0xff]
    %v2312 = vld [vmem:[#allocation6 + $0x558] sm:$0xff]
    %v2313 = vld [vmem:[#allocation6 + $0x560] sm:$0xff]
    %v2314 = vld [vmem:[#allocation6 + $0x568] sm:$0xff]
    %v2315 = vld [vmem:[#allocation6 + $0x570] sm:$0xff]
    %v2316 = vld [vmem:[#allocation6 + $0x578] sm:$0xff]
    %v2317 = vld [vmem:[#allocation6 + $0x580] sm:$0xff]
    %v2318 = vld [vmem:[#allocation6 + $0x588] sm:$0xff]
    %v2319 = vld [vmem:[#allocation6 + $0x590] sm:$0xff]
    %v2320 = vld [vmem:[#allocation6 + $0x598] sm:$0xff]
    %v2321 = vld [vmem:[#allocation6 + $0x5a0] sm:$0xff]
    %v2322 = vld [vmem:[#allocation6 + $0x5a8] sm:$0xff]
    %v2323 = vld [vmem:[#allocation6 + $0x5b0] sm:$0xff]
    %v2324 = vld [vmem:[#allocation6 + $0x5b8] sm:$0xff]
    %v2325 = vld [vmem:[#allocation6 + $0x5c0] sm:$0xff]
    %v2326 = vld [vmem:[#allocation6 + $0x5c8] sm:$0xff]
    %v2327 = vld [vmem:[#allocation6 + $0x5d0] sm:$0xff]
    %v2328 = vld [vmem:[#allocation6 + $0x5d8] sm:$0xff]
    %v2329 = vld [vmem:[#allocation6 + $0x5e0] sm:$0xff]
    %v2330 = vld [vmem:[#allocation6 + $0x5e8] sm:$0xff]
    %v2331 = vld [vmem:[#allocation6 + $0x5f0] sm:$0xff]
    %v2332 = vld [vmem:[#allocation6 + $0x5f8] sm:$0xff]
    %v2333 = vld [vmem:[#allocation6 + $0x600] sm:$0xff]
    %v2334 = vld [vmem:[#allocation6 + $0x608] sm:$0xff]
    %v2335 = vld [vmem:[#allocation6 + $0x610] sm:$0xff]
    %v2336 = vld [vmem:[#allocation6 + $0x618] sm:$0xff]
    %v2337 = vld [vmem:[#allocation6 + $0x620] sm:$0xff]
    %v2338 = vld [vmem:[#allocation6 + $0x628] sm:$0xff]
    %v2339 = vld [vmem:[#allocation6 + $0x630] sm:$0xff]
    %v2340 = vld [vmem:[#allocation6 + $0x638] sm:$0xff]
    %v2341 = vld [vmem:[#allocation6 + $0x640] sm:$0xff]
    %v2342 = vld [vmem:[#allocation6 + $0x648] sm:$0xff]
    %v2343 = vld [vmem:[#allocation6 + $0x650] sm:$0xff]
    %v2344 = vld [vmem:[#allocation6 + $0x658] sm:$0xff]
    %v2345 = vld [vmem:[#allocation6 + $0x660] sm:$0xff]
    %v2346 = vld [vmem:[#allocation6 + $0x668] sm:$0xff]
    %v2347 = vld [vmem:[#allocation6 + $0x670] sm:$0xff]
    %v2348 = vld [vmem:[#allocation6 + $0x678] sm:$0xff]
    %v2349 = vld [vmem:[#allocation6 + $0x680] sm:$0xff]
    %v2350 = vld [vmem:[#allocation6 + $0x688] sm:$0xff]
    %v2351 = vld [vmem:[#allocation6 + $0x690] sm:$0xff]
    %v2352 = vld [vmem:[#allocation6 + $0x698] sm:$0xff]
    %v2353 = vld [vmem:[#allocation6 + $0x6a0] sm:$0xff]
    %v2354 = vld [vmem:[#allocation6 + $0x6a8] sm:$0xff]
    %v2355 = vld [vmem:[#allocation6 + $0x6b0] sm:$0xff]
    %v2356 = vld [vmem:[#allocation6 + $0x6b8] sm:$0xff]
    %v2357 = vld [vmem:[#allocation6 + $0x6c0] sm:$0xff]
    %v2358 = vld [vmem:[#allocation6 + $0x6c8] sm:$0xff]
    %v2359 = vld [vmem:[#allocation6 + $0x6d0] sm:$0xff]
    %v2360 = vld [vmem:[#allocation6 + $0x6d8] sm:$0xff]
    %v2361 = vld [vmem:[#allocation6 + $0x6e0] sm:$0xff]
    %v2362 = vld [vmem:[#allocation6 + $0x6e8] sm:$0xff]
    %v2363 = vld [vmem:[#allocation6 + $0x6f0] sm:$0xff]
    %v2364 = vld [vmem:[#allocation6 + $0x6f8] sm:$0xff]
    %v2365 = vld [vmem:[#allocation6 + $0x700] sm:$0xff]
    %v2366 = vld [vmem:[#allocation6 + $0x708] sm:$0xff]
    %v2367 = vld [vmem:[#allocation6 + $0x710] sm:$0xff]
    %v2368 = vld [vmem:[#allocation6 + $0x718] sm:$0xff]
    %v2369 = vld [vmem:[#allocation6 + $0x720] sm:$0xff]
    %v2370 = vld [vmem:[#allocation6 + $0x728] sm:$0xff]
    %v2371 = vld [vmem:[#allocation6 + $0x730] sm:$0xff]
    %v2372 = vld [vmem:[#allocation6 + $0x738] sm:$0xff]
    %v2373 = vld [vmem:[#allocation6 + $0x740] sm:$0xff]
    %v2374 = vld [vmem:[#allocation6 + $0x748] sm:$0xff]
    %v2375 = vld [vmem:[#allocation6 + $0x750] sm:$0xff]
    %v2376 = vld [vmem:[#allocation6 + $0x758] sm:$0xff]
    %v2377 = vld [vmem:[#allocation6 + $0x760] sm:$0xff]
    %v2378 = vld [vmem:[#allocation6 + $0x768] sm:$0xff]
    %v2379 = vld [vmem:[#allocation6 + $0x770] sm:$0xff]
    %v2380 = vld [vmem:[#allocation6 + $0x778] sm:$0xff]
    %v2381 = vld [vmem:[#allocation6 + $0x780] sm:$0xff]
    %v2382 = vld [vmem:[#allocation6 + $0x788] sm:$0xff]
    %v2383 = vld [vmem:[#allocation6 + $0x790] sm:$0xff]
    %v2384 = vld [vmem:[#allocation6 + $0x798] sm:$0xff]
    %v2385 = vld [vmem:[#allocation6 + $0x7a0] sm:$0xff]
    %v2386 = vld [vmem:[#allocation6 + $0x7a8] sm:$0xff]
    %v2387 = vld [vmem:[#allocation6 + $0x7b0] sm:$0xff]
    %v2388 = vld [vmem:[#allocation6 + $0x7b8] sm:$0xff]
    %v2389 = vld [vmem:[#allocation6 + $0x7c0] sm:$0xff]
    %v2390 = vld [vmem:[#allocation6 + $0x7c8] sm:$0xff]
    %v2391 = vld [vmem:[#allocation6 + $0x7d0] sm:$0xff]
    %v2392 = vld [vmem:[#allocation6 + $0x7d8] sm:$0xff]
    %v2393 = vld [vmem:[#allocation6 + $0x7e0] sm:$0xff]
    %v2394 = vld [vmem:[#allocation6 + $0x7e8] sm:$0xff]
    %v2395 = vld [vmem:[#allocation6 + $0x7f0] sm:$0xff]
    %v2396 = vld [vmem:[#allocation6 + $0x7f8] sm:$0xff]
    %v2397 = vld [vmem:[#allocation6 + $0x800] sm:$0xff]
    %v2398 = vld [vmem:[#allocation6 + $0x808] sm:$0xff]
    %v2399 = vld [vmem:[#allocation6 + $0x810] sm:$0xff]
    %v2400 = vld [vmem:[#allocation6 + $0x818] sm:$0xff]
    %v2401 = vld [vmem:[#allocation6 + $0x820] sm:$0xff]
    %v2402 = vld [vmem:[#allocation6 + $0x828] sm:$0xff]
    %v2403 = vld [vmem:[#allocation6 + $0x830] sm:$0xff]
    %v2404 = vld [vmem:[#allocation6 + $0x838] sm:$0xff]
    %v2405 = vld [vmem:[#allocation6 + $0x840] sm:$0xff]
    %v2406 = vld [vmem:[#allocation6 + $0x848] sm:$0xff]
    %v2407 = vld [vmem:[#allocation6 + $0x850] sm:$0xff]
    %v2408 = vld [vmem:[#allocation6 + $0x858] sm:$0xff]
    %v2409 = vld [vmem:[#allocation6 + $0x860] sm:$0xff]
    %v2410 = vld [vmem:[#allocation6 + $0x868] sm:$0xff]
    %v2411 = vld [vmem:[#allocation6 + $0x870] sm:$0xff]
    %v2412 = vld [vmem:[#allocation6 + $0x878] sm:$0xff]
    %v2413 = vld [vmem:[#allocation6 + $0x880] sm:$0xff]
    %v2414 = vld [vmem:[#allocation6 + $0x888] sm:$0xff]
    %v2415 = vld [vmem:[#allocation6 + $0x890] sm:$0xff]
    %v2416 = vld [vmem:[#allocation6 + $0x898] sm:$0xff]
    %v2417 = vld [vmem:[#allocation6 + $0x8a0] sm:$0xff]
    %v2418 = vld [vmem:[#allocation6 + $0x8a8] sm:$0xff]
    %v2419 = vld [vmem:[#allocation6 + $0x8b0] sm:$0xff]
    %v2420 = vld [vmem:[#allocation6 + $0x8b8] sm:$0xff]
    %v2421 = vld [vmem:[#allocation6 + $0x8c0] sm:$0xff]
    %v2422 = vld [vmem:[#allocation6 + $0x8c8] sm:$0xff]
    %v2423 = vld [vmem:[#allocation6 + $0x8d0] sm:$0xff]
    %v2424 = vld [vmem:[#allocation6 + $0x8d8] sm:$0xff]
    %v2425 = vld [vmem:[#allocation6 + $0x8e0] sm:$0xff]
    %v2426 = vld [vmem:[#allocation6 + $0x8e8] sm:$0xff]
    %v2427 = vld [vmem:[#allocation6 + $0x8f0] sm:$0xff]
    %v2428 = vld [vmem:[#allocation6 + $0x8f8] sm:$0xff]
    %v2429 = vld [vmem:[#allocation6 + $0x900] sm:$0xff]
    %v2430 = vld [vmem:[#allocation6 + $0x908] sm:$0xff]
    %v2431 = vld [vmem:[#allocation6 + $0x910] sm:$0xff]
    %v2432 = vld [vmem:[#allocation6 + $0x918] sm:$0xff]
    %v2433 = vld [vmem:[#allocation6 + $0x920] sm:$0xff]
    %v2434 = vld [vmem:[#allocation6 + $0x928] sm:$0xff]
    %v2435 = vld [vmem:[#allocation6 + $0x930] sm:$0xff]
    %v2436 = vld [vmem:[#allocation6 + $0x938] sm:$0xff]
    %v2437 = vld [vmem:[#allocation6 + $0x940] sm:$0xff]
    %v2438 = vld [vmem:[#allocation6 + $0x948] sm:$0xff]
    %v2439 = vld [vmem:[#allocation6 + $0x950] sm:$0xff]
    %v2440 = vld [vmem:[#allocation6 + $0x958] sm:$0xff]
    %v2441 = vld [vmem:[#allocation6 + $0x960] sm:$0xff]
    %v2442 = vld [vmem:[#allocation6 + $0x968] sm:$0xff]
    %v2443 = vld [vmem:[#allocation6 + $0x970] sm:$0xff]
    %v2444 = vld [vmem:[#allocation6 + $0x978] sm:$0xff]
    %v2445 = vld [vmem:[#allocation6 + $0x980] sm:$0xff]
    %v2446 = vld [vmem:[#allocation6 + $0x988] sm:$0xff]
    %v2447 = vld [vmem:[#allocation6 + $0x990] sm:$0xff]
    %v2448 = vld [vmem:[#allocation6 + $0x998] sm:$0xff]
    %v2449 = vld [vmem:[#allocation6 + $0x9a0] sm:$0xff]
    %v2450 = vld [vmem:[#allocation6 + $0x9a8] sm:$0xff]
    %v2451 = vld [vmem:[#allocation6 + $0x9b0] sm:$0xff]
    %v2452 = vld [vmem:[#allocation6 + $0x9b8] sm:$0xff]
    %v2453 = vld [vmem:[#allocation6 + $0x9c0] sm:$0xff]
    %v2454 = vld [vmem:[#allocation6 + $0x9c8] sm:$0xff]
    %v2455 = vld [vmem:[#allocation6 + $0x9d0] sm:$0xff]
    %v2456 = vld [vmem:[#allocation6 + $0x9d8] sm:$0xff]
    %v2457 = vld [vmem:[#allocation6 + $0x9e0] sm:$0xff]
    %v2458 = vld [vmem:[#allocation6 + $0x9e8] sm:$0xff]
    %v2459 = vld [vmem:[#allocation6 + $0x9f0] sm:$0xff]
    %v2460 = vld [vmem:[#allocation6 + $0x9f8] sm:$0xff]
    %v2461 = vld [vmem:[#allocation6 + $0xa00] sm:$0xff]
    %v2462 = vld [vmem:[#allocation6 + $0xa08] sm:$0xff]
    %v2463 = vld [vmem:[#allocation6 + $0xa10] sm:$0xff]
    %v2464 = vld [vmem:[#allocation6 + $0xa18] sm:$0xff]
    %v2465 = vld [vmem:[#allocation6 + $0xa20] sm:$0xff]
    %v2466 = vld [vmem:[#allocation6 + $0xa28] sm:$0xff]
    %v2467 = vld [vmem:[#allocation6 + $0xa30] sm:$0xff]
    %v2468 = vld [vmem:[#allocation6 + $0xa38] sm:$0xff]
    %v2469 = vld [vmem:[#allocation6 + $0xa40] sm:$0xff]
    %v2470 = vld [vmem:[#allocation6 + $0xa48] sm:$0xff]
    %v2471 = vld [vmem:[#allocation6 + $0xa50] sm:$0xff]
    %v2472 = vld [vmem:[#allocation6 + $0xa58] sm:$0xff]
    %v2473 = vld [vmem:[#allocation6 + $0xa60] sm:$0xff]
    %v2474 = vld [vmem:[#allocation6 + $0xa68] sm:$0xff]
    %v2475 = vld [vmem:[#allocation6 + $0xa70] sm:$0xff]
    %v2476 = vld [vmem:[#allocation6 + $0xa78] sm:$0xff]
    %v2477 = vld [vmem:[#allocation6 + $0xa80] sm:$0xff]
    %v2478 = vld [vmem:[#allocation6 + $0xa88] sm:$0xff]
    %v2479 = vld [vmem:[#allocation6 + $0xa90] sm:$0xff]
    %v2480 = vld [vmem:[#allocation6 + $0xa98] sm:$0xff]
    %v2481 = vld [vmem:[#allocation6 + $0xaa0] sm:$0xff]
    %v2482 = vld [vmem:[#allocation6 + $0xaa8] sm:$0xff]
    %v2483 = vld [vmem:[#allocation6 + $0xab0] sm:$0xff]
    %v2484 = vld [vmem:[#allocation6 + $0xab8] sm:$0xff]
    %v2485 = vld [vmem:[#allocation6 + $0xac0] sm:$0xff]
    %v2486 = vld [vmem:[#allocation6 + $0xac8] sm:$0xff]
    %v2487 = vld [vmem:[#allocation6 + $0xad0] sm:$0xff]
    %v2488 = vld [vmem:[#allocation6 + $0xad8] sm:$0xff]
    %v2489 = vld [vmem:[#allocation6 + $0xae0] sm:$0xff]
    %v2490 = vld [vmem:[#allocation6 + $0xae8] sm:$0xff]
    %v2491 = vld [vmem:[#allocation6 + $0xaf0] sm:$0xff]
    %v2492 = vld [vmem:[#allocation6 + $0xaf8] sm:$0xff]
    %v2493 = vld [vmem:[#allocation6 + $0xb00] sm:$0xff]
    %v2494 = vld [vmem:[#allocation6 + $0xb08] sm:$0xff]
    %v2495 = vld [vmem:[#allocation6 + $0xb10] sm:$0xff]
    %v2496 = vld [vmem:[#allocation6 + $0xb18] sm:$0xff]
    %v2497 = vld [vmem:[#allocation6 + $0xb20] sm:$0xff]
    %v2498 = vld [vmem:[#allocation6 + $0xb28] sm:$0xff]
    %v2499 = vld [vmem:[#allocation6 + $0xb30] sm:$0xff]
    %v2500 = vld [vmem:[#allocation6 + $0xb38] sm:$0xff]
    %v2501 = vld [vmem:[#allocation6 + $0xb40] sm:$0xff]
    %v2502 = vld [vmem:[#allocation6 + $0xb48] sm:$0xff]
    %v2503 = vld [vmem:[#allocation6 + $0xb50] sm:$0xff]
    %v2504 = vld [vmem:[#allocation6 + $0xb58] sm:$0xff]
    %v2505 = vld [vmem:[#allocation6 + $0xb60] sm:$0xff]
    %v2506 = vld [vmem:[#allocation6 + $0xb68] sm:$0xff]
    %v2507 = vld [vmem:[#allocation6 + $0xb70] sm:$0xff]
    %v2508 = vld [vmem:[#allocation6 + $0xb78] sm:$0xff]
    %v2509 = vld [vmem:[#allocation6 + $0xb80] sm:$0xff]
    %v2510 = vld [vmem:[#allocation6 + $0xb88] sm:$0xff]
    %v2511 = vld [vmem:[#allocation6 + $0xb90] sm:$0xff]
    %v2512 = vld [vmem:[#allocation6 + $0xb98] sm:$0xff]
    %v2513 = vld [vmem:[#allocation6 + $0xba0] sm:$0xff]
    %v2514 = vld [vmem:[#allocation6 + $0xba8] sm:$0xff]
    %v2515 = vld [vmem:[#allocation6 + $0xbb0] sm:$0xff]
    %v2516 = vld [vmem:[#allocation6 + $0xbb8] sm:$0xff]
    %v2517 = vld [vmem:[#allocation6 + $0xbc0] sm:$0xff]
    %v2518 = vld [vmem:[#allocation6 + $0xbc8] sm:$0xff]
    %v2519 = vld [vmem:[#allocation6 + $0xbd0] sm:$0xff]
    %v2520 = vld [vmem:[#allocation6 + $0xbd8] sm:$0xff]
    %v2521 = vld [vmem:[#allocation6 + $0xbe0] sm:$0xff]
    %v2522 = vld [vmem:[#allocation6 + $0xbe8] sm:$0xff]
    %v2523 = vld [vmem:[#allocation6 + $0xbf0] sm:$0xff]
    %v2524 = vld [vmem:[#allocation6 + $0xbf8] sm:$0xff]
    %v2525 = vld [vmem:[#allocation6 + $0xc00] sm:$0xff]
    %v2526 = vld [vmem:[#allocation6 + $0xc08] sm:$0xff]
    %v2527 = vld [vmem:[#allocation6 + $0xc10] sm:$0xff]
    %v2528 = vld [vmem:[#allocation6 + $0xc18] sm:$0xff]
    %v2529 = vld [vmem:[#allocation6 + $0xc20] sm:$0xff]
    %v2530 = vld [vmem:[#allocation6 + $0xc28] sm:$0xff]
    %v2531 = vld [vmem:[#allocation6 + $0xc30] sm:$0xff]
    %v2532 = vld [vmem:[#allocation6 + $0xc38] sm:$0xff]
    %v2533 = vld [vmem:[#allocation6 + $0xc40] sm:$0xff]
    %v2534 = vld [vmem:[#allocation6 + $0xc48] sm:$0xff]
    %v2535 = vld [vmem:[#allocation6 + $0xc50] sm:$0xff]
    %v2536 = vld [vmem:[#allocation6 + $0xc58] sm:$0xff]
    %v2537 = vld [vmem:[#allocation6 + $0xc60] sm:$0xff]
    %v2538 = vld [vmem:[#allocation6 + $0xc68] sm:$0xff]
    %v2539 = vld [vmem:[#allocation6 + $0xc70] sm:$0xff]
    %v2540 = vld [vmem:[#allocation6 + $0xc78] sm:$0xff]
    %v2541 = vld [vmem:[#allocation6 + $0xc80] sm:$0xff]
    %v2542 = vld [vmem:[#allocation6 + $0xc88] sm:$0xff]
    %v2543 = vld [vmem:[#allocation6 + $0xc90] sm:$0xff]
    %v2544 = vld [vmem:[#allocation6 + $0xc98] sm:$0xff]
    %v2545 = vld [vmem:[#allocation6 + $0xca0] sm:$0xff]
    %v2546 = vld [vmem:[#allocation6 + $0xca8] sm:$0xff]
    %v2547 = vld [vmem:[#allocation6 + $0xcb0] sm:$0xff]
    %v2548 = vld [vmem:[#allocation6 + $0xcb8] sm:$0xff]
    %v2549 = vld [vmem:[#allocation6 + $0xcc0] sm:$0xff]
    %v2550 = vld [vmem:[#allocation6 + $0xcc8] sm:$0xff]
    %v2551 = vld [vmem:[#allocation6 + $0xcd0] sm:$0xff]
    %v2552 = vld [vmem:[#allocation6 + $0xcd8] sm:$0xff]
    %v2553 = vld [vmem:[#allocation6 + $0xce0] sm:$0xff]
    %v2554 = vld [vmem:[#allocation6 + $0xce8] sm:$0xff]
    %v2555 = vld [vmem:[#allocation6 + $0xcf0] sm:$0xff]
    %v2556 = vld [vmem:[#allocation6 + $0xcf8] sm:$0xff]
    %v2557 = vld [vmem:[#allocation6 + $0xd00] sm:$0xff]
    %v2558 = vld [vmem:[#allocation6 + $0xd08] sm:$0xff]
    %v2559 = vld [vmem:[#allocation6 + $0xd10] sm:$0xff]
    %v2560 = vld [vmem:[#allocation6 + $0xd18] sm:$0xff]
    %v2561 = vld [vmem:[#allocation6 + $0xd20] sm:$0xff]
    %v2562 = vld [vmem:[#allocation6 + $0xd28] sm:$0xff]
    %v2563 = vld [vmem:[#allocation6 + $0xd30] sm:$0xff]
    %v2564 = vld [vmem:[#allocation6 + $0xd38] sm:$0xff]
    %v2565 = vld [vmem:[#allocation6 + $0xd40] sm:$0xff]
    %v2566 = vld [vmem:[#allocation6 + $0xd48] sm:$0xff]
    %v2567 = vld [vmem:[#allocation6 + $0xd50] sm:$0xff]
    %v2568 = vld [vmem:[#allocation6 + $0xd58] sm:$0xff]
    %v2569 = vld [vmem:[#allocation6 + $0xd60] sm:$0xff]
    %v2570 = vld [vmem:[#allocation6 + $0xd68] sm:$0xff]
    %v2571 = vld [vmem:[#allocation6 + $0xd70] sm:$0xff]
    %v2572 = vld [vmem:[#allocation6 + $0xd78] sm:$0xff]
    %v2573 = vld [vmem:[#allocation6 + $0xd80] sm:$0xff]
    %v2574 = vld [vmem:[#allocation6 + $0xd88] sm:$0xff]
    %v2575 = vld [vmem:[#allocation6 + $0xd90] sm:$0xff]
    %v2576 = vld [vmem:[#allocation6 + $0xd98] sm:$0xff]
    %v2577 = vld [vmem:[#allocation6 + $0xda0] sm:$0xff]
    %v2578 = vld [vmem:[#allocation6 + $0xda8] sm:$0xff]
    %v2579 = vld [vmem:[#allocation6 + $0xdb0] sm:$0xff]
    %v2580 = vld [vmem:[#allocation6 + $0xdb8] sm:$0xff]
    %v2581 = vld [vmem:[#allocation6 + $0xdc0] sm:$0xff]
    %v2582 = vld [vmem:[#allocation6 + $0xdc8] sm:$0xff]
    %v2583 = vld [vmem:[#allocation6 + $0xdd0] sm:$0xff]
    %v2584 = vld [vmem:[#allocation6 + $0xdd8] sm:$0xff]
    %v2585 = vld [vmem:[#allocation6 + $0xde0] sm:$0xff]
    %v2586 = vld [vmem:[#allocation6 + $0xde8] sm:$0xff]
    %v2587 = vld [vmem:[#allocation6 + $0xdf0] sm:$0xff]
    %v2588 = vld [vmem:[#allocation6 + $0xdf8] sm:$0xff]
    %v2589 = vld [vmem:[#allocation6 + $0xe00] sm:$0xff]
    %v2590 = vld [vmem:[#allocation6 + $0xe08] sm:$0xff]
    %v2591 = vld [vmem:[#allocation6 + $0xe10] sm:$0xff]
    %v2592 = vld [vmem:[#allocation6 + $0xe18] sm:$0xff]
    %v2593 = vld [vmem:[#allocation6 + $0xe20] sm:$0xff]
    %v2594 = vld [vmem:[#allocation6 + $0xe28] sm:$0xff]
    %v2595 = vld [vmem:[#allocation6 + $0xe30] sm:$0xff]
    %v2596 = vld [vmem:[#allocation6 + $0xe38] sm:$0xff]
    %v2597 = vld [vmem:[#allocation6 + $0xe40] sm:$0xff]
    %v2598 = vld [vmem:[#allocation6 + $0xe48] sm:$0xff]
    %v2599 = vld [vmem:[#allocation6 + $0xe50] sm:$0xff]
    %v2600 = vld [vmem:[#allocation6 + $0xe58] sm:$0xff]
    %v2601 = vld [vmem:[#allocation6 + $0xe60] sm:$0xff]
    %v2602 = vld [vmem:[#allocation6 + $0xe68] sm:$0xff]
    %v2603 = vld [vmem:[#allocation6 + $0xe70] sm:$0xff]
    %v2604 = vld [vmem:[#allocation6 + $0xe78] sm:$0xff]
    %v2605 = vld [vmem:[#allocation6 + $0xe80] sm:$0xff]
    %v2606 = vld [vmem:[#allocation6 + $0xe88] sm:$0xff]
    %v2607 = vld [vmem:[#allocation6 + $0xe90] sm:$0xff]
    %v2608 = vld [vmem:[#allocation6 + $0xe98] sm:$0xff]
    %v2609 = vld [vmem:[#allocation6 + $0xea0] sm:$0xff]
    %v2610 = vld [vmem:[#allocation6 + $0xea8] sm:$0xff]
    %v2611 = vld [vmem:[#allocation6 + $0xeb0] sm:$0xff]
    %v2612 = vld [vmem:[#allocation6 + $0xeb8] sm:$0xff]
    %v2613 = vld [vmem:[#allocation6 + $0xec0] sm:$0xff]
    %v2614 = vld [vmem:[#allocation6 + $0xec8] sm:$0xff]
    %v2615 = vld [vmem:[#allocation6 + $0xed0] sm:$0xff]
    %v2616 = vld [vmem:[#allocation6 + $0xed8] sm:$0xff]
    %v2617 = vld [vmem:[#allocation6 + $0xee0] sm:$0xff]
    %v2618 = vld [vmem:[#allocation6 + $0xee8] sm:$0xff]
    %v2619 = vld [vmem:[#allocation6 + $0xef0] sm:$0xff]
    %v2620 = vld [vmem:[#allocation6 + $0xef8] sm:$0xff]
    %v2621 = vld [vmem:[#allocation6 + $0xf00] sm:$0xff]
    %v2622 = vld [vmem:[#allocation6 + $0xf08] sm:$0xff]
    %v2623 = vld [vmem:[#allocation6 + $0xf10] sm:$0xff]
    %v2624 = vld [vmem:[#allocation6 + $0xf18] sm:$0xff]
    %v2625 = vld [vmem:[#allocation6 + $0xf20] sm:$0xff]
    %v2626 = vld [vmem:[#allocation6 + $0xf28] sm:$0xff]
    %v2627 = vld [vmem:[#allocation6 + $0xf30] sm:$0xff]
    %v2628 = vld [vmem:[#allocation6 + $0xf38] sm:$0xff]
    %v2629 = vld [vmem:[#allocation6 + $0xf40] sm:$0xff]
    %v2630 = vld [vmem:[#allocation6 + $0xf48] sm:$0xff]
    %v2631 = vld [vmem:[#allocation6 + $0xf50] sm:$0xff]
    %v2632 = vld [vmem:[#allocation6 + $0xf58] sm:$0xff]
    %v2633 = vld [vmem:[#allocation6 + $0xf60] sm:$0xff]
    %v2634 = vld [vmem:[#allocation6 + $0xf68] sm:$0xff]
    %v2635 = vld [vmem:[#allocation6 + $0xf70] sm:$0xff]
    %v2636 = vld [vmem:[#allocation6 + $0xf78] sm:$0xff]
    %v2637 = vld [vmem:[#allocation6 + $0xf80] sm:$0xff]
    %v2638 = vld [vmem:[#allocation6 + $0xf88] sm:$0xff]
    %v2639 = vld [vmem:[#allocation6 + $0xf90] sm:$0xff]
    %v2640 = vld [vmem:[#allocation6 + $0xf98] sm:$0xff]
    %v2641 = vld [vmem:[#allocation6 + $0xfa0] sm:$0xff]
    %v2642 = vld [vmem:[#allocation6 + $0xfa8] sm:$0xff]
    %v2643 = vld [vmem:[#allocation6 + $0xfb0] sm:$0xff]
    %v2644 = vld [vmem:[#allocation6 + $0xfb8] sm:$0xff]
    %v2645 = vld [vmem:[#allocation6 + $0xfc0] sm:$0xff]
    %v2646 = vld [vmem:[#allocation6 + $0xfc8] sm:$0xff]
    %v2647 = vld [vmem:[#allocation6 + $0xfd0] sm:$0xff]
    %v2648 = vld [vmem:[#allocation6 + $0xfd8] sm:$0xff]
    %v2649 = vld [vmem:[#allocation6 + $0xfe0] sm:$0xff]
    %v2650 = vld [vmem:[#allocation6 + $0xfe8] sm:$0xff]
    %v2651 = vld [vmem:[#allocation6 + $0xff0] sm:$0xff]
    %v2652 = vld [vmem:[#allocation6 + $0xff8] sm:$0xff]
    %v2653 = vld [vmem:[#allocation7] sm:$0xf]
    %v3166 = vunpack.c.l.b16 %v2141
    %v3167 = vunpack.c.h.b16 %v2141
    %v3168 = vunpack.c.l.b16 %v2142
    %v3169 = vunpack.c.h.b16 %v2142
    %v3170 = vunpack.c.l.b16 %v2143
    %v3171 = vunpack.c.h.b16 %v2143
    %v3172 = vunpack.c.l.b16 %v2144
    %v3173 = vunpack.c.h.b16 %v2144
    %v3174 = vunpack.c.l.b16 %v2145
    %v3175 = vunpack.c.h.b16 %v2145
    %v3176 = vunpack.c.l.b16 %v2146
    %v3177 = vunpack.c.h.b16 %v2146
    %v3178 = vunpack.c.l.b16 %v2147
    %v3179 = vunpack.c.h.b16 %v2147
    %v3180 = vunpack.c.l.b16 %v2148
    %v3181 = vunpack.c.h.b16 %v2148
    %v3182 = vunpack.c.l.b16 %v2149
    %v3183 = vunpack.c.h.b16 %v2149
    %v3184 = vunpack.c.l.b16 %v2150
    %v3185 = vunpack.c.h.b16 %v2150
    %v3186 = vunpack.c.l.b16 %v2151
    %v3187 = vunpack.c.h.b16 %v2151
    %v3188 = vunpack.c.l.b16 %v2152
    %v3189 = vunpack.c.h.b16 %v2152
    %v3190 = vunpack.c.l.b16 %v2153
    %v3191 = vunpack.c.h.b16 %v2153
    %v3192 = vunpack.c.l.b16 %v2154
    %v3193 = vunpack.c.h.b16 %v2154
    %v3194 = vunpack.c.l.b16 %v2155
    %v3195 = vunpack.c.h.b16 %v2155
    %v3196 = vunpack.c.l.b16 %v2156
    %v3197 = vunpack.c.h.b16 %v2156
    %v3198 = vunpack.c.l.b16 %v2157
    %v3199 = vunpack.c.h.b16 %v2157
    %v3200 = vunpack.c.l.b16 %v2158
    %v3201 = vunpack.c.h.b16 %v2158
    %v3202 = vunpack.c.l.b16 %v2159
    %v3203 = vunpack.c.h.b16 %v2159
    %v3204 = vunpack.c.l.b16 %v2160
    %v3205 = vunpack.c.h.b16 %v2160
    %v3206 = vunpack.c.l.b16 %v2161
    %v3207 = vunpack.c.h.b16 %v2161
    %v3208 = vunpack.c.l.b16 %v2162
    %v3209 = vunpack.c.h.b16 %v2162
    %v3210 = vunpack.c.l.b16 %v2163
    %v3211 = vunpack.c.h.b16 %v2163
    %v3212 = vunpack.c.l.b16 %v2164
    %v3213 = vunpack.c.h.b16 %v2164
    %v3214 = vunpack.c.l.b16 %v2165
    %v3215 = vunpack.c.h.b16 %v2165
    %v3216 = vunpack.c.l.b16 %v2166
    %v3217 = vunpack.c.h.b16 %v2166
    %v3218 = vunpack.c.l.b16 %v2167
    %v3219 = vunpack.c.h.b16 %v2167
    %v3220 = vunpack.c.l.b16 %v2168
    %v3221 = vunpack.c.h.b16 %v2168
    %v3222 = vunpack.c.l.b16 %v2169
    %v3223 = vunpack.c.h.b16 %v2169
    %v3224 = vunpack.c.l.b16 %v2170
    %v3225 = vunpack.c.h.b16 %v2170
    %v3226 = vunpack.c.l.b16 %v2171
    %v3227 = vunpack.c.h.b16 %v2171
    %v3228 = vunpack.c.l.b16 %v2172
    %v3229 = vunpack.c.h.b16 %v2172
    %v3230 = vunpack.c.l.b16 %v2173
    %v3231 = vunpack.c.h.b16 %v2173
    %v3232 = vunpack.c.l.b16 %v2174
    %v3233 = vunpack.c.h.b16 %v2174
    %v3234 = vunpack.c.l.b16 %v2175
    %v3235 = vunpack.c.h.b16 %v2175
    %v3236 = vunpack.c.l.b16 %v2176
    %v3237 = vunpack.c.h.b16 %v2176
    %v3238 = vunpack.c.l.b16 %v2177
    %v3239 = vunpack.c.h.b16 %v2177
    %v3240 = vunpack.c.l.b16 %v2178
    %v3241 = vunpack.c.h.b16 %v2178
    %v3242 = vunpack.c.l.b16 %v2179
    %v3243 = vunpack.c.h.b16 %v2179
    %v3244 = vunpack.c.l.b16 %v2180
    %v3245 = vunpack.c.h.b16 %v2180
    %v3246 = vunpack.c.l.b16 %v2181
    %v3247 = vunpack.c.h.b16 %v2181
    %v3248 = vunpack.c.l.b16 %v2182
    %v3249 = vunpack.c.h.b16 %v2182
    %v3250 = vunpack.c.l.b16 %v2183
    %v3251 = vunpack.c.h.b16 %v2183
    %v3252 = vunpack.c.l.b16 %v2184
    %v3253 = vunpack.c.h.b16 %v2184
    %v3254 = vunpack.c.l.b16 %v2185
    %v3255 = vunpack.c.h.b16 %v2185
    %v3256 = vunpack.c.l.b16 %v2186
    %v3257 = vunpack.c.h.b16 %v2186
    %v3258 = vunpack.c.l.b16 %v2187
    %v3259 = vunpack.c.h.b16 %v2187
    %v3260 = vunpack.c.l.b16 %v2188
    %v3261 = vunpack.c.h.b16 %v2188
    %v3262 = vunpack.c.l.b16 %v2189
    %v3263 = vunpack.c.h.b16 %v2189
    %v3264 = vunpack.c.l.b16 %v2190
    %v3265 = vunpack.c.h.b16 %v2190
    %v3266 = vunpack.c.l.b16 %v2191
    %v3267 = vunpack.c.h.b16 %v2191
    %v3268 = vunpack.c.l.b16 %v2192
    %v3269 = vunpack.c.h.b16 %v2192
    %v3270 = vunpack.c.l.b16 %v2193
    %v3271 = vunpack.c.h.b16 %v2193
    %v3272 = vunpack.c.l.b16 %v2194
    %v3273 = vunpack.c.h.b16 %v2194
    %v3274 = vunpack.c.l.b16 %v2195
    %v3275 = vunpack.c.h.b16 %v2195
    %v3276 = vunpack.c.l.b16 %v2196
    %v3277 = vunpack.c.h.b16 %v2196
    %v3278 = vunpack.c.l.b16 %v2197
    %v3279 = vunpack.c.h.b16 %v2197
    %v3280 = vunpack.c.l.b16 %v2198
    %v3281 = vunpack.c.h.b16 %v2198
    %v3282 = vunpack.c.l.b16 %v2199
    %v3283 = vunpack.c.h.b16 %v2199
    %v3284 = vunpack.c.l.b16 %v2200
    %v3285 = vunpack.c.h.b16 %v2200
    %v3286 = vunpack.c.l.b16 %v2201
    %v3287 = vunpack.c.h.b16 %v2201
    %v3288 = vunpack.c.l.b16 %v2202
    %v3289 = vunpack.c.h.b16 %v2202
    %v3290 = vunpack.c.l.b16 %v2203
    %v3291 = vunpack.c.h.b16 %v2203
    %v3292 = vunpack.c.l.b16 %v2204
    %v3293 = vunpack.c.h.b16 %v2204
    %v3294 = vunpack.c.l.b16 %v2205
    %v3295 = vunpack.c.h.b16 %v2205
    %v3296 = vunpack.c.l.b16 %v2206
    %v3297 = vunpack.c.h.b16 %v2206
    %v3298 = vunpack.c.l.b16 %v2207
    %v3299 = vunpack.c.h.b16 %v2207
    %v3300 = vunpack.c.l.b16 %v2208
    %v3301 = vunpack.c.h.b16 %v2208
    %v3302 = vunpack.c.l.b16 %v2209
    %v3303 = vunpack.c.h.b16 %v2209
    %v3304 = vunpack.c.l.b16 %v2210
    %v3305 = vunpack.c.h.b16 %v2210
    %v3306 = vunpack.c.l.b16 %v2211
    %v3307 = vunpack.c.h.b16 %v2211
    %v3308 = vunpack.c.l.b16 %v2212
    %v3309 = vunpack.c.h.b16 %v2212
    %v3310 = vunpack.c.l.b16 %v2213
    %v3311 = vunpack.c.h.b16 %v2213
    %v3312 = vunpack.c.l.b16 %v2214
    %v3313 = vunpack.c.h.b16 %v2214
    %v3314 = vunpack.c.l.b16 %v2215
    %v3315 = vunpack.c.h.b16 %v2215
    %v3316 = vunpack.c.l.b16 %v2216
    %v3317 = vunpack.c.h.b16 %v2216
    %v3318 = vunpack.c.l.b16 %v2217
    %v3319 = vunpack.c.h.b16 %v2217
    %v3320 = vunpack.c.l.b16 %v2218
    %v3321 = vunpack.c.h.b16 %v2218
    %v3322 = vunpack.c.l.b16 %v2219
    %v3323 = vunpack.c.h.b16 %v2219
    %v3324 = vunpack.c.l.b16 %v2220
    %v3325 = vunpack.c.h.b16 %v2220
    %v3326 = vunpack.c.l.b16 %v2221
    %v3327 = vunpack.c.h.b16 %v2221
    %v3328 = vunpack.c.l.b16 %v2222
    %v3329 = vunpack.c.h.b16 %v2222
    %v3330 = vunpack.c.l.b16 %v2223
    %v3331 = vunpack.c.h.b16 %v2223
    %v3332 = vunpack.c.l.b16 %v2224
    %v3333 = vunpack.c.h.b16 %v2224
    %v3334 = vunpack.c.l.b16 %v2225
    %v3335 = vunpack.c.h.b16 %v2225
    %v3336 = vunpack.c.l.b16 %v2226
    %v3337 = vunpack.c.h.b16 %v2226
    %v3338 = vunpack.c.l.b16 %v2227
    %v3339 = vunpack.c.h.b16 %v2227
    %v3340 = vunpack.c.l.b16 %v2228
    %v3341 = vunpack.c.h.b16 %v2228
    %v3342 = vunpack.c.l.b16 %v2229
    %v3343 = vunpack.c.h.b16 %v2229
    %v3344 = vunpack.c.l.b16 %v2230
    %v3345 = vunpack.c.h.b16 %v2230
    %v3346 = vunpack.c.l.b16 %v2231
    %v3347 = vunpack.c.h.b16 %v2231
    %v3348 = vunpack.c.l.b16 %v2232
    %v3349 = vunpack.c.h.b16 %v2232
    %v3350 = vunpack.c.l.b16 %v2233
    %v3351 = vunpack.c.h.b16 %v2233
    %v3352 = vunpack.c.l.b16 %v2234
    %v3353 = vunpack.c.h.b16 %v2234
    %v3354 = vunpack.c.l.b16 %v2235
    %v3355 = vunpack.c.h.b16 %v2235
    %v3356 = vunpack.c.l.b16 %v2236
    %v3357 = vunpack.c.h.b16 %v2236
    %v3358 = vunpack.c.l.b16 %v2237
    %v3359 = vunpack.c.h.b16 %v2237
    %v3360 = vunpack.c.l.b16 %v2238
    %v3361 = vunpack.c.h.b16 %v2238
    %v3362 = vunpack.c.l.b16 %v2239
    %v3363 = vunpack.c.h.b16 %v2239
    %v3364 = vunpack.c.l.b16 %v2240
    %v3365 = vunpack.c.h.b16 %v2240
    %v3366 = vunpack.c.l.b16 %v2241
    %v3367 = vunpack.c.h.b16 %v2241
    %v3368 = vunpack.c.l.b16 %v2242
    %v3369 = vunpack.c.h.b16 %v2242
    %v3370 = vunpack.c.l.b16 %v2243
    %v3371 = vunpack.c.h.b16 %v2243
    %v3372 = vunpack.c.l.b16 %v2244
    %v3373 = vunpack.c.h.b16 %v2244
    %v3374 = vunpack.c.l.b16 %v2245
    %v3375 = vunpack.c.h.b16 %v2245
    %v3376 = vunpack.c.l.b16 %v2246
    %v3377 = vunpack.c.h.b16 %v2246
    %v3378 = vunpack.c.l.b16 %v2247
    %v3379 = vunpack.c.h.b16 %v2247
    %v3380 = vunpack.c.l.b16 %v2248
    %v3381 = vunpack.c.h.b16 %v2248
    %v3382 = vunpack.c.l.b16 %v2249
    %v3383 = vunpack.c.h.b16 %v2249
    %v3384 = vunpack.c.l.b16 %v2250
    %v3385 = vunpack.c.h.b16 %v2250
    %v3386 = vunpack.c.l.b16 %v2251
    %v3387 = vunpack.c.h.b16 %v2251
    %v3388 = vunpack.c.l.b16 %v2252
    %v3389 = vunpack.c.h.b16 %v2252
    %v3390 = vunpack.c.l.b16 %v2253
    %v3391 = vunpack.c.h.b16 %v2253
    %v3392 = vunpack.c.l.b16 %v2254
    %v3393 = vunpack.c.h.b16 %v2254
    %v3394 = vunpack.c.l.b16 %v2255
    %v3395 = vunpack.c.h.b16 %v2255
    %v3396 = vunpack.c.l.b16 %v2256
    %v3397 = vunpack.c.h.b16 %v2256
    %v3398 = vunpack.c.l.b16 %v2257
    %v3399 = vunpack.c.h.b16 %v2257
    %v3400 = vunpack.c.l.b16 %v2258
    %v3401 = vunpack.c.h.b16 %v2258
    %v3402 = vunpack.c.l.b16 %v2259
    %v3403 = vunpack.c.h.b16 %v2259
    %v3404 = vunpack.c.l.b16 %v2260
    %v3405 = vunpack.c.h.b16 %v2260
    %v3406 = vunpack.c.l.b16 %v2261
    %v3407 = vunpack.c.h.b16 %v2261
    %v3408 = vunpack.c.l.b16 %v2262
    %v3409 = vunpack.c.h.b16 %v2262
    %v3410 = vunpack.c.l.b16 %v2263
    %v3411 = vunpack.c.h.b16 %v2263
    %v3412 = vunpack.c.l.b16 %v2264
    %v3413 = vunpack.c.h.b16 %v2264
    %v3414 = vunpack.c.l.b16 %v2265
    %v3415 = vunpack.c.h.b16 %v2265
    %v3416 = vunpack.c.l.b16 %v2266
    %v3417 = vunpack.c.h.b16 %v2266
    %v3418 = vunpack.c.l.b16 %v2267
    %v3419 = vunpack.c.h.b16 %v2267
    %v3420 = vunpack.c.l.b16 %v2268
    %v3421 = vunpack.c.h.b16 %v2268
    %v3422 = vunpack.c.l.b16 %v2269
    %v3423 = vunpack.c.h.b16 %v2269
    %v3424 = vunpack.c.l.b16 %v2270
    %v3425 = vunpack.c.h.b16 %v2270
    %v3426 = vunpack.c.l.b16 %v2271
    %v3427 = vunpack.c.h.b16 %v2271
    %v3428 = vunpack.c.l.b16 %v2272
    %v3429 = vunpack.c.h.b16 %v2272
    %v3430 = vunpack.c.l.b16 %v2273
    %v3431 = vunpack.c.h.b16 %v2273
    %v3432 = vunpack.c.l.b16 %v2274
    %v3433 = vunpack.c.h.b16 %v2274
    %v3434 = vunpack.c.l.b16 %v2275
    %v3435 = vunpack.c.h.b16 %v2275
    %v3436 = vunpack.c.l.b16 %v2276
    %v3437 = vunpack.c.h.b16 %v2276
    %v3438 = vunpack.c.l.b16 %v2277
    %v3439 = vunpack.c.h.b16 %v2277
    %v3440 = vunpack.c.l.b16 %v2278
    %v3441 = vunpack.c.h.b16 %v2278
    %v3442 = vunpack.c.l.b16 %v2279
    %v3443 = vunpack.c.h.b16 %v2279
    %v3444 = vunpack.c.l.b16 %v2280
    %v3445 = vunpack.c.h.b16 %v2280
    %v3446 = vunpack.c.l.b16 %v2281
    %v3447 = vunpack.c.h.b16 %v2281
    %v3448 = vunpack.c.l.b16 %v2282
    %v3449 = vunpack.c.h.b16 %v2282
    %v3450 = vunpack.c.l.b16 %v2283
    %v3451 = vunpack.c.h.b16 %v2283
    %v3452 = vunpack.c.l.b16 %v2284
    %v3453 = vunpack.c.h.b16 %v2284
    %v3454 = vunpack.c.l.b16 %v2285
    %v3455 = vunpack.c.h.b16 %v2285
    %v3456 = vunpack.c.l.b16 %v2286
    %v3457 = vunpack.c.h.b16 %v2286
    %v3458 = vunpack.c.l.b16 %v2287
    %v3459 = vunpack.c.h.b16 %v2287
    %v3460 = vunpack.c.l.b16 %v2288
    %v3461 = vunpack.c.h.b16 %v2288
    %v3462 = vunpack.c.l.b16 %v2289
    %v3463 = vunpack.c.h.b16 %v2289
    %v3464 = vunpack.c.l.b16 %v2290
    %v3465 = vunpack.c.h.b16 %v2290
    %v3466 = vunpack.c.l.b16 %v2291
    %v3467 = vunpack.c.h.b16 %v2291
    %v3468 = vunpack.c.l.b16 %v2292
    %v3469 = vunpack.c.h.b16 %v2292
    %v3470 = vunpack.c.l.b16 %v2293
    %v3471 = vunpack.c.h.b16 %v2293
    %v3472 = vunpack.c.l.b16 %v2294
    %v3473 = vunpack.c.h.b16 %v2294
    %v3474 = vunpack.c.l.b16 %v2295
    %v3475 = vunpack.c.h.b16 %v2295
    %v3476 = vunpack.c.l.b16 %v2296
    %v3477 = vunpack.c.h.b16 %v2296
    %v3478 = vunpack.c.l.b16 %v2297
    %v3479 = vunpack.c.h.b16 %v2297
    %v3480 = vunpack.c.l.b16 %v2298
    %v3481 = vunpack.c.h.b16 %v2298
    %v3482 = vunpack.c.l.b16 %v2299
    %v3483 = vunpack.c.h.b16 %v2299
    %v3484 = vunpack.c.l.b16 %v2300
    %v3485 = vunpack.c.h.b16 %v2300
    %v3486 = vunpack.c.l.b16 %v2301
    %v3487 = vunpack.c.h.b16 %v2301
    %v3488 = vunpack.c.l.b16 %v2302
    %v3489 = vunpack.c.h.b16 %v2302
    %v3490 = vunpack.c.l.b16 %v2303
    %v3491 = vunpack.c.h.b16 %v2303
    %v3492 = vunpack.c.l.b16 %v2304
    %v3493 = vunpack.c.h.b16 %v2304
    %v3494 = vunpack.c.l.b16 %v2305
    %v3495 = vunpack.c.h.b16 %v2305
    %v3496 = vunpack.c.l.b16 %v2306
    %v3497 = vunpack.c.h.b16 %v2306
    %v3498 = vunpack.c.l.b16 %v2307
    %v3499 = vunpack.c.h.b16 %v2307
    %v3500 = vunpack.c.l.b16 %v2308
    %v3501 = vunpack.c.h.b16 %v2308
    %v3502 = vunpack.c.l.b16 %v2309
    %v3503 = vunpack.c.h.b16 %v2309
    %v3504 = vunpack.c.l.b16 %v2310
    %v3505 = vunpack.c.h.b16 %v2310
    %v3506 = vunpack.c.l.b16 %v2311
    %v3507 = vunpack.c.h.b16 %v2311
    %v3508 = vunpack.c.l.b16 %v2312
    %v3509 = vunpack.c.h.b16 %v2312
    %v3510 = vunpack.c.l.b16 %v2313
    %v3511 = vunpack.c.h.b16 %v2313
    %v3512 = vunpack.c.l.b16 %v2314
    %v3513 = vunpack.c.h.b16 %v2314
    %v3514 = vunpack.c.l.b16 %v2315
    %v3515 = vunpack.c.h.b16 %v2315
    %v3516 = vunpack.c.l.b16 %v2316
    %v3517 = vunpack.c.h.b16 %v2316
    %v3518 = vunpack.c.l.b16 %v2317
    %v3519 = vunpack.c.h.b16 %v2317
    %v3520 = vunpack.c.l.b16 %v2318
    %v3521 = vunpack.c.h.b16 %v2318
    %v3522 = vunpack.c.l.b16 %v2319
    %v3523 = vunpack.c.h.b16 %v2319
    %v3524 = vunpack.c.l.b16 %v2320
    %v3525 = vunpack.c.h.b16 %v2320
    %v3526 = vunpack.c.l.b16 %v2321
    %v3527 = vunpack.c.h.b16 %v2321
    %v3528 = vunpack.c.l.b16 %v2322
    %v3529 = vunpack.c.h.b16 %v2322
    %v3530 = vunpack.c.l.b16 %v2323
    %v3531 = vunpack.c.h.b16 %v2323
    %v3532 = vunpack.c.l.b16 %v2324
    %v3533 = vunpack.c.h.b16 %v2324
    %v3534 = vunpack.c.l.b16 %v2325
    %v3535 = vunpack.c.h.b16 %v2325
    %v3536 = vunpack.c.l.b16 %v2326
    %v3537 = vunpack.c.h.b16 %v2326
    %v3538 = vunpack.c.l.b16 %v2327
    %v3539 = vunpack.c.h.b16 %v2327
    %v3540 = vunpack.c.l.b16 %v2328
    %v3541 = vunpack.c.h.b16 %v2328
    %v3542 = vunpack.c.l.b16 %v2329
    %v3543 = vunpack.c.h.b16 %v2329
    %v3544 = vunpack.c.l.b16 %v2330
    %v3545 = vunpack.c.h.b16 %v2330
    %v3546 = vunpack.c.l.b16 %v2331
    %v3547 = vunpack.c.h.b16 %v2331
    %v3548 = vunpack.c.l.b16 %v2332
    %v3549 = vunpack.c.h.b16 %v2332
    %v3550 = vunpack.c.l.b16 %v2333
    %v3551 = vunpack.c.h.b16 %v2333
    %v3552 = vunpack.c.l.b16 %v2334
    %v3553 = vunpack.c.h.b16 %v2334
    %v3554 = vunpack.c.l.b16 %v2335
    %v3555 = vunpack.c.h.b16 %v2335
    %v3556 = vunpack.c.l.b16 %v2336
    %v3557 = vunpack.c.h.b16 %v2336
    %v3558 = vunpack.c.l.b16 %v2337
    %v3559 = vunpack.c.h.b16 %v2337
    %v3560 = vunpack.c.l.b16 %v2338
    %v3561 = vunpack.c.h.b16 %v2338
    %v3562 = vunpack.c.l.b16 %v2339
    %v3563 = vunpack.c.h.b16 %v2339
    %v3564 = vunpack.c.l.b16 %v2340
    %v3565 = vunpack.c.h.b16 %v2340
    %v3566 = vunpack.c.l.b16 %v2341
    %v3567 = vunpack.c.h.b16 %v2341
    %v3568 = vunpack.c.l.b16 %v2342
    %v3569 = vunpack.c.h.b16 %v2342
    %v3570 = vunpack.c.l.b16 %v2343
    %v3571 = vunpack.c.h.b16 %v2343
    %v3572 = vunpack.c.l.b16 %v2344
    %v3573 = vunpack.c.h.b16 %v2344
    %v3574 = vunpack.c.l.b16 %v2345
    %v3575 = vunpack.c.h.b16 %v2345
    %v3576 = vunpack.c.l.b16 %v2346
    %v3577 = vunpack.c.h.b16 %v2346
    %v3578 = vunpack.c.l.b16 %v2347
    %v3579 = vunpack.c.h.b16 %v2347
    %v3580 = vunpack.c.l.b16 %v2348
    %v3581 = vunpack.c.h.b16 %v2348
    %v3582 = vunpack.c.l.b16 %v2349
    %v3583 = vunpack.c.h.b16 %v2349
    %v3584 = vunpack.c.l.b16 %v2350
    %v3585 = vunpack.c.h.b16 %v2350
    %v3586 = vunpack.c.l.b16 %v2351
    %v3587 = vunpack.c.h.b16 %v2351
    %v3588 = vunpack.c.l.b16 %v2352
    %v3589 = vunpack.c.h.b16 %v2352
    %v3590 = vunpack.c.l.b16 %v2353
    %v3591 = vunpack.c.h.b16 %v2353
    %v3592 = vunpack.c.l.b16 %v2354
    %v3593 = vunpack.c.h.b16 %v2354
    %v3594 = vunpack.c.l.b16 %v2355
    %v3595 = vunpack.c.h.b16 %v2355
    %v3596 = vunpack.c.l.b16 %v2356
    %v3597 = vunpack.c.h.b16 %v2356
    %v3598 = vunpack.c.l.b16 %v2357
    %v3599 = vunpack.c.h.b16 %v2357
    %v3600 = vunpack.c.l.b16 %v2358
    %v3601 = vunpack.c.h.b16 %v2358
    %v3602 = vunpack.c.l.b16 %v2359
    %v3603 = vunpack.c.h.b16 %v2359
    %v3604 = vunpack.c.l.b16 %v2360
    %v3605 = vunpack.c.h.b16 %v2360
    %v3606 = vunpack.c.l.b16 %v2361
    %v3607 = vunpack.c.h.b16 %v2361
    %v3608 = vunpack.c.l.b16 %v2362
    %v3609 = vunpack.c.h.b16 %v2362
    %v3610 = vunpack.c.l.b16 %v2363
    %v3611 = vunpack.c.h.b16 %v2363
    %v3612 = vunpack.c.l.b16 %v2364
    %v3613 = vunpack.c.h.b16 %v2364
    %v3614 = vunpack.c.l.b16 %v2365
    %v3615 = vunpack.c.h.b16 %v2365
    %v3616 = vunpack.c.l.b16 %v2366
    %v3617 = vunpack.c.h.b16 %v2366
    %v3618 = vunpack.c.l.b16 %v2367
    %v3619 = vunpack.c.h.b16 %v2367
    %v3620 = vunpack.c.l.b16 %v2368
    %v3621 = vunpack.c.h.b16 %v2368
    %v3622 = vunpack.c.l.b16 %v2369
    %v3623 = vunpack.c.h.b16 %v2369
    %v3624 = vunpack.c.l.b16 %v2370
    %v3625 = vunpack.c.h.b16 %v2370
    %v3626 = vunpack.c.l.b16 %v2371
    %v3627 = vunpack.c.h.b16 %v2371
    %v3628 = vunpack.c.l.b16 %v2372
    %v3629 = vunpack.c.h.b16 %v2372
    %v3630 = vunpack.c.l.b16 %v2373
    %v3631 = vunpack.c.h.b16 %v2373
    %v3632 = vunpack.c.l.b16 %v2374
    %v3633 = vunpack.c.h.b16 %v2374
    %v3634 = vunpack.c.l.b16 %v2375
    %v3635 = vunpack.c.h.b16 %v2375
    %v3636 = vunpack.c.l.b16 %v2376
    %v3637 = vunpack.c.h.b16 %v2376
    %v3638 = vunpack.c.l.b16 %v2377
    %v3639 = vunpack.c.h.b16 %v2377
    %v3640 = vunpack.c.l.b16 %v2378
    %v3641 = vunpack.c.h.b16 %v2378
    %v3642 = vunpack.c.l.b16 %v2379
    %v3643 = vunpack.c.h.b16 %v2379
    %v3644 = vunpack.c.l.b16 %v2380
    %v3645 = vunpack.c.h.b16 %v2380
    %v3646 = vunpack.c.l.b16 %v2381
    %v3647 = vunpack.c.h.b16 %v2381
    %v3648 = vunpack.c.l.b16 %v2382
    %v3649 = vunpack.c.h.b16 %v2382
    %v3650 = vunpack.c.l.b16 %v2383
    %v3651 = vunpack.c.h.b16 %v2383
    %v3652 = vunpack.c.l.b16 %v2384
    %v3653 = vunpack.c.h.b16 %v2384
    %v3654 = vunpack.c.l.b16 %v2385
    %v3655 = vunpack.c.h.b16 %v2385
    %v3656 = vunpack.c.l.b16 %v2386
    %v3657 = vunpack.c.h.b16 %v2386
    %v3658 = vunpack.c.l.b16 %v2387
    %v3659 = vunpack.c.h.b16 %v2387
    %v3660 = vunpack.c.l.b16 %v2388
    %v3661 = vunpack.c.h.b16 %v2388
    %v3662 = vunpack.c.l.b16 %v2389
    %v3663 = vunpack.c.h.b16 %v2389
    %v3664 = vunpack.c.l.b16 %v2390
    %v3665 = vunpack.c.h.b16 %v2390
    %v3666 = vunpack.c.l.b16 %v2391
    %v3667 = vunpack.c.h.b16 %v2391
    %v3668 = vunpack.c.l.b16 %v2392
    %v3669 = vunpack.c.h.b16 %v2392
    %v3670 = vunpack.c.l.b16 %v2393
    %v3671 = vunpack.c.h.b16 %v2393
    %v3672 = vunpack.c.l.b16 %v2394
    %v3673 = vunpack.c.h.b16 %v2394
    %v3674 = vunpack.c.l.b16 %v2395
    %v3675 = vunpack.c.h.b16 %v2395
    %v3676 = vunpack.c.l.b16 %v2396
    %v3677 = vunpack.c.h.b16 %v2396
    %v3678 = vunpack.c.l.b16 %v2397
    %v3679 = vunpack.c.h.b16 %v2397
    %v3680 = vunpack.c.l.b16 %v2398
    %v3681 = vunpack.c.h.b16 %v2398
    %v3682 = vunpack.c.l.b16 %v2399
    %v3683 = vunpack.c.h.b16 %v2399
    %v3684 = vunpack.c.l.b16 %v2400
    %v3685 = vunpack.c.h.b16 %v2400
    %v3686 = vunpack.c.l.b16 %v2401
    %v3687 = vunpack.c.h.b16 %v2401
    %v3688 = vunpack.c.l.b16 %v2402
    %v3689 = vunpack.c.h.b16 %v2402
    %v3690 = vunpack.c.l.b16 %v2403
    %v3691 = vunpack.c.h.b16 %v2403
    %v3692 = vunpack.c.l.b16 %v2404
    %v3693 = vunpack.c.h.b16 %v2404
    %v3694 = vunpack.c.l.b16 %v2405
    %v3695 = vunpack.c.h.b16 %v2405
    %v3696 = vunpack.c.l.b16 %v2406
    %v3697 = vunpack.c.h.b16 %v2406
    %v3698 = vunpack.c.l.b16 %v2407
    %v3699 = vunpack.c.h.b16 %v2407
    %v3700 = vunpack.c.l.b16 %v2408
    %v3701 = vunpack.c.h.b16 %v2408
    %v3702 = vunpack.c.l.b16 %v2409
    %v3703 = vunpack.c.h.b16 %v2409
    %v3704 = vunpack.c.l.b16 %v2410
    %v3705 = vunpack.c.h.b16 %v2410
    %v3706 = vunpack.c.l.b16 %v2411
    %v3707 = vunpack.c.h.b16 %v2411
    %v3708 = vunpack.c.l.b16 %v2412
    %v3709 = vunpack.c.h.b16 %v2412
    %v3710 = vunpack.c.l.b16 %v2413
    %v3711 = vunpack.c.h.b16 %v2413
    %v3712 = vunpack.c.l.b16 %v2414
    %v3713 = vunpack.c.h.b16 %v2414
    %v3714 = vunpack.c.l.b16 %v2415
    %v3715 = vunpack.c.h.b16 %v2415
    %v3716 = vunpack.c.l.b16 %v2416
    %v3717 = vunpack.c.h.b16 %v2416
    %v3718 = vunpack.c.l.b16 %v2417
    %v3719 = vunpack.c.h.b16 %v2417
    %v3720 = vunpack.c.l.b16 %v2418
    %v3721 = vunpack.c.h.b16 %v2418
    %v3722 = vunpack.c.l.b16 %v2419
    %v3723 = vunpack.c.h.b16 %v2419
    %v3724 = vunpack.c.l.b16 %v2420
    %v3725 = vunpack.c.h.b16 %v2420
    %v3726 = vunpack.c.l.b16 %v2421
    %v3727 = vunpack.c.h.b16 %v2421
    %v3728 = vunpack.c.l.b16 %v2422
    %v3729 = vunpack.c.h.b16 %v2422
    %v3730 = vunpack.c.l.b16 %v2423
    %v3731 = vunpack.c.h.b16 %v2423
    %v3732 = vunpack.c.l.b16 %v2424
    %v3733 = vunpack.c.h.b16 %v2424
    %v3734 = vunpack.c.l.b16 %v2425
    %v3735 = vunpack.c.h.b16 %v2425
    %v3736 = vunpack.c.l.b16 %v2426
    %v3737 = vunpack.c.h.b16 %v2426
    %v3738 = vunpack.c.l.b16 %v2427
    %v3739 = vunpack.c.h.b16 %v2427
    %v3740 = vunpack.c.l.b16 %v2428
    %v3741 = vunpack.c.h.b16 %v2428
    %v3742 = vunpack.c.l.b16 %v2429
    %v3743 = vunpack.c.h.b16 %v2429
    %v3744 = vunpack.c.l.b16 %v2430
    %v3745 = vunpack.c.h.b16 %v2430
    %v3746 = vunpack.c.l.b16 %v2431
    %v3747 = vunpack.c.h.b16 %v2431
    %v3748 = vunpack.c.l.b16 %v2432
    %v3749 = vunpack.c.h.b16 %v2432
    %v3750 = vunpack.c.l.b16 %v2433
    %v3751 = vunpack.c.h.b16 %v2433
    %v3752 = vunpack.c.l.b16 %v2434
    %v3753 = vunpack.c.h.b16 %v2434
    %v3754 = vunpack.c.l.b16 %v2435
    %v3755 = vunpack.c.h.b16 %v2435
    %v3756 = vunpack.c.l.b16 %v2436
    %v3757 = vunpack.c.h.b16 %v2436
    %v3758 = vunpack.c.l.b16 %v2437
    %v3759 = vunpack.c.h.b16 %v2437
    %v3760 = vunpack.c.l.b16 %v2438
    %v3761 = vunpack.c.h.b16 %v2438
    %v3762 = vunpack.c.l.b16 %v2439
    %v3763 = vunpack.c.h.b16 %v2439
    %v3764 = vunpack.c.l.b16 %v2440
    %v3765 = vunpack.c.h.b16 %v2440
    %v3766 = vunpack.c.l.b16 %v2441
    %v3767 = vunpack.c.h.b16 %v2441
    %v3768 = vunpack.c.l.b16 %v2442
    %v3769 = vunpack.c.h.b16 %v2442
    %v3770 = vunpack.c.l.b16 %v2443
    %v3771 = vunpack.c.h.b16 %v2443
    %v3772 = vunpack.c.l.b16 %v2444
    %v3773 = vunpack.c.h.b16 %v2444
    %v3774 = vunpack.c.l.b16 %v2445
    %v3775 = vunpack.c.h.b16 %v2445
    %v3776 = vunpack.c.l.b16 %v2446
    %v3777 = vunpack.c.h.b16 %v2446
    %v3778 = vunpack.c.l.b16 %v2447
    %v3779 = vunpack.c.h.b16 %v2447
    %v3780 = vunpack.c.l.b16 %v2448
    %v3781 = vunpack.c.h.b16 %v2448
    %v3782 = vunpack.c.l.b16 %v2449
    %v3783 = vunpack.c.h.b16 %v2449
    %v3784 = vunpack.c.l.b16 %v2450
    %v3785 = vunpack.c.h.b16 %v2450
    %v3786 = vunpack.c.l.b16 %v2451
    %v3787 = vunpack.c.h.b16 %v2451
    %v3788 = vunpack.c.l.b16 %v2452
    %v3789 = vunpack.c.h.b16 %v2452
    %v3790 = vunpack.c.l.b16 %v2453
    %v3791 = vunpack.c.h.b16 %v2453
    %v3792 = vunpack.c.l.b16 %v2454
    %v3793 = vunpack.c.h.b16 %v2454
    %v3794 = vunpack.c.l.b16 %v2455
    %v3795 = vunpack.c.h.b16 %v2455
    %v3796 = vunpack.c.l.b16 %v2456
    %v3797 = vunpack.c.h.b16 %v2456
    %v3798 = vunpack.c.l.b16 %v2457
    %v3799 = vunpack.c.h.b16 %v2457
    %v3800 = vunpack.c.l.b16 %v2458
    %v3801 = vunpack.c.h.b16 %v2458
    %v3802 = vunpack.c.l.b16 %v2459
    %v3803 = vunpack.c.h.b16 %v2459
    %v3804 = vunpack.c.l.b16 %v2460
    %v3805 = vunpack.c.h.b16 %v2460
    %v3806 = vunpack.c.l.b16 %v2461
    %v3807 = vunpack.c.h.b16 %v2461
    %v3808 = vunpack.c.l.b16 %v2462
    %v3809 = vunpack.c.h.b16 %v2462
    %v3810 = vunpack.c.l.b16 %v2463
    %v3811 = vunpack.c.h.b16 %v2463
    %v3812 = vunpack.c.l.b16 %v2464
    %v3813 = vunpack.c.h.b16 %v2464
    %v3814 = vunpack.c.l.b16 %v2465
    %v3815 = vunpack.c.h.b16 %v2465
    %v3816 = vunpack.c.l.b16 %v2466
    %v3817 = vunpack.c.h.b16 %v2466
    %v3818 = vunpack.c.l.b16 %v2467
    %v3819 = vunpack.c.h.b16 %v2467
    %v3820 = vunpack.c.l.b16 %v2468
    %v3821 = vunpack.c.h.b16 %v2468
    %v3822 = vunpack.c.l.b16 %v2469
    %v3823 = vunpack.c.h.b16 %v2469
    %v3824 = vunpack.c.l.b16 %v2470
    %v3825 = vunpack.c.h.b16 %v2470
    %v3826 = vunpack.c.l.b16 %v2471
    %v3827 = vunpack.c.h.b16 %v2471
    %v3828 = vunpack.c.l.b16 %v2472
    %v3829 = vunpack.c.h.b16 %v2472
    %v3830 = vunpack.c.l.b16 %v2473
    %v3831 = vunpack.c.h.b16 %v2473
    %v3832 = vunpack.c.l.b16 %v2474
    %v3833 = vunpack.c.h.b16 %v2474
    %v3834 = vunpack.c.l.b16 %v2475
    %v3835 = vunpack.c.h.b16 %v2475
    %v3836 = vunpack.c.l.b16 %v2476
    %v3837 = vunpack.c.h.b16 %v2476
    %v3838 = vunpack.c.l.b16 %v2477
    %v3839 = vunpack.c.h.b16 %v2477
    %v3840 = vunpack.c.l.b16 %v2478
    %v3841 = vunpack.c.h.b16 %v2478
    %v3842 = vunpack.c.l.b16 %v2479
    %v3843 = vunpack.c.h.b16 %v2479
    %v3844 = vunpack.c.l.b16 %v2480
    %v3845 = vunpack.c.h.b16 %v2480
    %v3846 = vunpack.c.l.b16 %v2481
    %v3847 = vunpack.c.h.b16 %v2481
    %v3848 = vunpack.c.l.b16 %v2482
    %v3849 = vunpack.c.h.b16 %v2482
    %v3850 = vunpack.c.l.b16 %v2483
    %v3851 = vunpack.c.h.b16 %v2483
    %v3852 = vunpack.c.l.b16 %v2484
    %v3853 = vunpack.c.h.b16 %v2484
    %v3854 = vunpack.c.l.b16 %v2485
    %v3855 = vunpack.c.h.b16 %v2485
    %v3856 = vunpack.c.l.b16 %v2486
    %v3857 = vunpack.c.h.b16 %v2486
    %v3858 = vunpack.c.l.b16 %v2487
    %v3859 = vunpack.c.h.b16 %v2487
    %v3860 = vunpack.c.l.b16 %v2488
    %v3861 = vunpack.c.h.b16 %v2488
    %v3862 = vunpack.c.l.b16 %v2489
    %v3863 = vunpack.c.h.b16 %v2489
    %v3864 = vunpack.c.l.b16 %v2490
    %v3865 = vunpack.c.h.b16 %v2490
    %v3866 = vunpack.c.l.b16 %v2491
    %v3867 = vunpack.c.h.b16 %v2491
    %v3868 = vunpack.c.l.b16 %v2492
    %v3869 = vunpack.c.h.b16 %v2492
    %v3870 = vunpack.c.l.b16 %v2493
    %v3871 = vunpack.c.h.b16 %v2493
    %v3872 = vunpack.c.l.b16 %v2494
    %v3873 = vunpack.c.h.b16 %v2494
    %v3874 = vunpack.c.l.b16 %v2495
    %v3875 = vunpack.c.h.b16 %v2495
    %v3876 = vunpack.c.l.b16 %v2496
    %v3877 = vunpack.c.h.b16 %v2496
    %v3878 = vunpack.c.l.b16 %v2497
    %v3879 = vunpack.c.h.b16 %v2497
    %v3880 = vunpack.c.l.b16 %v2498
    %v3881 = vunpack.c.h.b16 %v2498
    %v3882 = vunpack.c.l.b16 %v2499
    %v3883 = vunpack.c.h.b16 %v2499
    %v3884 = vunpack.c.l.b16 %v2500
    %v3885 = vunpack.c.h.b16 %v2500
    %v3886 = vunpack.c.l.b16 %v2501
    %v3887 = vunpack.c.h.b16 %v2501
    %v3888 = vunpack.c.l.b16 %v2502
    %v3889 = vunpack.c.h.b16 %v2502
    %v3890 = vunpack.c.l.b16 %v2503
    %v3891 = vunpack.c.h.b16 %v2503
    %v3892 = vunpack.c.l.b16 %v2504
    %v3893 = vunpack.c.h.b16 %v2504
    %v3894 = vunpack.c.l.b16 %v2505
    %v3895 = vunpack.c.h.b16 %v2505
    %v3896 = vunpack.c.l.b16 %v2506
    %v3897 = vunpack.c.h.b16 %v2506
    %v3898 = vunpack.c.l.b16 %v2507
    %v3899 = vunpack.c.h.b16 %v2507
    %v3900 = vunpack.c.l.b16 %v2508
    %v3901 = vunpack.c.h.b16 %v2508
    %v3902 = vunpack.c.l.b16 %v2509
    %v3903 = vunpack.c.h.b16 %v2509
    %v3904 = vunpack.c.l.b16 %v2510
    %v3905 = vunpack.c.h.b16 %v2510
    %v3906 = vunpack.c.l.b16 %v2511
    %v3907 = vunpack.c.h.b16 %v2511
    %v3908 = vunpack.c.l.b16 %v2512
    %v3909 = vunpack.c.h.b16 %v2512
    %v3910 = vunpack.c.l.b16 %v2513
    %v3911 = vunpack.c.h.b16 %v2513
    %v3912 = vunpack.c.l.b16 %v2514
    %v3913 = vunpack.c.h.b16 %v2514
    %v3914 = vunpack.c.l.b16 %v2515
    %v3915 = vunpack.c.h.b16 %v2515
    %v3916 = vunpack.c.l.b16 %v2516
    %v3917 = vunpack.c.h.b16 %v2516
    %v3918 = vunpack.c.l.b16 %v2517
    %v3919 = vunpack.c.h.b16 %v2517
    %v3920 = vunpack.c.l.b16 %v2518
    %v3921 = vunpack.c.h.b16 %v2518
    %v3922 = vunpack.c.l.b16 %v2519
    %v3923 = vunpack.c.h.b16 %v2519
    %v3924 = vunpack.c.l.b16 %v2520
    %v3925 = vunpack.c.h.b16 %v2520
    %v3926 = vunpack.c.l.b16 %v2521
    %v3927 = vunpack.c.h.b16 %v2521
    %v3928 = vunpack.c.l.b16 %v2522
    %v3929 = vunpack.c.h.b16 %v2522
    %v3930 = vunpack.c.l.b16 %v2523
    %v3931 = vunpack.c.h.b16 %v2523
    %v3932 = vunpack.c.l.b16 %v2524
    %v3933 = vunpack.c.h.b16 %v2524
    %v3934 = vunpack.c.l.b16 %v2525
    %v3935 = vunpack.c.h.b16 %v2525
    %v3936 = vunpack.c.l.b16 %v2526
    %v3937 = vunpack.c.h.b16 %v2526
    %v3938 = vunpack.c.l.b16 %v2527
    %v3939 = vunpack.c.h.b16 %v2527
    %v3940 = vunpack.c.l.b16 %v2528
    %v3941 = vunpack.c.h.b16 %v2528
    %v3942 = vunpack.c.l.b16 %v2529
    %v3943 = vunpack.c.h.b16 %v2529
    %v3944 = vunpack.c.l.b16 %v2530
    %v3945 = vunpack.c.h.b16 %v2530
    %v3946 = vunpack.c.l.b16 %v2531
    %v3947 = vunpack.c.h.b16 %v2531
    %v3948 = vunpack.c.l.b16 %v2532
    %v3949 = vunpack.c.h.b16 %v2532
    %v3950 = vunpack.c.l.b16 %v2533
    %v3951 = vunpack.c.h.b16 %v2533
    %v3952 = vunpack.c.l.b16 %v2534
    %v3953 = vunpack.c.h.b16 %v2534
    %v3954 = vunpack.c.l.b16 %v2535
    %v3955 = vunpack.c.h.b16 %v2535
    %v3956 = vunpack.c.l.b16 %v2536
    %v3957 = vunpack.c.h.b16 %v2536
    %v3958 = vunpack.c.l.b16 %v2537
    %v3959 = vunpack.c.h.b16 %v2537
    %v3960 = vunpack.c.l.b16 %v2538
    %v3961 = vunpack.c.h.b16 %v2538
    %v3962 = vunpack.c.l.b16 %v2539
    %v3963 = vunpack.c.h.b16 %v2539
    %v3964 = vunpack.c.l.b16 %v2540
    %v3965 = vunpack.c.h.b16 %v2540
    %v3966 = vunpack.c.l.b16 %v2541
    %v3967 = vunpack.c.h.b16 %v2541
    %v3968 = vunpack.c.l.b16 %v2542
    %v3969 = vunpack.c.h.b16 %v2542
    %v3970 = vunpack.c.l.b16 %v2543
    %v3971 = vunpack.c.h.b16 %v2543
    %v3972 = vunpack.c.l.b16 %v2544
    %v3973 = vunpack.c.h.b16 %v2544
    %v3974 = vunpack.c.l.b16 %v2545
    %v3975 = vunpack.c.h.b16 %v2545
    %v3976 = vunpack.c.l.b16 %v2546
    %v3977 = vunpack.c.h.b16 %v2546
    %v3978 = vunpack.c.l.b16 %v2547
    %v3979 = vunpack.c.h.b16 %v2547
    %v3980 = vunpack.c.l.b16 %v2548
    %v3981 = vunpack.c.h.b16 %v2548
    %v3982 = vunpack.c.l.b16 %v2549
    %v3983 = vunpack.c.h.b16 %v2549
    %v3984 = vunpack.c.l.b16 %v2550
    %v3985 = vunpack.c.h.b16 %v2550
    %v3986 = vunpack.c.l.b16 %v2551
    %v3987 = vunpack.c.h.b16 %v2551
    %v3988 = vunpack.c.l.b16 %v2552
    %v3989 = vunpack.c.h.b16 %v2552
    %v3990 = vunpack.c.l.b16 %v2553
    %v3991 = vunpack.c.h.b16 %v2553
    %v3992 = vunpack.c.l.b16 %v2554
    %v3993 = vunpack.c.h.b16 %v2554
    %v3994 = vunpack.c.l.b16 %v2555
    %v3995 = vunpack.c.h.b16 %v2555
    %v3996 = vunpack.c.l.b16 %v2556
    %v3997 = vunpack.c.h.b16 %v2556
    %v3998 = vunpack.c.l.b16 %v2557
    %v3999 = vunpack.c.h.b16 %v2557
    %v4000 = vunpack.c.l.b16 %v2558
    %v4001 = vunpack.c.h.b16 %v2558
    %v4002 = vunpack.c.l.b16 %v2559
    %v4003 = vunpack.c.h.b16 %v2559
    %v4004 = vunpack.c.l.b16 %v2560
    %v4005 = vunpack.c.h.b16 %v2560
    %v4006 = vunpack.c.l.b16 %v2561
    %v4007 = vunpack.c.h.b16 %v2561
    %v4008 = vunpack.c.l.b16 %v2562
    %v4009 = vunpack.c.h.b16 %v2562
    %v4010 = vunpack.c.l.b16 %v2563
    %v4011 = vunpack.c.h.b16 %v2563
    %v4012 = vunpack.c.l.b16 %v2564
    %v4013 = vunpack.c.h.b16 %v2564
    %v4014 = vunpack.c.l.b16 %v2565
    %v4015 = vunpack.c.h.b16 %v2565
    %v4016 = vunpack.c.l.b16 %v2566
    %v4017 = vunpack.c.h.b16 %v2566
    %v4018 = vunpack.c.l.b16 %v2567
    %v4019 = vunpack.c.h.b16 %v2567
    %v4020 = vunpack.c.l.b16 %v2568
    %v4021 = vunpack.c.h.b16 %v2568
    %v4022 = vunpack.c.l.b16 %v2569
    %v4023 = vunpack.c.h.b16 %v2569
    %v4024 = vunpack.c.l.b16 %v2570
    %v4025 = vunpack.c.h.b16 %v2570
    %v4026 = vunpack.c.l.b16 %v2571
    %v4027 = vunpack.c.h.b16 %v2571
    %v4028 = vunpack.c.l.b16 %v2572
    %v4029 = vunpack.c.h.b16 %v2572
    %v4030 = vunpack.c.l.b16 %v2573
    %v4031 = vunpack.c.h.b16 %v2573
    %v4032 = vunpack.c.l.b16 %v2574
    %v4033 = vunpack.c.h.b16 %v2574
    %v4034 = vunpack.c.l.b16 %v2575
    %v4035 = vunpack.c.h.b16 %v2575
    %v4036 = vunpack.c.l.b16 %v2576
    %v4037 = vunpack.c.h.b16 %v2576
    %v4038 = vunpack.c.l.b16 %v2577
    %v4039 = vunpack.c.h.b16 %v2577
    %v4040 = vunpack.c.l.b16 %v2578
    %v4041 = vunpack.c.h.b16 %v2578
    %v4042 = vunpack.c.l.b16 %v2579
    %v4043 = vunpack.c.h.b16 %v2579
    %v4044 = vunpack.c.l.b16 %v2580
    %v4045 = vunpack.c.h.b16 %v2580
    %v4046 = vunpack.c.l.b16 %v2581
    %v4047 = vunpack.c.h.b16 %v2581
    %v4048 = vunpack.c.l.b16 %v2582
    %v4049 = vunpack.c.h.b16 %v2582
    %v4050 = vunpack.c.l.b16 %v2583
    %v4051 = vunpack.c.h.b16 %v2583
    %v4052 = vunpack.c.l.b16 %v2584
    %v4053 = vunpack.c.h.b16 %v2584
    %v4054 = vunpack.c.l.b16 %v2585
    %v4055 = vunpack.c.h.b16 %v2585
    %v4056 = vunpack.c.l.b16 %v2586
    %v4057 = vunpack.c.h.b16 %v2586
    %v4058 = vunpack.c.l.b16 %v2587
    %v4059 = vunpack.c.h.b16 %v2587
    %v4060 = vunpack.c.l.b16 %v2588
    %v4061 = vunpack.c.h.b16 %v2588
    %v4062 = vunpack.c.l.b16 %v2589
    %v4063 = vunpack.c.h.b16 %v2589
    %v4064 = vunpack.c.l.b16 %v2590
    %v4065 = vunpack.c.h.b16 %v2590
    %v4066 = vunpack.c.l.b16 %v2591
    %v4067 = vunpack.c.h.b16 %v2591
    %v4068 = vunpack.c.l.b16 %v2592
    %v4069 = vunpack.c.h.b16 %v2592
    %v4070 = vunpack.c.l.b16 %v2593
    %v4071 = vunpack.c.h.b16 %v2593
    %v4072 = vunpack.c.l.b16 %v2594
    %v4073 = vunpack.c.h.b16 %v2594
    %v4074 = vunpack.c.l.b16 %v2595
    %v4075 = vunpack.c.h.b16 %v2595
    %v4076 = vunpack.c.l.b16 %v2596
    %v4077 = vunpack.c.h.b16 %v2596
    %v4078 = vunpack.c.l.b16 %v2597
    %v4079 = vunpack.c.h.b16 %v2597
    %v4080 = vunpack.c.l.b16 %v2598
    %v4081 = vunpack.c.h.b16 %v2598
    %v4082 = vunpack.c.l.b16 %v2599
    %v4083 = vunpack.c.h.b16 %v2599
    %v4084 = vunpack.c.l.b16 %v2600
    %v4085 = vunpack.c.h.b16 %v2600
    %v4086 = vunpack.c.l.b16 %v2601
    %v4087 = vunpack.c.h.b16 %v2601
    %v4088 = vunpack.c.l.b16 %v2602
    %v4089 = vunpack.c.h.b16 %v2602
    %v4090 = vunpack.c.l.b16 %v2603
    %v4091 = vunpack.c.h.b16 %v2603
    %v4092 = vunpack.c.l.b16 %v2604
    %v4093 = vunpack.c.h.b16 %v2604
    %v4094 = vunpack.c.l.b16 %v2605
    %v4095 = vunpack.c.h.b16 %v2605
    %v4096 = vunpack.c.l.b16 %v2606
    %v4097 = vunpack.c.h.b16 %v2606
    %v4098 = vunpack.c.l.b16 %v2607
    %v4099 = vunpack.c.h.b16 %v2607
    %v4100 = vunpack.c.l.b16 %v2608
    %v4101 = vunpack.c.h.b16 %v2608
    %v4102 = vunpack.c.l.b16 %v2609
    %v4103 = vunpack.c.h.b16 %v2609
    %v4104 = vunpack.c.l.b16 %v2610
    %v4105 = vunpack.c.h.b16 %v2610
    %v4106 = vunpack.c.l.b16 %v2611
    %v4107 = vunpack.c.h.b16 %v2611
    %v4108 = vunpack.c.l.b16 %v2612
    %v4109 = vunpack.c.h.b16 %v2612
    %v4110 = vunpack.c.l.b16 %v2613
    %v4111 = vunpack.c.h.b16 %v2613
    %v4112 = vunpack.c.l.b16 %v2614
    %v4113 = vunpack.c.h.b16 %v2614
    %v4114 = vunpack.c.l.b16 %v2615
    %v4115 = vunpack.c.h.b16 %v2615
    %v4116 = vunpack.c.l.b16 %v2616
    %v4117 = vunpack.c.h.b16 %v2616
    %v4118 = vunpack.c.l.b16 %v2617
    %v4119 = vunpack.c.h.b16 %v2617
    %v4120 = vunpack.c.l.b16 %v2618
    %v4121 = vunpack.c.h.b16 %v2618
    %v4122 = vunpack.c.l.b16 %v2619
    %v4123 = vunpack.c.h.b16 %v2619
    %v4124 = vunpack.c.l.b16 %v2620
    %v4125 = vunpack.c.h.b16 %v2620
    %v4126 = vunpack.c.l.b16 %v2621
    %v4127 = vunpack.c.h.b16 %v2621
    %v4128 = vunpack.c.l.b16 %v2622
    %v4129 = vunpack.c.h.b16 %v2622
    %v4130 = vunpack.c.l.b16 %v2623
    %v4131 = vunpack.c.h.b16 %v2623
    %v4132 = vunpack.c.l.b16 %v2624
    %v4133 = vunpack.c.h.b16 %v2624
    %v4134 = vunpack.c.l.b16 %v2625
    %v4135 = vunpack.c.h.b16 %v2625
    %v4136 = vunpack.c.l.b16 %v2626
    %v4137 = vunpack.c.h.b16 %v2626
    %v4138 = vunpack.c.l.b16 %v2627
    %v4139 = vunpack.c.h.b16 %v2627
    %v4140 = vunpack.c.l.b16 %v2628
    %v4141 = vunpack.c.h.b16 %v2628
    %v4142 = vunpack.c.l.b16 %v2629
    %v4143 = vunpack.c.h.b16 %v2629
    %v4144 = vunpack.c.l.b16 %v2630
    %v4145 = vunpack.c.h.b16 %v2630
    %v4146 = vunpack.c.l.b16 %v2631
    %v4147 = vunpack.c.h.b16 %v2631
    %v4148 = vunpack.c.l.b16 %v2632
    %v4149 = vunpack.c.h.b16 %v2632
    %v4150 = vunpack.c.l.b16 %v2633
    %v4151 = vunpack.c.h.b16 %v2633
    %v4152 = vunpack.c.l.b16 %v2634
    %v4153 = vunpack.c.h.b16 %v2634
    %v4154 = vunpack.c.l.b16 %v2635
    %v4155 = vunpack.c.h.b16 %v2635
    %v4156 = vunpack.c.l.b16 %v2636
    %v4157 = vunpack.c.h.b16 %v2636
    %v4158 = vunpack.c.l.b16 %v2637
    %v4159 = vunpack.c.h.b16 %v2637
    %v4160 = vunpack.c.l.b16 %v2638
    %v4161 = vunpack.c.h.b16 %v2638
    %v4162 = vunpack.c.l.b16 %v2639
    %v4163 = vunpack.c.h.b16 %v2639
    %v4164 = vunpack.c.l.b16 %v2640
    %v4165 = vunpack.c.h.b16 %v2640
    %v4166 = vunpack.c.l.b16 %v2641
    %v4167 = vunpack.c.h.b16 %v2641
    %v4168 = vunpack.c.l.b16 %v2642
    %v4169 = vunpack.c.h.b16 %v2642
    %v4170 = vunpack.c.l.b16 %v2643
    %v4171 = vunpack.c.h.b16 %v2643
    %v4172 = vunpack.c.l.b16 %v2644
    %v4173 = vunpack.c.h.b16 %v2644
    %v4174 = vunpack.c.l.b16 %v2645
    %v4175 = vunpack.c.h.b16 %v2645
    %v4176 = vunpack.c.l.b16 %v2646
    %v4177 = vunpack.c.h.b16 %v2646
    %v4178 = vunpack.c.l.b16 %v2647
    %v4179 = vunpack.c.h.b16 %v2647
    %v4180 = vunpack.c.l.b16 %v2648
    %v4181 = vunpack.c.h.b16 %v2648
    %v4182 = vunpack.c.l.b16 %v2649
    %v4183 = vunpack.c.h.b16 %v2649
    %v4184 = vunpack.c.l.b16 %v2650
    %v4185 = vunpack.c.h.b16 %v2650
    %v4186 = vunpack.c.l.b16 %v2651
    %v4187 = vunpack.c.h.b16 %v2651
    %v4188 = vunpack.c.l.b16 %v2652
    %v4189 = vunpack.c.h.b16 %v2652
    %v4190 = vpack.c.b16 %v3170, %v3166
    %v4191 = vpack.c.b16 %v3171, %v3167
    %v4192 = vpack.c.b16 %v3172, %v3168
    %v4193 = vpack.c.b16 %v3173, %v3169
    %v4194 = vpack.c.b16 %v3178, %v3174
    %v4195 = vpack.c.b16 %v3179, %v3175
    %v4196 = vpack.c.b16 %v3180, %v3176
    %v4197 = vpack.c.b16 %v3181, %v3177
    %v4198 = vpack.c.b16 %v3186, %v3182
    %v4199 = vpack.c.b16 %v3187, %v3183
    %v4200 = vpack.c.b16 %v3188, %v3184
    %v4201 = vpack.c.b16 %v3189, %v3185
    %v4202 = vpack.c.b16 %v3194, %v3190
    %v4203 = vpack.c.b16 %v3195, %v3191
    %v4204 = vpack.c.b16 %v3196, %v3192
    %v4205 = vpack.c.b16 %v3197, %v3193
    %v4206 = vpack.c.b16 %v3202, %v3198
    %v4207 = vpack.c.b16 %v3203, %v3199
    %v4208 = vpack.c.b16 %v3204, %v3200
    %v4209 = vpack.c.b16 %v3205, %v3201
    %v4210 = vpack.c.b16 %v3210, %v3206
    %v4211 = vpack.c.b16 %v3211, %v3207
    %v4212 = vpack.c.b16 %v3212, %v3208
    %v4213 = vpack.c.b16 %v3213, %v3209
    %v4214 = vpack.c.b16 %v3218, %v3214
    %v4215 = vpack.c.b16 %v3219, %v3215
    %v4216 = vpack.c.b16 %v3220, %v3216
    %v4217 = vpack.c.b16 %v3221, %v3217
    %v4218 = vpack.c.b16 %v3226, %v3222
    %v4219 = vpack.c.b16 %v3227, %v3223
    %v4220 = vpack.c.b16 %v3228, %v3224
    %v4221 = vpack.c.b16 %v3229, %v3225
    %v4222 = vpack.c.b16 %v3234, %v3230
    %v4223 = vpack.c.b16 %v3235, %v3231
    %v4224 = vpack.c.b16 %v3236, %v3232
    %v4225 = vpack.c.b16 %v3237, %v3233
    %v4226 = vpack.c.b16 %v3242, %v3238
    %v4227 = vpack.c.b16 %v3243, %v3239
    %v4228 = vpack.c.b16 %v3244, %v3240
    %v4229 = vpack.c.b16 %v3245, %v3241
    %v4230 = vpack.c.b16 %v3250, %v3246
    %v4231 = vpack.c.b16 %v3251, %v3247
    %v4232 = vpack.c.b16 %v3252, %v3248
    %v4233 = vpack.c.b16 %v3253, %v3249
    %v4234 = vpack.c.b16 %v3258, %v3254
    %v4235 = vpack.c.b16 %v3259, %v3255
    %v4236 = vpack.c.b16 %v3260, %v3256
    %v4237 = vpack.c.b16 %v3261, %v3257
    %v4238 = vpack.c.b16 %v3266, %v3262
    %v4239 = vpack.c.b16 %v3267, %v3263
    %v4240 = vpack.c.b16 %v3268, %v3264
    %v4241 = vpack.c.b16 %v3269, %v3265
    %v4242 = vpack.c.b16 %v3274, %v3270
    %v4243 = vpack.c.b16 %v3275, %v3271
    %v4244 = vpack.c.b16 %v3276, %v3272
    %v4245 = vpack.c.b16 %v3277, %v3273
    %v4246 = vpack.c.b16 %v3282, %v3278
    %v4247 = vpack.c.b16 %v3283, %v3279
    %v4248 = vpack.c.b16 %v3284, %v3280
    %v4249 = vpack.c.b16 %v3285, %v3281
    %v4250 = vpack.c.b16 %v3290, %v3286
    %v4251 = vpack.c.b16 %v3291, %v3287
    %v4252 = vpack.c.b16 %v3292, %v3288
    %v4253 = vpack.c.b16 %v3293, %v3289
    %v4254 = vpack.c.b16 %v3298, %v3294
    %v4255 = vpack.c.b16 %v3299, %v3295
    %v4256 = vpack.c.b16 %v3300, %v3296
    %v4257 = vpack.c.b16 %v3301, %v3297
    %v4258 = vpack.c.b16 %v3306, %v3302
    %v4259 = vpack.c.b16 %v3307, %v3303
    %v4260 = vpack.c.b16 %v3308, %v3304
    %v4261 = vpack.c.b16 %v3309, %v3305
    %v4262 = vpack.c.b16 %v3314, %v3310
    %v4263 = vpack.c.b16 %v3315, %v3311
    %v4264 = vpack.c.b16 %v3316, %v3312
    %v4265 = vpack.c.b16 %v3317, %v3313
    %v4266 = vpack.c.b16 %v3322, %v3318
    %v4267 = vpack.c.b16 %v3323, %v3319
    %v4268 = vpack.c.b16 %v3324, %v3320
    %v4269 = vpack.c.b16 %v3325, %v3321
    %v4270 = vpack.c.b16 %v3330, %v3326
    %v4271 = vpack.c.b16 %v3331, %v3327
    %v4272 = vpack.c.b16 %v3332, %v3328
    %v4273 = vpack.c.b16 %v3333, %v3329
    %v4274 = vpack.c.b16 %v3338, %v3334
    %v4275 = vpack.c.b16 %v3339, %v3335
    %v4276 = vpack.c.b16 %v3340, %v3336
    %v4277 = vpack.c.b16 %v3341, %v3337
    %v4278 = vpack.c.b16 %v3346, %v3342
    %v4279 = vpack.c.b16 %v3347, %v3343
    %v4280 = vpack.c.b16 %v3348, %v3344
    %v4281 = vpack.c.b16 %v3349, %v3345
    %v4282 = vpack.c.b16 %v3354, %v3350
    %v4283 = vpack.c.b16 %v3355, %v3351
    %v4284 = vpack.c.b16 %v3356, %v3352
    %v4285 = vpack.c.b16 %v3357, %v3353
    %v4286 = vpack.c.b16 %v3362, %v3358
    %v4287 = vpack.c.b16 %v3363, %v3359
    %v4288 = vpack.c.b16 %v3364, %v3360
    %v4289 = vpack.c.b16 %v3365, %v3361
    %v4290 = vpack.c.b16 %v3370, %v3366
    %v4291 = vpack.c.b16 %v3371, %v3367
    %v4292 = vpack.c.b16 %v3372, %v3368
    %v4293 = vpack.c.b16 %v3373, %v3369
    %v4294 = vpack.c.b16 %v3378, %v3374
    %v4295 = vpack.c.b16 %v3379, %v3375
    %v4296 = vpack.c.b16 %v3380, %v3376
    %v4297 = vpack.c.b16 %v3381, %v3377
    %v4298 = vpack.c.b16 %v3386, %v3382
    %v4299 = vpack.c.b16 %v3387, %v3383
    %v4300 = vpack.c.b16 %v3388, %v3384
    %v4301 = vpack.c.b16 %v3389, %v3385
    %v4302 = vpack.c.b16 %v3394, %v3390
    %v4303 = vpack.c.b16 %v3395, %v3391
    %v4304 = vpack.c.b16 %v3396, %v3392
    %v4305 = vpack.c.b16 %v3397, %v3393
    %v4306 = vpack.c.b16 %v3402, %v3398
    %v4307 = vpack.c.b16 %v3403, %v3399
    %v4308 = vpack.c.b16 %v3404, %v3400
    %v4309 = vpack.c.b16 %v3405, %v3401
    %v4310 = vpack.c.b16 %v3410, %v3406
    %v4311 = vpack.c.b16 %v3411, %v3407
    %v4312 = vpack.c.b16 %v3412, %v3408
    %v4313 = vpack.c.b16 %v3413, %v3409
    %v4314 = vpack.c.b16 %v3418, %v3414
    %v4315 = vpack.c.b16 %v3419, %v3415
    %v4316 = vpack.c.b16 %v3420, %v3416
    %v4317 = vpack.c.b16 %v3421, %v3417
    %v4318 = vpack.c.b16 %v3426, %v3422
    %v4319 = vpack.c.b16 %v3427, %v3423
    %v4320 = vpack.c.b16 %v3428, %v3424
    %v4321 = vpack.c.b16 %v3429, %v3425
    %v4322 = vpack.c.b16 %v3434, %v3430
    %v4323 = vpack.c.b16 %v3435, %v3431
    %v4324 = vpack.c.b16 %v3436, %v3432
    %v4325 = vpack.c.b16 %v3437, %v3433
    %v4326 = vpack.c.b16 %v3442, %v3438
    %v4327 = vpack.c.b16 %v3443, %v3439
    %v4328 = vpack.c.b16 %v3444, %v3440
    %v4329 = vpack.c.b16 %v3445, %v3441
    %v4330 = vpack.c.b16 %v3450, %v3446
    %v4331 = vpack.c.b16 %v3451, %v3447
    %v4332 = vpack.c.b16 %v3452, %v3448
    %v4333 = vpack.c.b16 %v3453, %v3449
    %v4334 = vpack.c.b16 %v3458, %v3454
    %v4335 = vpack.c.b16 %v3459, %v3455
    %v4336 = vpack.c.b16 %v3460, %v3456
    %v4337 = vpack.c.b16 %v3461, %v3457
    %v4338 = vpack.c.b16 %v3466, %v3462
    %v4339 = vpack.c.b16 %v3467, %v3463
    %v4340 = vpack.c.b16 %v3468, %v3464
    %v4341 = vpack.c.b16 %v3469, %v3465
    %v4342 = vpack.c.b16 %v3474, %v3470
    %v4343 = vpack.c.b16 %v3475, %v3471
    %v4344 = vpack.c.b16 %v3476, %v3472
    %v4345 = vpack.c.b16 %v3477, %v3473
    %v4346 = vpack.c.b16 %v3482, %v3478
    %v4347 = vpack.c.b16 %v3483, %v3479
    %v4348 = vpack.c.b16 %v3484, %v3480
    %v4349 = vpack.c.b16 %v3485, %v3481
    %v4350 = vpack.c.b16 %v3490, %v3486
    %v4351 = vpack.c.b16 %v3491, %v3487
    %v4352 = vpack.c.b16 %v3492, %v3488
    %v4353 = vpack.c.b16 %v3493, %v3489
    %v4354 = vpack.c.b16 %v3498, %v3494
    %v4355 = vpack.c.b16 %v3499, %v3495
    %v4356 = vpack.c.b16 %v3500, %v3496
    %v4357 = vpack.c.b16 %v3501, %v3497
    %v4358 = vpack.c.b16 %v3506, %v3502
    %v4359 = vpack.c.b16 %v3507, %v3503
    %v4360 = vpack.c.b16 %v3508, %v3504
    %v4361 = vpack.c.b16 %v3509, %v3505
    %v4362 = vpack.c.b16 %v3514, %v3510
    %v4363 = vpack.c.b16 %v3515, %v3511
    %v4364 = vpack.c.b16 %v3516, %v3512
    %v4365 = vpack.c.b16 %v3517, %v3513
    %v4366 = vpack.c.b16 %v3522, %v3518
    %v4367 = vpack.c.b16 %v3523, %v3519
    %v4368 = vpack.c.b16 %v3524, %v3520
    %v4369 = vpack.c.b16 %v3525, %v3521
    %v4370 = vpack.c.b16 %v3530, %v3526
    %v4371 = vpack.c.b16 %v3531, %v3527
    %v4372 = vpack.c.b16 %v3532, %v3528
    %v4373 = vpack.c.b16 %v3533, %v3529
    %v4374 = vpack.c.b16 %v3538, %v3534
    %v4375 = vpack.c.b16 %v3539, %v3535
    %v4376 = vpack.c.b16 %v3540, %v3536
    %v4377 = vpack.c.b16 %v3541, %v3537
    %v4378 = vpack.c.b16 %v3546, %v3542
    %v4379 = vpack.c.b16 %v3547, %v3543
    %v4380 = vpack.c.b16 %v3548, %v3544
    %v4381 = vpack.c.b16 %v3549, %v3545
    %v4382 = vpack.c.b16 %v3554, %v3550
    %v4383 = vpack.c.b16 %v3555, %v3551
    %v4384 = vpack.c.b16 %v3556, %v3552
    %v4385 = vpack.c.b16 %v3557, %v3553
    %v4386 = vpack.c.b16 %v3562, %v3558
    %v4387 = vpack.c.b16 %v3563, %v3559
    %v4388 = vpack.c.b16 %v3564, %v3560
    %v4389 = vpack.c.b16 %v3565, %v3561
    %v4390 = vpack.c.b16 %v3570, %v3566
    %v4391 = vpack.c.b16 %v3571, %v3567
    %v4392 = vpack.c.b16 %v3572, %v3568
    %v4393 = vpack.c.b16 %v3573, %v3569
    %v4394 = vpack.c.b16 %v3578, %v3574
    %v4395 = vpack.c.b16 %v3579, %v3575
    %v4396 = vpack.c.b16 %v3580, %v3576
    %v4397 = vpack.c.b16 %v3581, %v3577
    %v4398 = vpack.c.b16 %v3586, %v3582
    %v4399 = vpack.c.b16 %v3587, %v3583
    %v4400 = vpack.c.b16 %v3588, %v3584
    %v4401 = vpack.c.b16 %v3589, %v3585
    %v4402 = vpack.c.b16 %v3594, %v3590
    %v4403 = vpack.c.b16 %v3595, %v3591
    %v4404 = vpack.c.b16 %v3596, %v3592
    %v4405 = vpack.c.b16 %v3597, %v3593
    %v4406 = vpack.c.b16 %v3602, %v3598
    %v4407 = vpack.c.b16 %v3603, %v3599
    %v4408 = vpack.c.b16 %v3604, %v3600
    %v4409 = vpack.c.b16 %v3605, %v3601
    %v4410 = vpack.c.b16 %v3610, %v3606
    %v4411 = vpack.c.b16 %v3611, %v3607
    %v4412 = vpack.c.b16 %v3612, %v3608
    %v4413 = vpack.c.b16 %v3613, %v3609
    %v4414 = vpack.c.b16 %v3618, %v3614
    %v4415 = vpack.c.b16 %v3619, %v3615
    %v4416 = vpack.c.b16 %v3620, %v3616
    %v4417 = vpack.c.b16 %v3621, %v3617
    %v4418 = vpack.c.b16 %v3626, %v3622
    %v4419 = vpack.c.b16 %v3627, %v3623
    %v4420 = vpack.c.b16 %v3628, %v3624
    %v4421 = vpack.c.b16 %v3629, %v3625
    %v4422 = vpack.c.b16 %v3634, %v3630
    %v4423 = vpack.c.b16 %v3635, %v3631
    %v4424 = vpack.c.b16 %v3636, %v3632
    %v4425 = vpack.c.b16 %v3637, %v3633
    %v4426 = vpack.c.b16 %v3642, %v3638
    %v4427 = vpack.c.b16 %v3643, %v3639
    %v4428 = vpack.c.b16 %v3644, %v3640
    %v4429 = vpack.c.b16 %v3645, %v3641
    %v4430 = vpack.c.b16 %v3650, %v3646
    %v4431 = vpack.c.b16 %v3651, %v3647
    %v4432 = vpack.c.b16 %v3652, %v3648
    %v4433 = vpack.c.b16 %v3653, %v3649
    %v4434 = vpack.c.b16 %v3658, %v3654
    %v4435 = vpack.c.b16 %v3659, %v3655
    %v4436 = vpack.c.b16 %v3660, %v3656
    %v4437 = vpack.c.b16 %v3661, %v3657
    %v4438 = vpack.c.b16 %v3666, %v3662
    %v4439 = vpack.c.b16 %v3667, %v3663
    %v4440 = vpack.c.b16 %v3668, %v3664
    %v4441 = vpack.c.b16 %v3669, %v3665
    %v4442 = vpack.c.b16 %v3674, %v3670
    %v4443 = vpack.c.b16 %v3675, %v3671
    %v4444 = vpack.c.b16 %v3676, %v3672
    %v4445 = vpack.c.b16 %v3677, %v3673
    %v4446 = vpack.c.b16 %v3682, %v3678
    %v4447 = vpack.c.b16 %v3683, %v3679
    %v4448 = vpack.c.b16 %v3684, %v3680
    %v4449 = vpack.c.b16 %v3685, %v3681
    %v4450 = vpack.c.b16 %v3690, %v3686
    %v4451 = vpack.c.b16 %v3691, %v3687
    %v4452 = vpack.c.b16 %v3692, %v3688
    %v4453 = vpack.c.b16 %v3693, %v3689
    %v4454 = vpack.c.b16 %v3698, %v3694
    %v4455 = vpack.c.b16 %v3699, %v3695
    %v4456 = vpack.c.b16 %v3700, %v3696
    %v4457 = vpack.c.b16 %v3701, %v3697
    %v4458 = vpack.c.b16 %v3706, %v3702
    %v4459 = vpack.c.b16 %v3707, %v3703
    %v4460 = vpack.c.b16 %v3708, %v3704
    %v4461 = vpack.c.b16 %v3709, %v3705
    %v4462 = vpack.c.b16 %v3714, %v3710
    %v4463 = vpack.c.b16 %v3715, %v3711
    %v4464 = vpack.c.b16 %v3716, %v3712
    %v4465 = vpack.c.b16 %v3717, %v3713
    %v4466 = vpack.c.b16 %v3722, %v3718
    %v4467 = vpack.c.b16 %v3723, %v3719
    %v4468 = vpack.c.b16 %v3724, %v3720
    %v4469 = vpack.c.b16 %v3725, %v3721
    %v4470 = vpack.c.b16 %v3730, %v3726
    %v4471 = vpack.c.b16 %v3731, %v3727
    %v4472 = vpack.c.b16 %v3732, %v3728
    %v4473 = vpack.c.b16 %v3733, %v3729
    %v4474 = vpack.c.b16 %v3738, %v3734
    %v4475 = vpack.c.b16 %v3739, %v3735
    %v4476 = vpack.c.b16 %v3740, %v3736
    %v4477 = vpack.c.b16 %v3741, %v3737
    %v4478 = vpack.c.b16 %v3746, %v3742
    %v4479 = vpack.c.b16 %v3747, %v3743
    %v4480 = vpack.c.b16 %v3748, %v3744
    %v4481 = vpack.c.b16 %v3749, %v3745
    %v4482 = vpack.c.b16 %v3754, %v3750
    %v4483 = vpack.c.b16 %v3755, %v3751
    %v4484 = vpack.c.b16 %v3756, %v3752
    %v4485 = vpack.c.b16 %v3757, %v3753
    %v4486 = vpack.c.b16 %v3762, %v3758
    %v4487 = vpack.c.b16 %v3763, %v3759
    %v4488 = vpack.c.b16 %v3764, %v3760
    %v4489 = vpack.c.b16 %v3765, %v3761
    %v4490 = vpack.c.b16 %v3770, %v3766
    %v4491 = vpack.c.b16 %v3771, %v3767
    %v4492 = vpack.c.b16 %v3772, %v3768
    %v4493 = vpack.c.b16 %v3773, %v3769
    %v4494 = vpack.c.b16 %v3778, %v3774
    %v4495 = vpack.c.b16 %v3779, %v3775
    %v4496 = vpack.c.b16 %v3780, %v3776
    %v4497 = vpack.c.b16 %v3781, %v3777
    %v4498 = vpack.c.b16 %v3786, %v3782
    %v4499 = vpack.c.b16 %v3787, %v3783
    %v4500 = vpack.c.b16 %v3788, %v3784
    %v4501 = vpack.c.b16 %v3789, %v3785
    %v4502 = vpack.c.b16 %v3794, %v3790
    %v4503 = vpack.c.b16 %v3795, %v3791
    %v4504 = vpack.c.b16 %v3796, %v3792
    %v4505 = vpack.c.b16 %v3797, %v3793
    %v4506 = vpack.c.b16 %v3802, %v3798
    %v4507 = vpack.c.b16 %v3803, %v3799
    %v4508 = vpack.c.b16 %v3804, %v3800
    %v4509 = vpack.c.b16 %v3805, %v3801
    %v4510 = vpack.c.b16 %v3810, %v3806
    %v4511 = vpack.c.b16 %v3811, %v3807
    %v4512 = vpack.c.b16 %v3812, %v3808
    %v4513 = vpack.c.b16 %v3813, %v3809
    %v4514 = vpack.c.b16 %v3818, %v3814
    %v4515 = vpack.c.b16 %v3819, %v3815
    %v4516 = vpack.c.b16 %v3820, %v3816
    %v4517 = vpack.c.b16 %v3821, %v3817
    %v4518 = vpack.c.b16 %v3826, %v3822
    %v4519 = vpack.c.b16 %v3827, %v3823
    %v4520 = vpack.c.b16 %v3828, %v3824
    %v4521 = vpack.c.b16 %v3829, %v3825
    %v4522 = vpack.c.b16 %v3834, %v3830
    %v4523 = vpack.c.b16 %v3835, %v3831
    %v4524 = vpack.c.b16 %v3836, %v3832
    %v4525 = vpack.c.b16 %v3837, %v3833
    %v4526 = vpack.c.b16 %v3842, %v3838
    %v4527 = vpack.c.b16 %v3843, %v3839
    %v4528 = vpack.c.b16 %v3844, %v3840
    %v4529 = vpack.c.b16 %v3845, %v3841
    %v4530 = vpack.c.b16 %v3850, %v3846
    %v4531 = vpack.c.b16 %v3851, %v3847
    %v4532 = vpack.c.b16 %v3852, %v3848
    %v4533 = vpack.c.b16 %v3853, %v3849
    %v4534 = vpack.c.b16 %v3858, %v3854
    %v4535 = vpack.c.b16 %v3859, %v3855
    %v4536 = vpack.c.b16 %v3860, %v3856
    %v4537 = vpack.c.b16 %v3861, %v3857
    %v4538 = vpack.c.b16 %v3866, %v3862
    %v4539 = vpack.c.b16 %v3867, %v3863
    %v4540 = vpack.c.b16 %v3868, %v3864
    %v4541 = vpack.c.b16 %v3869, %v3865
    %v4542 = vpack.c.b16 %v3874, %v3870
    %v4543 = vpack.c.b16 %v3875, %v3871
    %v4544 = vpack.c.b16 %v3876, %v3872
    %v4545 = vpack.c.b16 %v3877, %v3873
    %v4546 = vpack.c.b16 %v3882, %v3878
    %v4547 = vpack.c.b16 %v3883, %v3879
    %v4548 = vpack.c.b16 %v3884, %v3880
    %v4549 = vpack.c.b16 %v3885, %v3881
    %v4550 = vpack.c.b16 %v3890, %v3886
    %v4551 = vpack.c.b16 %v3891, %v3887
    %v4552 = vpack.c.b16 %v3892, %v3888
    %v4553 = vpack.c.b16 %v3893, %v3889
    %v4554 = vpack.c.b16 %v3898, %v3894
    %v4555 = vpack.c.b16 %v3899, %v3895
    %v4556 = vpack.c.b16 %v3900, %v3896
    %v4557 = vpack.c.b16 %v3901, %v3897
    %v4558 = vpack.c.b16 %v3906, %v3902
    %v4559 = vpack.c.b16 %v3907, %v3903
    %v4560 = vpack.c.b16 %v3908, %v3904
    %v4561 = vpack.c.b16 %v3909, %v3905
    %v4562 = vpack.c.b16 %v3914, %v3910
    %v4563 = vpack.c.b16 %v3915, %v3911
    %v4564 = vpack.c.b16 %v3916, %v3912
    %v4565 = vpack.c.b16 %v3917, %v3913
    %v4566 = vpack.c.b16 %v3922, %v3918
    %v4567 = vpack.c.b16 %v3923, %v3919
    %v4568 = vpack.c.b16 %v3924, %v3920
    %v4569 = vpack.c.b16 %v3925, %v3921
    %v4570 = vpack.c.b16 %v3930, %v3926
    %v4571 = vpack.c.b16 %v3931, %v3927
    %v4572 = vpack.c.b16 %v3932, %v3928
    %v4573 = vpack.c.b16 %v3933, %v3929
    %v4574 = vpack.c.b16 %v3938, %v3934
    %v4575 = vpack.c.b16 %v3939, %v3935
    %v4576 = vpack.c.b16 %v3940, %v3936
    %v4577 = vpack.c.b16 %v3941, %v3937
    %v4578 = vpack.c.b16 %v3946, %v3942
    %v4579 = vpack.c.b16 %v3947, %v3943
    %v4580 = vpack.c.b16 %v3948, %v3944
    %v4581 = vpack.c.b16 %v3949, %v3945
    %v4582 = vpack.c.b16 %v3954, %v3950
    %v4583 = vpack.c.b16 %v3955, %v3951
    %v4584 = vpack.c.b16 %v3956, %v3952
    %v4585 = vpack.c.b16 %v3957, %v3953
    %v4586 = vpack.c.b16 %v3962, %v3958
    %v4587 = vpack.c.b16 %v3963, %v3959
    %v4588 = vpack.c.b16 %v3964, %v3960
    %v4589 = vpack.c.b16 %v3965, %v3961
    %v4590 = vpack.c.b16 %v3970, %v3966
    %v4591 = vpack.c.b16 %v3971, %v3967
    %v4592 = vpack.c.b16 %v3972, %v3968
    %v4593 = vpack.c.b16 %v3973, %v3969
    %v4594 = vpack.c.b16 %v3978, %v3974
    %v4595 = vpack.c.b16 %v3979, %v3975
    %v4596 = vpack.c.b16 %v3980, %v3976
    %v4597 = vpack.c.b16 %v3981, %v3977
    %v4598 = vpack.c.b16 %v3986, %v3982
    %v4599 = vpack.c.b16 %v3987, %v3983
    %v4600 = vpack.c.b16 %v3988, %v3984
    %v4601 = vpack.c.b16 %v3989, %v3985
    %v4602 = vpack.c.b16 %v3994, %v3990
    %v4603 = vpack.c.b16 %v3995, %v3991
    %v4604 = vpack.c.b16 %v3996, %v3992
    %v4605 = vpack.c.b16 %v3997, %v3993
    %v4606 = vpack.c.b16 %v4002, %v3998
    %v4607 = vpack.c.b16 %v4003, %v3999
    %v4608 = vpack.c.b16 %v4004, %v4000
    %v4609 = vpack.c.b16 %v4005, %v4001
    %v4610 = vpack.c.b16 %v4010, %v4006
    %v4611 = vpack.c.b16 %v4011, %v4007
    %v4612 = vpack.c.b16 %v4012, %v4008
    %v4613 = vpack.c.b16 %v4013, %v4009
    %v4614 = vpack.c.b16 %v4018, %v4014
    %v4615 = vpack.c.b16 %v4019, %v4015
    %v4616 = vpack.c.b16 %v4020, %v4016
    %v4617 = vpack.c.b16 %v4021, %v4017
    %v4618 = vpack.c.b16 %v4026, %v4022
    %v4619 = vpack.c.b16 %v4027, %v4023
    %v4620 = vpack.c.b16 %v4028, %v4024
    %v4621 = vpack.c.b16 %v4029, %v4025
    %v4622 = vpack.c.b16 %v4034, %v4030
    %v4623 = vpack.c.b16 %v4035, %v4031
    %v4624 = vpack.c.b16 %v4036, %v4032
    %v4625 = vpack.c.b16 %v4037, %v4033
    %v4626 = vpack.c.b16 %v4042, %v4038
    %v4627 = vpack.c.b16 %v4043, %v4039
    %v4628 = vpack.c.b16 %v4044, %v4040
    %v4629 = vpack.c.b16 %v4045, %v4041
    %v4630 = vpack.c.b16 %v4050, %v4046
    %v4631 = vpack.c.b16 %v4051, %v4047
    %v4632 = vpack.c.b16 %v4052, %v4048
    %v4633 = vpack.c.b16 %v4053, %v4049
    %v4634 = vpack.c.b16 %v4058, %v4054
    %v4635 = vpack.c.b16 %v4059, %v4055
    %v4636 = vpack.c.b16 %v4060, %v4056
    %v4637 = vpack.c.b16 %v4061, %v4057
    %v4638 = vpack.c.b16 %v4066, %v4062
    %v4639 = vpack.c.b16 %v4067, %v4063
    %v4640 = vpack.c.b16 %v4068, %v4064
    %v4641 = vpack.c.b16 %v4069, %v4065
    %v4642 = vpack.c.b16 %v4074, %v4070
    %v4643 = vpack.c.b16 %v4075, %v4071
    %v4644 = vpack.c.b16 %v4076, %v4072
    %v4645 = vpack.c.b16 %v4077, %v4073
    %v4646 = vpack.c.b16 %v4082, %v4078
    %v4647 = vpack.c.b16 %v4083, %v4079
    %v4648 = vpack.c.b16 %v4084, %v4080
    %v4649 = vpack.c.b16 %v4085, %v4081
    %v4650 = vpack.c.b16 %v4090, %v4086
    %v4651 = vpack.c.b16 %v4091, %v4087
    %v4652 = vpack.c.b16 %v4092, %v4088
    %v4653 = vpack.c.b16 %v4093, %v4089
    %v4654 = vpack.c.b16 %v4098, %v4094
    %v4655 = vpack.c.b16 %v4099, %v4095
    %v4656 = vpack.c.b16 %v4100, %v4096
    %v4657 = vpack.c.b16 %v4101, %v4097
    %v4658 = vpack.c.b16 %v4106, %v4102
    %v4659 = vpack.c.b16 %v4107, %v4103
    %v4660 = vpack.c.b16 %v4108, %v4104
    %v4661 = vpack.c.b16 %v4109, %v4105
    %v4662 = vpack.c.b16 %v4114, %v4110
    %v4663 = vpack.c.b16 %v4115, %v4111
    %v4664 = vpack.c.b16 %v4116, %v4112
    %v4665 = vpack.c.b16 %v4117, %v4113
    %v4666 = vpack.c.b16 %v4122, %v4118
    %v4667 = vpack.c.b16 %v4123, %v4119
    %v4668 = vpack.c.b16 %v4124, %v4120
    %v4669 = vpack.c.b16 %v4125, %v4121
    %v4670 = vpack.c.b16 %v4130, %v4126
    %v4671 = vpack.c.b16 %v4131, %v4127
    %v4672 = vpack.c.b16 %v4132, %v4128
    %v4673 = vpack.c.b16 %v4133, %v4129
    %v4674 = vpack.c.b16 %v4138, %v4134
    %v4675 = vpack.c.b16 %v4139, %v4135
    %v4676 = vpack.c.b16 %v4140, %v4136
    %v4677 = vpack.c.b16 %v4141, %v4137
    %v4678 = vpack.c.b16 %v4146, %v4142
    %v4679 = vpack.c.b16 %v4147, %v4143
    %v4680 = vpack.c.b16 %v4148, %v4144
    %v4681 = vpack.c.b16 %v4149, %v4145
    %v4682 = vpack.c.b16 %v4154, %v4150
    %v4683 = vpack.c.b16 %v4155, %v4151
    %v4684 = vpack.c.b16 %v4156, %v4152
    %v4685 = vpack.c.b16 %v4157, %v4153
    %v4686 = vpack.c.b16 %v4162, %v4158
    %v4687 = vpack.c.b16 %v4163, %v4159
    %v4688 = vpack.c.b16 %v4164, %v4160
    %v4689 = vpack.c.b16 %v4165, %v4161
    %v4690 = vpack.c.b16 %v4170, %v4166
    %v4691 = vpack.c.b16 %v4171, %v4167
    %v4692 = vpack.c.b16 %v4172, %v4168
    %v4693 = vpack.c.b16 %v4173, %v4169
    %v4694 = vpack.c.b16 %v4178, %v4174
    %v4695 = vpack.c.b16 %v4179, %v4175
    %v4696 = vpack.c.b16 %v4180, %v4176
    %v4697 = vpack.c.b16 %v4181, %v4177
    %v4698 = vpack.c.b16 %v4186, %v4182
    %v4699 = vpack.c.b16 %v4187, %v4183
    %v4700 = vpack.c.b16 %v4188, %v4184
    %v4701 = vpack.c.b16 %v4189, %v4185
    %v5215 = vperm.slane %v2653, 0
    %v5216 = vperm.slane %v2653, 1
    %v5217 = vperm.slane %v2653, 2
    %v5218 = vperm.slane %v2653, 3
    %5223 = vmatpush.bf16.msra.mxu0 %v4218
    %5224 = vmatpush.bf16.msra.mxu0 %v4214
    %5225 = vmatpush.bf16.msra.mxu0 %v4210
    %5226 = vmatpush.bf16.msra.mxu0 %v4206
    %5227 = vmatpush.bf16.msra.mxu0 %v4202
    %5228 = vmatpush.bf16.msra.mxu0 %v4198
    %5229 = vmatpush.bf16.msra.mxu0 %v4194
    %5230 = vmatpush.bf16.msra.mxu0 %v4190
    %5231 = vmatmul.bf16.gmra.mxu0 %v2125
    %v5232 = vpop.f32.mrf.mxu0
    %v5233 = vadd.f32 %v5215, %v5232
    %v5234 = vpop.f32.mrf.mxu0
    %5235 = vdwg.mxu0
    %5236 = vmatpush.bf16.msra.mxu0 %v4250
    %5237 = vmatpush.bf16.msra.mxu0 %v4246
    %5238 = vmatpush.bf16.msra.mxu0 %v4242
    %5239 = vmatpush.bf16.msra.mxu0 %v4238
    %5240 = vmatpush.bf16.msra.mxu0 %v4234
    %5241 = vmatpush.bf16.msra.mxu0 %v4230
    %5242 = vmatpush.bf16.msra.mxu0 %v4226
    %5243 = vmatpush.bf16.msra.mxu0 %v4222
    %5244 = vmatmul.bf16.gmra.mxu0 %v2126
    %v5245 = vpop.f32.mrf.mxu0
    %v5246 = vadd.f32 %v5233, %v5245
    %v5247 = vpop.f32.mrf.mxu0
    %5248 = vdwg.mxu0
    %5249 = vmatpush.bf16.msra.mxu0 %v4282
    %5250 = vmatpush.bf16.msra.mxu0 %v4278
    %5251 = vmatpush.bf16.msra.mxu0 %v4274
    %5252 = vmatpush.bf16.msra.mxu0 %v4270
    %5253 = vmatpush.bf16.msra.mxu0 %v4266
    %5254 = vmatpush.bf16.msra.mxu0 %v4262
    %5255 = vmatpush.bf16.msra.mxu0 %v4258
    %5256 = vmatpush.bf16.msra.mxu0 %v4254
    %5257 = vmatmul.bf16.gmra.mxu0 %v2127
    %v5258 = vpop.f32.mrf.mxu0
    %v5259 = vadd.f32 %v5246, %v5258
    %v5260 = vpop.f32.mrf.mxu0
    %5261 = vdwg.mxu0
    %5262 = vmatpush.bf16.msra.mxu0 %v4314
    %5263 = vmatpush.bf16.msra.mxu0 %v4310
    %5264 = vmatpush.bf16.msra.mxu0 %v4306
    %5265 = vmatpush.bf16.msra.mxu0 %v4302
    %5266 = vmatpush.bf16.msra.mxu0 %v4298
    %5267 = vmatpush.bf16.msra.mxu0 %v4294
    %5268 = vmatpush.bf16.msra.mxu0 %v4290
    %5269 = vmatpush.bf16.msra.mxu0 %v4286
    %5270 = vmatmul.bf16.gmra.mxu0 %v2128
    %v5271 = vpop.f32.mrf.mxu0
    %v5272 = vadd.f32 %v5259, %v5271
    %v5273 = vpop.f32.mrf.mxu0
    %5274 = vdwg.mxu0
    %5275 = vmatpush.bf16.msra.mxu0 %v4346
    %5276 = vmatpush.bf16.msra.mxu0 %v4342
    %5277 = vmatpush.bf16.msra.mxu0 %v4338
    %5278 = vmatpush.bf16.msra.mxu0 %v4334
    %5279 = vmatpush.bf16.msra.mxu0 %v4330
    %5280 = vmatpush.bf16.msra.mxu0 %v4326
    %5281 = vmatpush.bf16.msra.mxu0 %v4322
    %5282 = vmatpush.bf16.msra.mxu0 %v4318
    %5283 = vmatmul.bf16.gmra.mxu0 %v2129
    %v5284 = vpop.f32.mrf.mxu0
    %v5285 = vadd.f32 %v5272, %v5284
    %v5286 = vpop.f32.mrf.mxu0
    %5287 = vdwg.mxu0
    %5288 = vmatpush.bf16.msra.mxu0 %v4378
    %5289 = vmatpush.bf16.msra.mxu0 %v4374
    %5290 = vmatpush.bf16.msra.mxu0 %v4370
    %5291 = vmatpush.bf16.msra.mxu0 %v4366
    %5292 = vmatpush.bf16.msra.mxu0 %v4362
    %5293 = vmatpush.bf16.msra.mxu0 %v4358
    %5294 = vmatpush.bf16.msra.mxu0 %v4354
    %5295 = vmatpush.bf16.msra.mxu0 %v4350
    %5296 = vmatmul.bf16.gmra.mxu0 %v2130
    %v5297 = vpop.f32.mrf.mxu0
    %v5298 = vadd.f32 %v5285, %v5297
    %v5299 = vpop.f32.mrf.mxu0
    %5300 = vdwg.mxu0
    %5301 = vmatpush.bf16.msra.mxu0 %v4410
    %5302 = vmatpush.bf16.msra.mxu0 %v4406
    %5303 = vmatpush.bf16.msra.mxu0 %v4402
    %5304 = vmatpush.bf16.msra.mxu0 %v4398
    %5305 = vmatpush.bf16.msra.mxu0 %v4394
    %5306 = vmatpush.bf16.msra.mxu0 %v4390
    %5307 = vmatpush.bf16.msra.mxu0 %v4386
    %5308 = vmatpush.bf16.msra.mxu0 %v4382
    %5309 = vmatmul.bf16.gmra.mxu0 %v2131
    %v5310 = vpop.f32.mrf.mxu0
    %v5311 = vadd.f32 %v5298, %v5310
    %v5312 = vpop.f32.mrf.mxu0
    %5313 = vdwg.mxu0
    %5314 = vmatpush.bf16.msra.mxu0 %v4442
    %5315 = vmatpush.bf16.msra.mxu0 %v4438
    %5316 = vmatpush.bf16.msra.mxu0 %v4434
    %5317 = vmatpush.bf16.msra.mxu0 %v4430
    %5318 = vmatpush.bf16.msra.mxu0 %v4426
    %5319 = vmatpush.bf16.msra.mxu0 %v4422
    %5320 = vmatpush.bf16.msra.mxu0 %v4418
    %5321 = vmatpush.bf16.msra.mxu0 %v4414
    %5322 = vmatmul.bf16.gmra.mxu0 %v2132
    %v5323 = vpop.f32.mrf.mxu0
    %v5324 = vadd.f32 %v5311, %v5323
    %v5325 = vpop.f32.mrf.mxu0
    %5326 = vdwg.mxu0
    %5327 = vmatpush.bf16.msra.mxu0 %v4474
    %5328 = vmatpush.bf16.msra.mxu0 %v4470
    %5329 = vmatpush.bf16.msra.mxu0 %v4466
    %5330 = vmatpush.bf16.msra.mxu0 %v4462
    %5331 = vmatpush.bf16.msra.mxu0 %v4458
    %5332 = vmatpush.bf16.msra.mxu0 %v4454
    %5333 = vmatpush.bf16.msra.mxu0 %v4450
    %5334 = vmatpush.bf16.msra.mxu0 %v4446
    %5335 = vmatmul.bf16.gmra.mxu0 %v2133
    %v5336 = vpop.f32.mrf.mxu0
    %v5337 = vadd.f32 %v5324, %v5336
    %v5338 = vpop.f32.mrf.mxu0
    %5339 = vdwg.mxu0
    %5340 = vmatpush.bf16.msra.mxu0 %v4506
    %5341 = vmatpush.bf16.msra.mxu0 %v4502
    %5342 = vmatpush.bf16.msra.mxu0 %v4498
    %5343 = vmatpush.bf16.msra.mxu0 %v4494
    %5344 = vmatpush.bf16.msra.mxu0 %v4490
    %5345 = vmatpush.bf16.msra.mxu0 %v4486
    %5346 = vmatpush.bf16.msra.mxu0 %v4482
    %5347 = vmatpush.bf16.msra.mxu0 %v4478
    %5348 = vmatmul.bf16.gmra.mxu0 %v2134
    %v5349 = vpop.f32.mrf.mxu0
    %v5350 = vadd.f32 %v5337, %v5349
    %v5351 = vpop.f32.mrf.mxu0
    %5352 = vdwg.mxu0
    %5353 = vmatpush.bf16.msra.mxu0 %v4538
    %5354 = vmatpush.bf16.msra.mxu0 %v4534
    %5355 = vmatpush.bf16.msra.mxu0 %v4530
    %5356 = vmatpush.bf16.msra.mxu0 %v4526
    %5357 = vmatpush.bf16.msra.mxu0 %v4522
    %5358 = vmatpush.bf16.msra.mxu0 %v4518
    %5359 = vmatpush.bf16.msra.mxu0 %v4514
    %5360 = vmatpush.bf16.msra.mxu0 %v4510
    %5361 = vmatmul.bf16.gmra.mxu0 %v2135
    %v5362 = vpop.f32.mrf.mxu0
    %v5363 = vadd.f32 %v5350, %v5362
    %v5364 = vpop.f32.mrf.mxu0
    %5365 = vdwg.mxu0
    %5366 = vmatpush.bf16.msra.mxu0 %v4570
    %5367 = vmatpush.bf16.msra.mxu0 %v4566
    %5368 = vmatpush.bf16.msra.mxu0 %v4562
    %5369 = vmatpush.bf16.msra.mxu0 %v4558
    %5370 = vmatpush.bf16.msra.mxu0 %v4554
    %5371 = vmatpush.bf16.msra.mxu0 %v4550
    %5372 = vmatpush.bf16.msra.mxu0 %v4546
    %5373 = vmatpush.bf16.msra.mxu0 %v4542
    %5374 = vmatmul.bf16.gmra.mxu0 %v2136
    %v5375 = vpop.f32.mrf.mxu0
    %v5376 = vadd.f32 %v5363, %v5375
    %v5377 = vpop.f32.mrf.mxu0
    %5378 = vdwg.mxu0
    %5379 = vmatpush.bf16.msra.mxu0 %v4602
    %5380 = vmatpush.bf16.msra.mxu0 %v4598
    %5381 = vmatpush.bf16.msra.mxu0 %v4594
    %5382 = vmatpush.bf16.msra.mxu0 %v4590
    %5383 = vmatpush.bf16.msra.mxu0 %v4586
    %5384 = vmatpush.bf16.msra.mxu0 %v4582
    %5385 = vmatpush.bf16.msra.mxu0 %v4578
    %5386 = vmatpush.bf16.msra.mxu0 %v4574
    %5387 = vmatmul.bf16.gmra.mxu0 %v2137
    %v5388 = vpop.f32.mrf.mxu0
    %v5389 = vadd.f32 %v5376, %v5388
    %v5390 = vpop.f32.mrf.mxu0
    %5391 = vdwg.mxu0
    %5392 = vmatpush.bf16.msra.mxu0 %v4634
    %5393 = vmatpush.bf16.msra.mxu0 %v4630
    %5394 = vmatpush.bf16.msra.mxu0 %v4626
    %5395 = vmatpush.bf16.msra.mxu0 %v4622
    %5396 = vmatpush.bf16.msra.mxu0 %v4618
    %5397 = vmatpush.bf16.msra.mxu0 %v4614
    %5398 = vmatpush.bf16.msra.mxu0 %v4610
    %5399 = vmatpush.bf16.msra.mxu0 %v4606
    %5400 = vmatmul.bf16.gmra.mxu0 %v2138
    %v5401 = vpop.f32.mrf.mxu0
    %v5402 = vadd.f32 %v5389, %v5401
    %v5403 = vpop.f32.mrf.mxu0
    %5404 = vdwg.mxu0
    %5405 = vmatpush.bf16.msra.mxu0 %v4666
    %5406 = vmatpush.bf16.msra.mxu0 %v4662
    %5407 = vmatpush.bf16.msra.mxu0 %v4658
    %5408 = vmatpush.bf16.msra.mxu0 %v4654
    %5409 = vmatpush.bf16.msra.mxu0 %v4650
    %5410 = vmatpush.bf16.msra.mxu0 %v4646
    %5411 = vmatpush.bf16.msra.mxu0 %v4642
    %5412 = vmatpush.bf16.msra.mxu0 %v4638
    %5413 = vmatmul.bf16.gmra.mxu0 %v2139
    %v5414 = vpop.f32.mrf.mxu0
    %v5415 = vadd.f32 %v5402, %v5414
    %v5416 = vpop.f32.mrf.mxu0
    %5417 = vdwg.mxu0
    %5418 = vmatpush.bf16.msra.mxu0 %v4698
    %5419 = vmatpush.bf16.msra.mxu0 %v4694
    %5420 = vmatpush.bf16.msra.mxu0 %v4690
    %5421 = vmatpush.bf16.msra.mxu0 %v4686
    %5422 = vmatpush.bf16.msra.mxu0 %v4682
    %5423 = vmatpush.bf16.msra.mxu0 %v4678
    %5424 = vmatpush.bf16.msra.mxu0 %v4674
    %5425 = vmatpush.bf16.msra.mxu0 %v4670
    %5426 = vmatmul.bf16.gmra.mxu0 %v2140
    %v5427 = vpop.f32.mrf.mxu0
    %v5428 = vadd.f32 %v5415, %v5427
    %v5429 = vpop.f32.mrf.mxu0
    %5430 = vdwg.mxu0
    %5431 = vmatpush.bf16.msra.mxu0 %v4219
    %5432 = vmatpush.bf16.msra.mxu0 %v4215
    %5433 = vmatpush.bf16.msra.mxu0 %v4211
    %5434 = vmatpush.bf16.msra.mxu0 %v4207
    %5435 = vmatpush.bf16.msra.mxu0 %v4203
    %5436 = vmatpush.bf16.msra.mxu0 %v4199
    %5437 = vmatpush.bf16.msra.mxu0 %v4195
    %5438 = vmatpush.bf16.msra.mxu0 %v4191
    %5439 = vmatmul.bf16.gmra.mxu0 %v2125
    %v5440 = vpop.f32.mrf.mxu0
    %v5441 = vadd.f32 %v5216, %v5440
    %v5442 = vpop.f32.mrf.mxu0
    %5443 = vdwg.mxu0
    %5444 = vmatpush.bf16.msra.mxu0 %v4251
    %5445 = vmatpush.bf16.msra.mxu0 %v4247
    %5446 = vmatpush.bf16.msra.mxu0 %v4243
    %5447 = vmatpush.bf16.msra.mxu0 %v4239
    %5448 = vmatpush.bf16.msra.mxu0 %v4235
    %5449 = vmatpush.bf16.msra.mxu0 %v4231
    %5450 = vmatpush.bf16.msra.mxu0 %v4227
    %5451 = vmatpush.bf16.msra.mxu0 %v4223
    %5452 = vmatmul.bf16.gmra.mxu0 %v2126
    %v5453 = vpop.f32.mrf.mxu0
    %v5454 = vadd.f32 %v5441, %v5453
    %v5455 = vpop.f32.mrf.mxu0
    %5456 = vdwg.mxu0
    %5457 = vmatpush.bf16.msra.mxu0 %v4283
    %5458 = vmatpush.bf16.msra.mxu0 %v4279
    %5459 = vmatpush.bf16.msra.mxu0 %v4275
    %5460 = vmatpush.bf16.msra.mxu0 %v4271
    %5461 = vmatpush.bf16.msra.mxu0 %v4267
    %5462 = vmatpush.bf16.msra.mxu0 %v4263
    %5463 = vmatpush.bf16.msra.mxu0 %v4259
    %5464 = vmatpush.bf16.msra.mxu0 %v4255
    %5465 = vmatmul.bf16.gmra.mxu0 %v2127
    %v5466 = vpop.f32.mrf.mxu0
    %v5467 = vadd.f32 %v5454, %v5466
    %v5468 = vpop.f32.mrf.mxu0
    %5469 = vdwg.mxu0
    %5470 = vmatpush.bf16.msra.mxu0 %v4315
    %5471 = vmatpush.bf16.msra.mxu0 %v4311
    %5472 = vmatpush.bf16.msra.mxu0 %v4307
    %5473 = vmatpush.bf16.msra.mxu0 %v4303
    %5474 = vmatpush.bf16.msra.mxu0 %v4299
    %5475 = vmatpush.bf16.msra.mxu0 %v4295
    %5476 = vmatpush.bf16.msra.mxu0 %v4291
    %5477 = vmatpush.bf16.msra.mxu0 %v4287
    %5478 = vmatmul.bf16.gmra.mxu0 %v2128
    %v5479 = vpop.f32.mrf.mxu0
    %v5480 = vadd.f32 %v5467, %v5479
    %v5481 = vpop.f32.mrf.mxu0
    %5482 = vdwg.mxu0
    %5483 = vmatpush.bf16.msra.mxu0 %v4347
    %5484 = vmatpush.bf16.msra.mxu0 %v4343
    %5485 = vmatpush.bf16.msra.mxu0 %v4339
    %5486 = vmatpush.bf16.msra.mxu0 %v4335
    %5487 = vmatpush.bf16.msra.mxu0 %v4331
    %5488 = vmatpush.bf16.msra.mxu0 %v4327
    %5489 = vmatpush.bf16.msra.mxu0 %v4323
    %5490 = vmatpush.bf16.msra.mxu0 %v4319
    %5491 = vmatmul.bf16.gmra.mxu0 %v2129
    %v5492 = vpop.f32.mrf.mxu0
    %v5493 = vadd.f32 %v5480, %v5492
    %v5494 = vpop.f32.mrf.mxu0
    %5495 = vdwg.mxu0
    %5496 = vmatpush.bf16.msra.mxu0 %v4379
    %5497 = vmatpush.bf16.msra.mxu0 %v4375
    %5498 = vmatpush.bf16.msra.mxu0 %v4371
    %5499 = vmatpush.bf16.msra.mxu0 %v4367
    %5500 = vmatpush.bf16.msra.mxu0 %v4363
    %5501 = vmatpush.bf16.msra.mxu0 %v4359
    %5502 = vmatpush.bf16.msra.mxu0 %v4355
    %5503 = vmatpush.bf16.msra.mxu0 %v4351
    %5504 = vmatmul.bf16.gmra.mxu0 %v2130
    %v5505 = vpop.f32.mrf.mxu0
    %v5506 = vadd.f32 %v5493, %v5505
    %v5507 = vpop.f32.mrf.mxu0
    %5508 = vdwg.mxu0
    %5509 = vmatpush.bf16.msra.mxu0 %v4411
    %5510 = vmatpush.bf16.msra.mxu0 %v4407
    %5511 = vmatpush.bf16.msra.mxu0 %v4403
    %5512 = vmatpush.bf16.msra.mxu0 %v4399
    %5513 = vmatpush.bf16.msra.mxu0 %v4395
    %5514 = vmatpush.bf16.msra.mxu0 %v4391
    %5515 = vmatpush.bf16.msra.mxu0 %v4387
    %5516 = vmatpush.bf16.msra.mxu0 %v4383
    %5517 = vmatmul.bf16.gmra.mxu0 %v2131
    %v5518 = vpop.f32.mrf.mxu0
    %v5519 = vadd.f32 %v5506, %v5518
    %v5520 = vpop.f32.mrf.mxu0
    %5521 = vdwg.mxu0
    %5522 = vmatpush.bf16.msra.mxu0 %v4443
    %5523 = vmatpush.bf16.msra.mxu0 %v4439
    %5524 = vmatpush.bf16.msra.mxu0 %v4435
    %5525 = vmatpush.bf16.msra.mxu0 %v4431
    %5526 = vmatpush.bf16.msra.mxu0 %v4427
    %5527 = vmatpush.bf16.msra.mxu0 %v4423
    %5528 = vmatpush.bf16.msra.mxu0 %v4419
    %5529 = vmatpush.bf16.msra.mxu0 %v4415
    %5530 = vmatmul.bf16.gmra.mxu0 %v2132
    %v5531 = vpop.f32.mrf.mxu0
    %v5532 = vadd.f32 %v5519, %v5531
    %v5533 = vpop.f32.mrf.mxu0
    %5534 = vdwg.mxu0
    %5535 = vmatpush.bf16.msra.mxu0 %v4475
    %5536 = vmatpush.bf16.msra.mxu0 %v4471
    %5537 = vmatpush.bf16.msra.mxu0 %v4467
    %5538 = vmatpush.bf16.msra.mxu0 %v4463
    %5539 = vmatpush.bf16.msra.mxu0 %v4459
    %5540 = vmatpush.bf16.msra.mxu0 %v4455
    %5541 = vmatpush.bf16.msra.mxu0 %v4451
    %5542 = vmatpush.bf16.msra.mxu0 %v4447
    %5543 = vmatmul.bf16.gmra.mxu0 %v2133
    %v5544 = vpop.f32.mrf.mxu0
    %v5545 = vadd.f32 %v5532, %v5544
    %v5546 = vpop.f32.mrf.mxu0
    %5547 = vdwg.mxu0
    %5548 = vmatpush.bf16.msra.mxu0 %v4507
    %5549 = vmatpush.bf16.msra.mxu0 %v4503
    %5550 = vmatpush.bf16.msra.mxu0 %v4499
    %5551 = vmatpush.bf16.msra.mxu0 %v4495
    %5552 = vmatpush.bf16.msra.mxu0 %v4491
    %5553 = vmatpush.bf16.msra.mxu0 %v4487
    %5554 = vmatpush.bf16.msra.mxu0 %v4483
    %5555 = vmatpush.bf16.msra.mxu0 %v4479
    %5556 = vmatmul.bf16.gmra.mxu0 %v2134
    %v5557 = vpop.f32.mrf.mxu0
    %v5558 = vadd.f32 %v5545, %v5557
    %v5559 = vpop.f32.mrf.mxu0
    %5560 = vdwg.mxu0
    %5561 = vmatpush.bf16.msra.mxu0 %v4539
    %5562 = vmatpush.bf16.msra.mxu0 %v4535
    %5563 = vmatpush.bf16.msra.mxu0 %v4531
    %5564 = vmatpush.bf16.msra.mxu0 %v4527
    %5565 = vmatpush.bf16.msra.mxu0 %v4523
    %5566 = vmatpush.bf16.msra.mxu0 %v4519
    %5567 = vmatpush.bf16.msra.mxu0 %v4515
    %5568 = vmatpush.bf16.msra.mxu0 %v4511
    %5569 = vmatmul.bf16.gmra.mxu0 %v2135
    %v5570 = vpop.f32.mrf.mxu0
    %v5571 = vadd.f32 %v5558, %v5570
    %v5572 = vpop.f32.mrf.mxu0
    %5573 = vdwg.mxu0
    %5574 = vmatpush.bf16.msra.mxu0 %v4571
    %5575 = vmatpush.bf16.msra.mxu0 %v4567
    %5576 = vmatpush.bf16.msra.mxu0 %v4563
    %5577 = vmatpush.bf16.msra.mxu0 %v4559
    %5578 = vmatpush.bf16.msra.mxu0 %v4555
    %5579 = vmatpush.bf16.msra.mxu0 %v4551
    %5580 = vmatpush.bf16.msra.mxu0 %v4547
    %5581 = vmatpush.bf16.msra.mxu0 %v4543
    %5582 = vmatmul.bf16.gmra.mxu0 %v2136
    %v5583 = vpop.f32.mrf.mxu0
    %v5584 = vadd.f32 %v5571, %v5583
    %v5585 = vpop.f32.mrf.mxu0
    %5586 = vdwg.mxu0
    %5587 = vmatpush.bf16.msra.mxu0 %v4603
    %5588 = vmatpush.bf16.msra.mxu0 %v4599
    %5589 = vmatpush.bf16.msra.mxu0 %v4595
    %5590 = vmatpush.bf16.msra.mxu0 %v4591
    %5591 = vmatpush.bf16.msra.mxu0 %v4587
    %5592 = vmatpush.bf16.msra.mxu0 %v4583
    %5593 = vmatpush.bf16.msra.mxu0 %v4579
    %5594 = vmatpush.bf16.msra.mxu0 %v4575
    %5595 = vmatmul.bf16.gmra.mxu0 %v2137
    %v5596 = vpop.f32.mrf.mxu0
    %v5597 = vadd.f32 %v5584, %v5596
    %v5598 = vpop.f32.mrf.mxu0
    %5599 = vdwg.mxu0
    %5600 = vmatpush.bf16.msra.mxu0 %v4635
    %5601 = vmatpush.bf16.msra.mxu0 %v4631
    %5602 = vmatpush.bf16.msra.mxu0 %v4627
    %5603 = vmatpush.bf16.msra.mxu0 %v4623
    %5604 = vmatpush.bf16.msra.mxu0 %v4619
    %5605 = vmatpush.bf16.msra.mxu0 %v4615
    %5606 = vmatpush.bf16.msra.mxu0 %v4611
    %5607 = vmatpush.bf16.msra.mxu0 %v4607
    %5608 = vmatmul.bf16.gmra.mxu0 %v2138
    %v5609 = vpop.f32.mrf.mxu0
    %v5610 = vadd.f32 %v5597, %v5609
    %v5611 = vpop.f32.mrf.mxu0
    %5612 = vdwg.mxu0
    %5613 = vmatpush.bf16.msra.mxu0 %v4667
    %5614 = vmatpush.bf16.msra.mxu0 %v4663
    %5615 = vmatpush.bf16.msra.mxu0 %v4659
    %5616 = vmatpush.bf16.msra.mxu0 %v4655
    %5617 = vmatpush.bf16.msra.mxu0 %v4651
    %5618 = vmatpush.bf16.msra.mxu0 %v4647
    %5619 = vmatpush.bf16.msra.mxu0 %v4643
    %5620 = vmatpush.bf16.msra.mxu0 %v4639
    %5621 = vmatmul.bf16.gmra.mxu0 %v2139
    %v5622 = vpop.f32.mrf.mxu0
    %v5623 = vadd.f32 %v5610, %v5622
    %v5624 = vpop.f32.mrf.mxu0
    %5625 = vdwg.mxu0
    %5626 = vmatpush.bf16.msra.mxu0 %v4699
    %5627 = vmatpush.bf16.msra.mxu0 %v4695
    %5628 = vmatpush.bf16.msra.mxu0 %v4691
    %5629 = vmatpush.bf16.msra.mxu0 %v4687
    %5630 = vmatpush.bf16.msra.mxu0 %v4683
    %5631 = vmatpush.bf16.msra.mxu0 %v4679
    %5632 = vmatpush.bf16.msra.mxu0 %v4675
    %5633 = vmatpush.bf16.msra.mxu0 %v4671
    %5634 = vmatmul.bf16.gmra.mxu0 %v2140
    %v5635 = vpop.f32.mrf.mxu0
    %v5636 = vadd.f32 %v5623, %v5635
    %v5637 = vpop.f32.mrf.mxu0
    %5638 = vdwg.mxu0
    %5639 = vmatpush.bf16.msra.mxu0 %v4220
    %5640 = vmatpush.bf16.msra.mxu0 %v4216
    %5641 = vmatpush.bf16.msra.mxu0 %v4212
    %5642 = vmatpush.bf16.msra.mxu0 %v4208
    %5643 = vmatpush.bf16.msra.mxu0 %v4204
    %5644 = vmatpush.bf16.msra.mxu0 %v4200
    %5645 = vmatpush.bf16.msra.mxu0 %v4196
    %5646 = vmatpush.bf16.msra.mxu0 %v4192
    %5647 = vmatmul.bf16.gmra.mxu0 %v2125
    %v5648 = vpop.f32.mrf.mxu0
    %v5649 = vadd.f32 %v5217, %v5648
    %v5650 = vpop.f32.mrf.mxu0
    %5651 = vdwg.mxu0
    %5652 = vmatpush.bf16.msra.mxu0 %v4252
    %5653 = vmatpush.bf16.msra.mxu0 %v4248
    %5654 = vmatpush.bf16.msra.mxu0 %v4244
    %5655 = vmatpush.bf16.msra.mxu0 %v4240
    %5656 = vmatpush.bf16.msra.mxu0 %v4236
    %5657 = vmatpush.bf16.msra.mxu0 %v4232
    %5658 = vmatpush.bf16.msra.mxu0 %v4228
    %5659 = vmatpush.bf16.msra.mxu0 %v4224
    %5660 = vmatmul.bf16.gmra.mxu0 %v2126
    %v5661 = vpop.f32.mrf.mxu0
    %v5662 = vadd.f32 %v5649, %v5661
    %v5663 = vpop.f32.mrf.mxu0
    %5664 = vdwg.mxu0
    %5665 = vmatpush.bf16.msra.mxu0 %v4284
    %5666 = vmatpush.bf16.msra.mxu0 %v4280
    %5667 = vmatpush.bf16.msra.mxu0 %v4276
    %5668 = vmatpush.bf16.msra.mxu0 %v4272
    %5669 = vmatpush.bf16.msra.mxu0 %v4268
    %5670 = vmatpush.bf16.msra.mxu0 %v4264
    %5671 = vmatpush.bf16.msra.mxu0 %v4260
    %5672 = vmatpush.bf16.msra.mxu0 %v4256
    %5673 = vmatmul.bf16.gmra.mxu0 %v2127
    %v5674 = vpop.f32.mrf.mxu0
    %v5675 = vadd.f32 %v5662, %v5674
    %v5676 = vpop.f32.mrf.mxu0
    %5677 = vdwg.mxu0
    %5678 = vmatpush.bf16.msra.mxu0 %v4316
    %5679 = vmatpush.bf16.msra.mxu0 %v4312
    %5680 = vmatpush.bf16.msra.mxu0 %v4308
    %5681 = vmatpush.bf16.msra.mxu0 %v4304
    %5682 = vmatpush.bf16.msra.mxu0 %v4300
    %5683 = vmatpush.bf16.msra.mxu0 %v4296
    %5684 = vmatpush.bf16.msra.mxu0 %v4292
    %5685 = vmatpush.bf16.msra.mxu0 %v4288
    %5686 = vmatmul.bf16.gmra.mxu0 %v2128
    %v5687 = vpop.f32.mrf.mxu0
    %v5688 = vadd.f32 %v5675, %v5687
    %v5689 = vpop.f32.mrf.mxu0
    %5690 = vdwg.mxu0
    %5691 = vmatpush.bf16.msra.mxu0 %v4348
    %5692 = vmatpush.bf16.msra.mxu0 %v4344
    %5693 = vmatpush.bf16.msra.mxu0 %v4340
    %5694 = vmatpush.bf16.msra.mxu0 %v4336
    %5695 = vmatpush.bf16.msra.mxu0 %v4332
    %5696 = vmatpush.bf16.msra.mxu0 %v4328
    %5697 = vmatpush.bf16.msra.mxu0 %v4324
    %5698 = vmatpush.bf16.msra.mxu0 %v4320
    %5699 = vmatmul.bf16.gmra.mxu0 %v2129
    %v5700 = vpop.f32.mrf.mxu0
    %v5701 = vadd.f32 %v5688, %v5700
    %v5702 = vpop.f32.mrf.mxu0
    %5703 = vdwg.mxu0
    %5704 = vmatpush.bf16.msra.mxu0 %v4380
    %5705 = vmatpush.bf16.msra.mxu0 %v4376
    %5706 = vmatpush.bf16.msra.mxu0 %v4372
    %5707 = vmatpush.bf16.msra.mxu0 %v4368
    %5708 = vmatpush.bf16.msra.mxu0 %v4364
    %5709 = vmatpush.bf16.msra.mxu0 %v4360
    %5710 = vmatpush.bf16.msra.mxu0 %v4356
    %5711 = vmatpush.bf16.msra.mxu0 %v4352
    %5712 = vmatmul.bf16.gmra.mxu0 %v2130
    %v5713 = vpop.f32.mrf.mxu0
    %v5714 = vadd.f32 %v5701, %v5713
    %v5715 = vpop.f32.mrf.mxu0
    %5716 = vdwg.mxu0
    %5717 = vmatpush.bf16.msra.mxu0 %v4412
    %5718 = vmatpush.bf16.msra.mxu0 %v4408
    %5719 = vmatpush.bf16.msra.mxu0 %v4404
    %5720 = vmatpush.bf16.msra.mxu0 %v4400
    %5721 = vmatpush.bf16.msra.mxu0 %v4396
    %5722 = vmatpush.bf16.msra.mxu0 %v4392
    %5723 = vmatpush.bf16.msra.mxu0 %v4388
    %5724 = vmatpush.bf16.msra.mxu0 %v4384
    %5725 = vmatmul.bf16.gmra.mxu0 %v2131
    %v5726 = vpop.f32.mrf.mxu0
    %v5727 = vadd.f32 %v5714, %v5726
    %v5728 = vpop.f32.mrf.mxu0
    %5729 = vdwg.mxu0
    %5730 = vmatpush.bf16.msra.mxu0 %v4444
    %5731 = vmatpush.bf16.msra.mxu0 %v4440
    %5732 = vmatpush.bf16.msra.mxu0 %v4436
    %5733 = vmatpush.bf16.msra.mxu0 %v4432
    %5734 = vmatpush.bf16.msra.mxu0 %v4428
    %5735 = vmatpush.bf16.msra.mxu0 %v4424
    %5736 = vmatpush.bf16.msra.mxu0 %v4420
    %5737 = vmatpush.bf16.msra.mxu0 %v4416
    %5738 = vmatmul.bf16.gmra.mxu0 %v2132
    %v5739 = vpop.f32.mrf.mxu0
    %v5740 = vadd.f32 %v5727, %v5739
    %v5741 = vpop.f32.mrf.mxu0
    %5742 = vdwg.mxu0
    %5743 = vmatpush.bf16.msra.mxu0 %v4476
    %5744 = vmatpush.bf16.msra.mxu0 %v4472
    %5745 = vmatpush.bf16.msra.mxu0 %v4468
    %5746 = vmatpush.bf16.msra.mxu0 %v4464
    %5747 = vmatpush.bf16.msra.mxu0 %v4460
    %5748 = vmatpush.bf16.msra.mxu0 %v4456
    %5749 = vmatpush.bf16.msra.mxu0 %v4452
    %5750 = vmatpush.bf16.msra.mxu0 %v4448
    %5751 = vmatmul.bf16.gmra.mxu0 %v2133
    %v5752 = vpop.f32.mrf.mxu0
    %v5753 = vadd.f32 %v5740, %v5752
    %v5754 = vpop.f32.mrf.mxu0
    %5755 = vdwg.mxu0
    %5756 = vmatpush.bf16.msra.mxu0 %v4508
    %5757 = vmatpush.bf16.msra.mxu0 %v4504
    %5758 = vmatpush.bf16.msra.mxu0 %v4500
    %5759 = vmatpush.bf16.msra.mxu0 %v4496
    %5760 = vmatpush.bf16.msra.mxu0 %v4492
    %5761 = vmatpush.bf16.msra.mxu0 %v4488
    %5762 = vmatpush.bf16.msra.mxu0 %v4484
    %5763 = vmatpush.bf16.msra.mxu0 %v4480
    %5764 = vmatmul.bf16.gmra.mxu0 %v2134
    %v5765 = vpop.f32.mrf.mxu0
    %v5766 = vadd.f32 %v5753, %v5765
    %v5767 = vpop.f32.mrf.mxu0
    %5768 = vdwg.mxu0
    %5769 = vmatpush.bf16.msra.mxu0 %v4540
    %5770 = vmatpush.bf16.msra.mxu0 %v4536
    %5771 = vmatpush.bf16.msra.mxu0 %v4532
    %5772 = vmatpush.bf16.msra.mxu0 %v4528
    %5773 = vmatpush.bf16.msra.mxu0 %v4524
    %5774 = vmatpush.bf16.msra.mxu0 %v4520
    %5775 = vmatpush.bf16.msra.mxu0 %v4516
    %5776 = vmatpush.bf16.msra.mxu0 %v4512
    %5777 = vmatmul.bf16.gmra.mxu0 %v2135
    %v5778 = vpop.f32.mrf.mxu0
    %v5779 = vadd.f32 %v5766, %v5778
    %v5780 = vpop.f32.mrf.mxu0
    %5781 = vdwg.mxu0
    %5782 = vmatpush.bf16.msra.mxu0 %v4572
    %5783 = vmatpush.bf16.msra.mxu0 %v4568
    %5784 = vmatpush.bf16.msra.mxu0 %v4564
    %5785 = vmatpush.bf16.msra.mxu0 %v4560
    %5786 = vmatpush.bf16.msra.mxu0 %v4556
    %5787 = vmatpush.bf16.msra.mxu0 %v4552
    %5788 = vmatpush.bf16.msra.mxu0 %v4548
    %5789 = vmatpush.bf16.msra.mxu0 %v4544
    %5790 = vmatmul.bf16.gmra.mxu0 %v2136
    %v5791 = vpop.f32.mrf.mxu0
    %v5792 = vadd.f32 %v5779, %v5791
    %v5793 = vpop.f32.mrf.mxu0
    %5794 = vdwg.mxu0
    %5795 = vmatpush.bf16.msra.mxu0 %v4604
    %5796 = vmatpush.bf16.msra.mxu0 %v4600
    %5797 = vmatpush.bf16.msra.mxu0 %v4596
    %5798 = vmatpush.bf16.msra.mxu0 %v4592
    %5799 = vmatpush.bf16.msra.mxu0 %v4588
    %5800 = vmatpush.bf16.msra.mxu0 %v4584
    %5801 = vmatpush.bf16.msra.mxu0 %v4580
    %5802 = vmatpush.bf16.msra.mxu0 %v4576
    %5803 = vmatmul.bf16.gmra.mxu0 %v2137
    %v5804 = vpop.f32.mrf.mxu0
    %v5805 = vadd.f32 %v5792, %v5804
    %v5806 = vpop.f32.mrf.mxu0
    %5807 = vdwg.mxu0
    %5808 = vmatpush.bf16.msra.mxu0 %v4636
    %5809 = vmatpush.bf16.msra.mxu0 %v4632
    %5810 = vmatpush.bf16.msra.mxu0 %v4628
    %5811 = vmatpush.bf16.msra.mxu0 %v4624
    %5812 = vmatpush.bf16.msra.mxu0 %v4620
    %5813 = vmatpush.bf16.msra.mxu0 %v4616
    %5814 = vmatpush.bf16.msra.mxu0 %v4612
    %5815 = vmatpush.bf16.msra.mxu0 %v4608
    %5816 = vmatmul.bf16.gmra.mxu0 %v2138
    %v5817 = vpop.f32.mrf.mxu0
    %v5818 = vadd.f32 %v5805, %v5817
    %v5819 = vpop.f32.mrf.mxu0
    %5820 = vdwg.mxu0
    %5821 = vmatpush.bf16.msra.mxu0 %v4668
    %5822 = vmatpush.bf16.msra.mxu0 %v4664
    %5823 = vmatpush.bf16.msra.mxu0 %v4660
    %5824 = vmatpush.bf16.msra.mxu0 %v4656
    %5825 = vmatpush.bf16.msra.mxu0 %v4652
    %5826 = vmatpush.bf16.msra.mxu0 %v4648
    %5827 = vmatpush.bf16.msra.mxu0 %v4644
    %5828 = vmatpush.bf16.msra.mxu0 %v4640
    %5829 = vmatmul.bf16.gmra.mxu0 %v2139
    %v5830 = vpop.f32.mrf.mxu0
    %v5831 = vadd.f32 %v5818, %v5830
    %v5832 = vpop.f32.mrf.mxu0
    %5833 = vdwg.mxu0
    %5834 = vmatpush.bf16.msra.mxu0 %v4700
    %5835 = vmatpush.bf16.msra.mxu0 %v4696
    %5836 = vmatpush.bf16.msra.mxu0 %v4692
    %5837 = vmatpush.bf16.msra.mxu0 %v4688
    %5838 = vmatpush.bf16.msra.mxu0 %v4684
    %5839 = vmatpush.bf16.msra.mxu0 %v4680
    %5840 = vmatpush.bf16.msra.mxu0 %v4676
    %5841 = vmatpush.bf16.msra.mxu0 %v4672
    %5842 = vmatmul.bf16.gmra.mxu0 %v2140
    %v5843 = vpop.f32.mrf.mxu0
    %v5844 = vadd.f32 %v5831, %v5843
    %v5845 = vpop.f32.mrf.mxu0
    %5846 = vdwg.mxu0
    %5847 = vmatpush.bf16.msra.mxu0 %v4221
    %5848 = vmatpush.bf16.msra.mxu0 %v4217
    %5849 = vmatpush.bf16.msra.mxu0 %v4213
    %5850 = vmatpush.bf16.msra.mxu0 %v4209
    %5851 = vmatpush.bf16.msra.mxu0 %v4205
    %5852 = vmatpush.bf16.msra.mxu0 %v4201
    %5853 = vmatpush.bf16.msra.mxu0 %v4197
    %5854 = vmatpush.bf16.msra.mxu0 %v4193
    %5855 = vmatmul.bf16.gmra.mxu0 %v2125
    %v5856 = vpop.f32.mrf.mxu0
    %v5857 = vadd.f32 %v5218, %v5856
    %v5858 = vpop.f32.mrf.mxu0
    %5859 = vdwg.mxu0
    %5860 = vmatpush.bf16.msra.mxu0 %v4253
    %5861 = vmatpush.bf16.msra.mxu0 %v4249
    %5862 = vmatpush.bf16.msra.mxu0 %v4245
    %5863 = vmatpush.bf16.msra.mxu0 %v4241
    %5864 = vmatpush.bf16.msra.mxu0 %v4237
    %5865 = vmatpush.bf16.msra.mxu0 %v4233
    %5866 = vmatpush.bf16.msra.mxu0 %v4229
    %5867 = vmatpush.bf16.msra.mxu0 %v4225
    %5868 = vmatmul.bf16.gmra.mxu0 %v2126
    %v5869 = vpop.f32.mrf.mxu0
    %v5870 = vadd.f32 %v5857, %v5869
    %v5871 = vpop.f32.mrf.mxu0
    %5872 = vdwg.mxu0
    %5873 = vmatpush.bf16.msra.mxu0 %v4285
    %5874 = vmatpush.bf16.msra.mxu0 %v4281
    %5875 = vmatpush.bf16.msra.mxu0 %v4277
    %5876 = vmatpush.bf16.msra.mxu0 %v4273
    %5877 = vmatpush.bf16.msra.mxu0 %v4269
    %5878 = vmatpush.bf16.msra.mxu0 %v4265
    %5879 = vmatpush.bf16.msra.mxu0 %v4261
    %5880 = vmatpush.bf16.msra.mxu0 %v4257
    %5881 = vmatmul.bf16.gmra.mxu0 %v2127
    %v5882 = vpop.f32.mrf.mxu0
    %v5883 = vadd.f32 %v5870, %v5882
    %v5884 = vpop.f32.mrf.mxu0
    %5885 = vdwg.mxu0
    %5886 = vmatpush.bf16.msra.mxu0 %v4317
    %5887 = vmatpush.bf16.msra.mxu0 %v4313
    %5888 = vmatpush.bf16.msra.mxu0 %v4309
    %5889 = vmatpush.bf16.msra.mxu0 %v4305
    %5890 = vmatpush.bf16.msra.mxu0 %v4301
    %5891 = vmatpush.bf16.msra.mxu0 %v4297
    %5892 = vmatpush.bf16.msra.mxu0 %v4293
    %5893 = vmatpush.bf16.msra.mxu0 %v4289
    %5894 = vmatmul.bf16.gmra.mxu0 %v2128
    %v5895 = vpop.f32.mrf.mxu0
    %v5896 = vadd.f32 %v5883, %v5895
    %v5897 = vpop.f32.mrf.mxu0
    %5898 = vdwg.mxu0
    %5899 = vmatpush.bf16.msra.mxu0 %v4349
    %5900 = vmatpush.bf16.msra.mxu0 %v4345
    %5901 = vmatpush.bf16.msra.mxu0 %v4341
    %5902 = vmatpush.bf16.msra.mxu0 %v4337
    %5903 = vmatpush.bf16.msra.mxu0 %v4333
    %5904 = vmatpush.bf16.msra.mxu0 %v4329
    %5905 = vmatpush.bf16.msra.mxu0 %v4325
    %5906 = vmatpush.bf16.msra.mxu0 %v4321
    %5907 = vmatmul.bf16.gmra.mxu0 %v2129
    %v5908 = vpop.f32.mrf.mxu0
    %v5909 = vadd.f32 %v5896, %v5908
    %v5910 = vpop.f32.mrf.mxu0
    %5911 = vdwg.mxu0
    %5912 = vmatpush.bf16.msra.mxu0 %v4381
    %5913 = vmatpush.bf16.msra.mxu0 %v4377
    %5914 = vmatpush.bf16.msra.mxu0 %v4373
    %5915 = vmatpush.bf16.msra.mxu0 %v4369
    %5916 = vmatpush.bf16.msra.mxu0 %v4365
    %5917 = vmatpush.bf16.msra.mxu0 %v4361
    %5918 = vmatpush.bf16.msra.mxu0 %v4357
    %5919 = vmatpush.bf16.msra.mxu0 %v4353
    %5920 = vmatmul.bf16.gmra.mxu0 %v2130
    %v5921 = vpop.f32.mrf.mxu0
    %v5922 = vadd.f32 %v5909, %v5921
    %v5923 = vpop.f32.mrf.mxu0
    %5924 = vdwg.mxu0
    %5925 = vmatpush.bf16.msra.mxu0 %v4413
    %5926 = vmatpush.bf16.msra.mxu0 %v4409
    %5927 = vmatpush.bf16.msra.mxu0 %v4405
    %5928 = vmatpush.bf16.msra.mxu0 %v4401
    %5929 = vmatpush.bf16.msra.mxu0 %v4397
    %5930 = vmatpush.bf16.msra.mxu0 %v4393
    %5931 = vmatpush.bf16.msra.mxu0 %v4389
    %5932 = vmatpush.bf16.msra.mxu0 %v4385
    %5933 = vmatmul.bf16.gmra.mxu0 %v2131
    %v5934 = vpop.f32.mrf.mxu0
    %v5935 = vadd.f32 %v5922, %v5934
    %v5936 = vpop.f32.mrf.mxu0
    %5937 = vdwg.mxu0
    %5938 = vmatpush.bf16.msra.mxu0 %v4445
    %5939 = vmatpush.bf16.msra.mxu0 %v4441
    %5940 = vmatpush.bf16.msra.mxu0 %v4437
    %5941 = vmatpush.bf16.msra.mxu0 %v4433
    %5942 = vmatpush.bf16.msra.mxu0 %v4429
    %5943 = vmatpush.bf16.msra.mxu0 %v4425
    %5944 = vmatpush.bf16.msra.mxu0 %v4421
    %5945 = vmatpush.bf16.msra.mxu0 %v4417
    %5946 = vmatmul.bf16.gmra.mxu0 %v2132
    %v5947 = vpop.f32.mrf.mxu0
    %v5948 = vadd.f32 %v5935, %v5947
    %v5949 = vpop.f32.mrf.mxu0
    %5950 = vdwg.mxu0
    %5951 = vmatpush.bf16.msra.mxu0 %v4477
    %5952 = vmatpush.bf16.msra.mxu0 %v4473
    %5953 = vmatpush.bf16.msra.mxu0 %v4469
    %5954 = vmatpush.bf16.msra.mxu0 %v4465
    %5955 = vmatpush.bf16.msra.mxu0 %v4461
    %5956 = vmatpush.bf16.msra.mxu0 %v4457
    %5957 = vmatpush.bf16.msra.mxu0 %v4453
    %5958 = vmatpush.bf16.msra.mxu0 %v4449
    %5959 = vmatmul.bf16.gmra.mxu0 %v2133
    %v5960 = vpop.f32.mrf.mxu0
    %v5961 = vadd.f32 %v5948, %v5960
    %v5962 = vpop.f32.mrf.mxu0
    %5963 = vdwg.mxu0
    %5964 = vmatpush.bf16.msra.mxu0 %v4509
    %5965 = vmatpush.bf16.msra.mxu0 %v4505
    %5966 = vmatpush.bf16.msra.mxu0 %v4501
    %5967 = vmatpush.bf16.msra.mxu0 %v4497
    %5968 = vmatpush.bf16.msra.mxu0 %v4493
    %5969 = vmatpush.bf16.msra.mxu0 %v4489
    %5970 = vmatpush.bf16.msra.mxu0 %v4485
    %5971 = vmatpush.bf16.msra.mxu0 %v4481
    %5972 = vmatmul.bf16.gmra.mxu0 %v2134
    %v5973 = vpop.f32.mrf.mxu0
    %v5974 = vadd.f32 %v5961, %v5973
    %v5975 = vpop.f32.mrf.mxu0
    %5976 = vdwg.mxu0
    %5977 = vmatpush.bf16.msra.mxu0 %v4541
    %5978 = vmatpush.bf16.msra.mxu0 %v4537
    %5979 = vmatpush.bf16.msra.mxu0 %v4533
    %5980 = vmatpush.bf16.msra.mxu0 %v4529
    %5981 = vmatpush.bf16.msra.mxu0 %v4525
    %5982 = vmatpush.bf16.msra.mxu0 %v4521
    %5983 = vmatpush.bf16.msra.mxu0 %v4517
    %5984 = vmatpush.bf16.msra.mxu0 %v4513
    %5985 = vmatmul.bf16.gmra.mxu0 %v2135
    %v5986 = vpop.f32.mrf.mxu0
    %v5987 = vadd.f32 %v5974, %v5986
    %v5988 = vpop.f32.mrf.mxu0
    %5989 = vdwg.mxu0
    %5990 = vmatpush.bf16.msra.mxu0 %v4573
    %5991 = vmatpush.bf16.msra.mxu0 %v4569
    %5992 = vmatpush.bf16.msra.mxu0 %v4565
    %5993 = vmatpush.bf16.msra.mxu0 %v4561
    %5994 = vmatpush.bf16.msra.mxu0 %v4557
    %5995 = vmatpush.bf16.msra.mxu0 %v4553
    %5996 = vmatpush.bf16.msra.mxu0 %v4549
    %5997 = vmatpush.bf16.msra.mxu0 %v4545
    %5998 = vmatmul.bf16.gmra.mxu0 %v2136
    %v5999 = vpop.f32.mrf.mxu0
    %v6000 = vadd.f32 %v5987, %v5999
    %v6001 = vpop.f32.mrf.mxu0
    %6002 = vdwg.mxu0
    %6003 = vmatpush.bf16.msra.mxu0 %v4605
    %6004 = vmatpush.bf16.msra.mxu0 %v4601
    %6005 = vmatpush.bf16.msra.mxu0 %v4597
    %6006 = vmatpush.bf16.msra.mxu0 %v4593
    %6007 = vmatpush.bf16.msra.mxu0 %v4589
    %6008 = vmatpush.bf16.msra.mxu0 %v4585
    %6009 = vmatpush.bf16.msra.mxu0 %v4581
    %6010 = vmatpush.bf16.msra.mxu0 %v4577
    %6011 = vmatmul.bf16.gmra.mxu0 %v2137
    %v6012 = vpop.f32.mrf.mxu0
    %v6013 = vadd.f32 %v6000, %v6012
    %v6014 = vpop.f32.mrf.mxu0
    %6015 = vdwg.mxu0
    %6016 = vmatpush.bf16.msra.mxu0 %v4637
    %6017 = vmatpush.bf16.msra.mxu0 %v4633
    %6018 = vmatpush.bf16.msra.mxu0 %v4629
    %6019 = vmatpush.bf16.msra.mxu0 %v4625
    %6020 = vmatpush.bf16.msra.mxu0 %v4621
    %6021 = vmatpush.bf16.msra.mxu0 %v4617
    %6022 = vmatpush.bf16.msra.mxu0 %v4613
    %6023 = vmatpush.bf16.msra.mxu0 %v4609
    %6024 = vmatmul.bf16.gmra.mxu0 %v2138
    %v6025 = vpop.f32.mrf.mxu0
    %v6026 = vadd.f32 %v6013, %v6025
    %v6027 = vpop.f32.mrf.mxu0
    %6028 = vdwg.mxu0
    %6029 = vmatpush.bf16.msra.mxu0 %v4669
    %6030 = vmatpush.bf16.msra.mxu0 %v4665
    %6031 = vmatpush.bf16.msra.mxu0 %v4661
    %6032 = vmatpush.bf16.msra.mxu0 %v4657
    %6033 = vmatpush.bf16.msra.mxu0 %v4653
    %6034 = vmatpush.bf16.msra.mxu0 %v4649
    %6035 = vmatpush.bf16.msra.mxu0 %v4645
    %6036 = vmatpush.bf16.msra.mxu0 %v4641
    %6037 = vmatmul.bf16.gmra.mxu0 %v2139
    %v6038 = vpop.f32.mrf.mxu0
    %v6039 = vadd.f32 %v6026, %v6038
    %v6040 = vpop.f32.mrf.mxu0
    %6041 = vdwg.mxu0
    %6042 = vmatpush.bf16.msra.mxu0 %v4701
    %6043 = vmatpush.bf16.msra.mxu0 %v4697
    %6044 = vmatpush.bf16.msra.mxu0 %v4693
    %6045 = vmatpush.bf16.msra.mxu0 %v4689
    %6046 = vmatpush.bf16.msra.mxu0 %v4685
    %6047 = vmatpush.bf16.msra.mxu0 %v4681
    %6048 = vmatpush.bf16.msra.mxu0 %v4677
    %6049 = vmatpush.bf16.msra.mxu0 %v4673
    %6050 = vmatmul.bf16.gmra.mxu0 %v2140
    %v6051 = vpop.f32.mrf.mxu0
    %v6052 = vadd.f32 %v6039, %v6051
    %v6053 = vpop.f32.mrf.mxu0
    %6054 = vdwg.mxu0
    %v6055 = vmax.f32 %v5428, 0.0
    %v6056 = vmax.f32 %v5636, 0.0
    %v6057 = vmax.f32 %v5844, 0.0
    %v6058 = vmax.f32 %v6052, 0.0
    %v6059 = vpack.c.bf16 %v6055, %v6055
    %v6060 = vpack.c.bf16 %v6056, %v6056
    %v6061 = vpack.c.bf16 %v6057, %v6057
    %v6062 = vpack.c.bf16 %v6058, %v6058
    %v6063 = vld [vmem:[#allocation9] sm:$0xf]
    %v6064 = vld [vmem:[#allocation9 + $0x4] sm:$0xf]
    %v6065 = vld [vmem:[#allocation9 + $0x8] sm:$0xf]
    %v6066 = vld [vmem:[#allocation9 + $0xc] sm:$0xf]
    %v6067 = vld [vmem:[#allocation9 + $0x10] sm:$0xf]
    %v6068 = vld [vmem:[#allocation9 + $0x14] sm:$0xf]
    %v6069 = vld [vmem:[#allocation9 + $0x18] sm:$0xf]
    %v6070 = vld [vmem:[#allocation9 + $0x1c] sm:$0xf]
    %v6071 = vld [vmem:[#allocation9 + $0x20] sm:$0xf]
    %v6072 = vld [vmem:[#allocation9 + $0x24] sm:$0xf]
    %v6073 = vld [vmem:[#allocation9 + $0x28] sm:$0xf]
    %v6074 = vld [vmem:[#allocation9 + $0x2c] sm:$0xf]
    %v6075 = vld [vmem:[#allocation9 + $0x30] sm:$0xf]
    %v6076 = vld [vmem:[#allocation9 + $0x34] sm:$0xf]
    %v6077 = vld [vmem:[#allocation9 + $0x38] sm:$0xf]
    %v6078 = vld [vmem:[#allocation9 + $0x3c] sm:$0xf]
    %v6079 = vld [vmem:[#allocation9 + $0x40] sm:$0xf]
    %v6080 = vld [vmem:[#allocation9 + $0x44] sm:$0xf]
    %v6081 = vld [vmem:[#allocation9 + $0x48] sm:$0xf]
    %v6082 = vld [vmem:[#allocation9 + $0x4c] sm:$0xf]
    %v6083 = vld [vmem:[#allocation9 + $0x50] sm:$0xf]
    %v6084 = vld [vmem:[#allocation9 + $0x54] sm:$0xf]
    %v6085 = vld [vmem:[#allocation9 + $0x58] sm:$0xf]
    %v6086 = vld [vmem:[#allocation9 + $0x5c] sm:$0xf]
    %v6087 = vld [vmem:[#allocation9 + $0x60] sm:$0xf]
    %v6088 = vld [vmem:[#allocation9 + $0x64] sm:$0xf]
    %v6089 = vld [vmem:[#allocation9 + $0x68] sm:$0xf]
    %v6090 = vld [vmem:[#allocation9 + $0x6c] sm:$0xf]
    %v6091 = vld [vmem:[#allocation9 + $0x70] sm:$0xf]
    %v6092 = vld [vmem:[#allocation9 + $0x74] sm:$0xf]
    %v6093 = vld [vmem:[#allocation9 + $0x78] sm:$0xf]
    %v6094 = vld [vmem:[#allocation9 + $0x7c] sm:$0xf]
    %v6095 = vld [vmem:[#allocation9 + $0x80] sm:$0xf]
    %v6096 = vld [vmem:[#allocation9 + $0x84] sm:$0xf]
    %v6097 = vld [vmem:[#allocation9 + $0x88] sm:$0xf]
    %v6098 = vld [vmem:[#allocation9 + $0x8c] sm:$0xf]
    %v6099 = vld [vmem:[#allocation9 + $0x90] sm:$0xf]
    %v6100 = vld [vmem:[#allocation9 + $0x94] sm:$0xf]
    %v6101 = vld [vmem:[#allocation9 + $0x98] sm:$0xf]
    %v6102 = vld [vmem:[#allocation9 + $0x9c] sm:$0xf]
    %v6103 = vld [vmem:[#allocation9 + $0xa0] sm:$0xf]
    %v6104 = vld [vmem:[#allocation9 + $0xa4] sm:$0xf]
    %v6105 = vld [vmem:[#allocation9 + $0xa8] sm:$0xf]
    %v6106 = vld [vmem:[#allocation9 + $0xac] sm:$0xf]
    %v6107 = vld [vmem:[#allocation9 + $0xb0] sm:$0xf]
    %v6108 = vld [vmem:[#allocation9 + $0xb4] sm:$0xf]
    %v6109 = vld [vmem:[#allocation9 + $0xb8] sm:$0xf]
    %v6110 = vld [vmem:[#allocation9 + $0xbc] sm:$0xf]
    %v6111 = vld [vmem:[#allocation9 + $0xc0] sm:$0xf]
    %v6112 = vld [vmem:[#allocation9 + $0xc4] sm:$0xf]
    %v6113 = vld [vmem:[#allocation9 + $0xc8] sm:$0xf]
    %v6114 = vld [vmem:[#allocation9 + $0xcc] sm:$0xf]
    %v6115 = vld [vmem:[#allocation9 + $0xd0] sm:$0xf]
    %v6116 = vld [vmem:[#allocation9 + $0xd4] sm:$0xf]
    %v6117 = vld [vmem:[#allocation9 + $0xd8] sm:$0xf]
    %v6118 = vld [vmem:[#allocation9 + $0xdc] sm:$0xf]
    %v6119 = vld [vmem:[#allocation9 + $0xe0] sm:$0xf]
    %v6120 = vld [vmem:[#allocation9 + $0xe4] sm:$0xf]
    %v6121 = vld [vmem:[#allocation9 + $0xe8] sm:$0xf]
    %v6122 = vld [vmem:[#allocation9 + $0xec] sm:$0xf]
    %v6123 = vld [vmem:[#allocation9 + $0xf0] sm:$0xf]
    %v6124 = vld [vmem:[#allocation9 + $0xf4] sm:$0xf]
    %v6125 = vld [vmem:[#allocation9 + $0xf8] sm:$0xf]
    %v6126 = vld [vmem:[#allocation9 + $0xfc] sm:$0xf]
    %v6127 = vld [vmem:[#allocation10] sm:$0x1]
    %v6192 = vunpack.c.l.b16 %v6063
    %v6193 = vunpack.c.l.b16 %v6064
    %v6194 = vunpack.c.l.b16 %v6065
    %v6195 = vunpack.c.l.b16 %v6066
    %v6196 = vunpack.c.l.b16 %v6067
    %v6197 = vunpack.c.l.b16 %v6068
    %v6198 = vunpack.c.l.b16 %v6069
    %v6199 = vunpack.c.l.b16 %v6070
    %v6200 = vunpack.c.l.b16 %v6071
    %v6201 = vunpack.c.l.b16 %v6072
    %v6202 = vunpack.c.l.b16 %v6073
    %v6203 = vunpack.c.l.b16 %v6074
    %v6204 = vunpack.c.l.b16 %v6075
    %v6205 = vunpack.c.l.b16 %v6076
    %v6206 = vunpack.c.l.b16 %v6077
    %v6207 = vunpack.c.l.b16 %v6078
    %v6208 = vunpack.c.l.b16 %v6079
    %v6209 = vunpack.c.l.b16 %v6080
    %v6210 = vunpack.c.l.b16 %v6081
    %v6211 = vunpack.c.l.b16 %v6082
    %v6212 = vunpack.c.l.b16 %v6083
    %v6213 = vunpack.c.l.b16 %v6084
    %v6214 = vunpack.c.l.b16 %v6085
    %v6215 = vunpack.c.l.b16 %v6086
    %v6216 = vunpack.c.l.b16 %v6087
    %v6217 = vunpack.c.l.b16 %v6088
    %v6218 = vunpack.c.l.b16 %v6089
    %v6219 = vunpack.c.l.b16 %v6090
    %v6220 = vunpack.c.l.b16 %v6091
    %v6221 = vunpack.c.l.b16 %v6092
    %v6222 = vunpack.c.l.b16 %v6093
    %v6223 = vunpack.c.l.b16 %v6094
    %v6224 = vunpack.c.l.b16 %v6095
    %v6225 = vunpack.c.l.b16 %v6096
    %v6226 = vunpack.c.l.b16 %v6097
    %v6227 = vunpack.c.l.b16 %v6098
    %v6228 = vunpack.c.l.b16 %v6099
    %v6229 = vunpack.c.l.b16 %v6100
    %v6230 = vunpack.c.l.b16 %v6101
    %v6231 = vunpack.c.l.b16 %v6102
    %v6232 = vunpack.c.l.b16 %v6103
    %v6233 = vunpack.c.l.b16 %v6104
    %v6234 = vunpack.c.l.b16 %v6105
    %v6235 = vunpack.c.l.b16 %v6106
    %v6236 = vunpack.c.l.b16 %v6107
    %v6237 = vunpack.c.l.b16 %v6108
    %v6238 = vunpack.c.l.b16 %v6109
    %v6239 = vunpack.c.l.b16 %v6110
    %v6240 = vunpack.c.l.b16 %v6111
    %v6241 = vunpack.c.l.b16 %v6112
    %v6242 = vunpack.c.l.b16 %v6113
    %v6243 = vunpack.c.l.b16 %v6114
    %v6244 = vunpack.c.l.b16 %v6115
    %v6245 = vunpack.c.l.b16 %v6116
    %v6246 = vunpack.c.l.b16 %v6117
    %v6247 = vunpack.c.l.b16 %v6118
    %v6248 = vunpack.c.l.b16 %v6119
    %v6249 = vunpack.c.l.b16 %v6120
    %v6250 = vunpack.c.l.b16 %v6121
    %v6251 = vunpack.c.l.b16 %v6122
    %v6252 = vunpack.c.l.b16 %v6123
    %v6253 = vunpack.c.l.b16 %v6124
    %v6254 = vunpack.c.l.b16 %v6125
    %v6255 = vunpack.c.l.b16 %v6126
    %v6256 = vpack.c.b16 %v6193, %v6192
    %v6257 = vpack.c.b16 %v6195, %v6194
    %v6258 = vpack.c.b16 %v6197, %v6196
    %v6259 = vpack.c.b16 %v6199, %v6198
    %v6260 = vpack.c.b16 %v6201, %v6200
    %v6261 = vpack.c.b16 %v6203, %v6202
    %v6262 = vpack.c.b16 %v6205, %v6204
    %v6263 = vpack.c.b16 %v6207, %v6206
    %v6264 = vpack.c.b16 %v6209, %v6208
    %v6265 = vpack.c.b16 %v6211, %v6210
    %v6266 = vpack.c.b16 %v6213, %v6212
    %v6267 = vpack.c.b16 %v6215, %v6214
    %v6268 = vpack.c.b16 %v6217, %v6216
    %v6269 = vpack.c.b16 %v6219, %v6218
    %v6270 = vpack.c.b16 %v6221, %v6220
    %v6271 = vpack.c.b16 %v6223, %v6222
    %v6272 = vpack.c.b16 %v6225, %v6224
    %v6273 = vpack.c.b16 %v6227, %v6226
    %v6274 = vpack.c.b16 %v6229, %v6228
    %v6275 = vpack.c.b16 %v6231, %v6230
    %v6276 = vpack.c.b16 %v6233, %v6232
    %v6277 = vpack.c.b16 %v6235, %v6234
    %v6278 = vpack.c.b16 %v6237, %v6236
    %v6279 = vpack.c.b16 %v6239, %v6238
    %v6280 = vpack.c.b16 %v6241, %v6240
    %v6281 = vpack.c.b16 %v6243, %v6242
    %v6282 = vpack.c.b16 %v6245, %v6244
    %v6283 = vpack.c.b16 %v6247, %v6246
    %v6284 = vpack.c.b16 %v6249, %v6248
    %v6285 = vpack.c.b16 %v6251, %v6250
    %v6286 = vpack.c.b16 %v6253, %v6252
    %v6287 = vpack.c.b16 %v6255, %v6254
    %6320 = vmatpush.bf16.msra.mxu0 %v6263
    %6321 = vmatpush.bf16.msra.mxu0 %v6262
    %6322 = vmatpush.bf16.msra.mxu0 %v6261
    %6323 = vmatpush.bf16.msra.mxu0 %v6260
    %6324 = vmatpush.bf16.msra.mxu0 %v6259
    %6325 = vmatpush.bf16.msra.mxu0 %v6258
    %6326 = vmatpush.bf16.msra.mxu0 %v6257
    %6327 = vmatpush.bf16.msra.mxu0 %v6256
    %6328 = vmatmul.bf16.gmra.mxu0 %v6059
    %v6329 = vpop.f32.mrf.mxu0
    %v6330 = vadd.f32 %v6127, %v6329
    %v6331 = vpop.f32.mrf.mxu0
    %6332 = vdwg.mxu0
    %6333 = vmatpush.bf16.msra.mxu0 %v6271
    %6334 = vmatpush.bf16.msra.mxu0 %v6270
    %6335 = vmatpush.bf16.msra.mxu0 %v6269
    %6336 = vmatpush.bf16.msra.mxu0 %v6268
    %6337 = vmatpush.bf16.msra.mxu0 %v6267
    %6338 = vmatpush.bf16.msra.mxu0 %v6266
    %6339 = vmatpush.bf16.msra.mxu0 %v6265
    %6340 = vmatpush.bf16.msra.mxu0 %v6264
    %6341 = vmatmul.bf16.gmra.mxu0 %v6060
    %v6342 = vpop.f32.mrf.mxu0
    %v6343 = vadd.f32 %v6330, %v6342
    %v6344 = vpop.f32.mrf.mxu0
    %6345 = vdwg.mxu0
    %6346 = vmatpush.bf16.msra.mxu0 %v6279
    %6347 = vmatpush.bf16.msra.mxu0 %v6278
    %6348 = vmatpush.bf16.msra.mxu0 %v6277
    %6349 = vmatpush.bf16.msra.mxu0 %v6276
    %6350 = vmatpush.bf16.msra.mxu0 %v6275
    %6351 = vmatpush.bf16.msra.mxu0 %v6274
    %6352 = vmatpush.bf16.msra.mxu0 %v6273
    %6353 = vmatpush.bf16.msra.mxu0 %v6272
    %6354 = vmatmul.bf16.gmra.mxu0 %v6061
    %v6355 = vpop.f32.mrf.mxu0
    %v6356 = vadd.f32 %v6343, %v6355
    %v6357 = vpop.f32.mrf.mxu0
    %6358 = vdwg.mxu0
    %6359 = vmatpush.bf16.msra.mxu0 %v6287
    %6360 = vmatpush.bf16.msra.mxu0 %v6286
    %6361 = vmatpush.bf16.msra.mxu0 %v6285
    %6362 = vmatpush.bf16.msra.mxu0 %v6284
    %6363 = vmatpush.bf16.msra.mxu0 %v6283
    %6364 = vmatpush.bf16.msra.mxu0 %v6282
    %6365 = vmatpush.bf16.msra.mxu0 %v6281
    %6366 = vmatpush.bf16.msra.mxu0 %v6280
    %6367 = vmatmul.bf16.gmra.mxu0 %v6062
    %v6368 = vpop.f32.mrf.mxu0
    %v6369 = vadd.f32 %v6356, %v6368
    %v6370 = vpop.f32.mrf.mxu0
    %6371 = vdwg.mxu0
    %v6372 = vmin.f32 %v6369, 20.0
    %vm6373 = vcmp.gt.f32.partialorder %v6369, 20.0
    %v6374 = vmul.f32 %v6372, 1.442695
    %v6375 = vpow.pop %v6374
    %v6376 = vadd.f32 %v6375, 1.0
    %v6377 = vlog2.pop %v6376
    %v6378 = vmul.f32 %v6377, 0.6931472
    %v6379 = vmul.f32 -0.5, %v6375
    %v6380 = vadd.f32 %v6379, 1.0
    %v6381 = vmul.f32 %v6380, %v6375
    %v6382 = vand.u32 2147483647, %v6375
    %vm6383 = vcmp.lt.f32.partialorder %v6382, 0.0004427343
    %v6384 = vsel %vm6383, %v6381, %v6378
    %v6385 = vsel %vm6373, %v6369, %v6384
    %v6386 = vadd.f32 %v6385, 0.001
    %6387 = vst [vmem:[%s7] sm:$0x1] %v6386
    // Predicated region
    $region54: #{beta_network_forward.1} parent=1 // pred_check
      _
    $region55: #{beta_network_forward.1} parent=1 // pred_check_branch
      %6389 = sbr.rel (0) target = $region57
    $region56: #{beta_network_forward.1} parent=1 // pred_region
      _
    $region57: #{beta_network_forward.1} parent=1 // pred_fallthru
      _
    // Predicated region
    $region58: #{beta_network_forward.1} parent=1 // pred_check
      _
    $region59: #{beta_network_forward.1} parent=1 // pred_check_branch
      %6391 = sbr.rel (0) target = $region61
    $region60: #{beta_network_forward.1} parent=1 // pred_region
      _
    $region61: #{beta_network_forward.1} parent=1 // pred_fallthru
      _
    %6392 = vsyncpa [#allocation3], 1
    %6393 = vsyncpa [#allocation5], 1
    %6394 = vsyncpa [#allocation8], 1
    %6395 = vsyncpa [#allocation11], 1

</llo_original>
